<compile_context>
chip_gen: v5e
topology: v5e:2x2
jax: 0.10.0
libtpu: 0.0.40
codegen_flags: <defaults>
</compile_context>

<pallas_src>
import functools
import math

import jax
import jax.numpy as jnp
from jax import lax
from jax.experimental import pallas as pl
from jax.experimental.pallas import tpu as pltpu

LANE = 128


def _round_up(x, m):
    return ((x + m - 1) // m) * m


def _vmem_cap_bytes():
    try:
        cap = getattr(pltpu.get_tpu_info(), "vmem_capacity_bytes", None)
        if cap:
            return int(cap)
    except Exception:
        pass
    return 64 * (1 << 20)


def _bottleneck_kernel(x_ref, w1_ref, p1_ref, w2_ref, p2_ref, w3_ref, b3_ref,
                       o_ref, t_ref, *, stride, tile_ho, n_ho, H, W, Wout,
                       connect):
    """One (batch, output-row-tile) grid step.

    x_ref : (Hp, Wp2, Cin_p)   zero-padded NHWC image (resident per batch elem)
    w1_ref: (Cin_p, Cm_p)      conv1 (1x1) weight, bn1 scale folded in
    p1_ref: (2, Cm_p)          [bn1 bias, prelu1 alpha]
    w2_ref: (9, Cm_p)          depthwise taps (bn2 scale folded), row = kh*3+kw
    p2_ref: (2, Cm_p)          [bn2 bias, prelu2 alpha]
    w3_ref: (Cm_p, Cout_p)     conv3 (1x1) weight, bn3 scale folded in
    b3_ref: (1, Cout_p)        bn3 bias
    o_ref : (tile_ho*Wout, Cout_p)  lane-dense flattened output tile
    t_ref : (r_in, Wp2, Cm_p)  f32 VMEM scratch for the conv1 activations
    """
    s = stride
    r_in = t_ref.shape[0]
    wp2 = x_ref.shape[1]
    cin_p = x_ref.shape[2]
    cm_p = w1_ref.shape[1]
    step = s * tile_ho

    row0 = pl.program_id(1) * step
    align = math.gcd(step, 8)
    if align > 1:
        row0 = pl.multiple_of(row0, align)

    # ---- conv1 (1x1, MXU; bn1 scale pre-folded) + bias + PReLU -------------
    x_t = x_ref[pl.ds(row0, r_in), :, :]                     # (r_in, wp2, cin_p)
    t = jnp.dot(x_t.reshape(r_in * wp2, cin_p), w1_ref[...],
                preferred_element_type=jnp.float32)          # (r_in*wp2, cm_p)
    t = t + p1_ref[0:1, :]
    t = jnp.where(t > 0, t, t * p1_ref[1:2, :])
    t_ref[...] = t.reshape(r_in, wp2, cm_p)

    # conv2's zero-padding ring: conv1 of the zero-padded pixels is exactly 0,
    # so only the bn1-bias / PReLU response must be killed. Thin static slab
    # writes replace the old resident (Hp, Wp2, 1) mask tensor.
    zcol = jnp.zeros((r_in, 1, cm_p), jnp.float32)
    t_ref[:, 0:1, :] = zcol                                  # left padding col
    t_ref[:, wp2 - 1:wp2, :] = zcol                          # right padding col

    @pl.when(pl.program_id(1) == 0)
    def _():                                                 # top padding row
        t_ref[0:1, :, :] = jnp.zeros((1, wp2, cm_p), jnp.float32)

    nbot = step * n_ho + 2 - (H + 1)       # bottom padding rows (static, >= 1)
    @pl.when(pl.program_id(1) == n_ho - 1)
    def _():
        t_ref[r_in - nbot:r_in, :, :] = jnp.zeros((nbot, wp2, cm_p),
                                                  jnp.float32)

    # ---- conv2 (3x3 depthwise, stride s; bn2 scale pre-folded) -------------
    # 9 direct windowed loads from the scratch (strided for stride-2 blocks);
    # no sliced value temporaries; accumulator starts from the first tap.
    w2 = w2_ref[...]                                         # (9, cm_p)
    acc = None
    for kh in range(3):
        rsl = pl.ds(kh, tile_ho) if s == 1 else pl.ds(kh, tile_ho, stride=s)
        for kw in range(3):
            csl = pl.ds(kw, Wout) if s == 1 else pl.ds(kw, Wout, stride=s)
            term = t_ref[rsl, csl, :] * w2[3 * kh + kw]
            acc = term if acc is None else acc + term
    acc = acc + p2_ref[0:1, :]
    acc = jnp.where(acc > 0, acc, acc * p2_ref[1:2, :])

    # ---- conv3 (1x1, MXU; bn3 scale pre-folded) + bias (+ residual) --------
    out = jnp.dot(acc.reshape(tile_ho * Wout, cm_p).astype(w3_ref.dtype),
                  w3_ref[...], preferred_element_type=jnp.float32)
    out = out + b3_ref[0:1, :]
    if connect:                                  # stride == 1 and Cin == Cout
        xr = x_ref[pl.ds(row0 + 1, tile_ho), pl.ds(1, W), :]
        out = out + xr.reshape(tile_ho * W, cin_p).astype(jnp.float32)
    o_ref[...] = out.astype(o_ref.dtype)


def _prepare_packed(p, mxu_dtype):
    """Fold the inference-mode BN scales into the conv weights, zero-pad all
    channel dims up to the 128-lane width, and pack the per-stage params."""
    cin, cm = p["w1"].shape
    cout = p["w3"].shape[1]
    cin_p, cm_p, cout_p = (_round_up(c, LANE) for c in (cin, cm, cout))
    w1f = p["w1"] * p["s1"]                       # (cin, cm) * (1, cm)
    w2f = p["w2"].reshape(9, cm) * p["s2"]        # (9, cm)   * (1, cm)
    w3f = p["w3"] * p["s3"]                       # (cm, cout) * (1, cout)
    w1 = jnp.zeros((cin_p, cm_p), mxu_dtype).at[:cin, :cm].set(
        w1f.astype(mxu_dtype))
    w2 = jnp.zeros((9, cm_p), jnp.float32).at[:, :cm].set(
        w2f.astype(jnp.float32))
    w3 = jnp.zeros((cm_p, cout_p), mxu_dtype).at[:cm, :cout].set(
        w3f.astype(mxu_dtype))
    p1 = jnp.zeros((2, cm_p), jnp.float32).at[:, :cm].set(
        jnp.concatenate([p["b1"], p["a1"]], axis=0))
    p2 = jnp.zeros((2, cm_p), jnp.float32).at[:, :cm].set(
        jnp.concatenate([p["b2"], p["a2"]], axis=0))
    b3 = jnp.zeros((1, cout_p), jnp.float32).at[:, :cout].set(p["b3"])
    return (w1, p1, w2, p2, w3, b3), (cin_p, cm_p, cout_p)


def pruned_bottleneck_nhwc(x_nhwc, params, *, stride, tile_h_out=16,
                           mxu_dtype=jnp.bfloat16, out_dtype=None):
    """NHWC-in / NHWC-out forward pass (preferred entry point inside a model).

    # TODO(synk): when chaining blocks, keep activations in the padded,
    # lane-dense (Hp, Wp2, C_p) layout between blocks so the jnp.pad / output
    # slice below (one extra HBM round trip each) disappear.
    """
    if out_dtype is None:
        out_dtype = mxu_dtype
    N, H, W, Cin = x_nhwc.shape
    Cout = params["w3"].shape[1]
    connect = (stride == 1) and (Cin == Cout)

    (w1, p1, w2, p2, w3, b3), (cin_p, cm_p, cout_p) = _prepare_packed(
        params, mxu_dtype)

    Hout = (H + 2 - 3) // stride + 1
    Wout = (W + 2 - 3) // stride + 1
    tile_ho = max(1, min(tile_h_out, Hout))
    # keep >= 2 parallel grid steps so v7x's second TensorCore is never idle
    if N * pl.cdiv(Hout, tile_ho) < 2 and Hout >= 2:
        tile_ho = (Hout + 1) // 2
    n_ho = pl.cdiv(Hout, tile_ho)
    Hp = stride * tile_ho * n_ho + 2
    Wp2 = W + 2
    r_in = stride * tile_ho + 2

    # Single fused zero-pad: conv2 halo rows/cols, extra bottom rows for the
    # last H tile and channel padding up to the 128-lane width (lane dense).
    x_pad = jnp.pad(x_nhwc.astype(mxu_dtype),
                    ((0, 0), (1, Hp - 1 - H), (1, 1), (0, cin_p - Cin)))

    kernel = functools.partial(_bottleneck_kernel, stride=stride,
                               tile_ho=tile_ho, n_ho=n_ho, H=H, W=W,
                               Wout=Wout, connect=connect)

    bpe = jnp.dtype(mxu_dtype).itemsize
    obpe = jnp.dtype(out_dtype).itemsize
    x_blk = Hp * Wp2 * cin_p * bpe
    o_blk = tile_ho * Wout * cout_p * obpe
    w_bytes = ((cin_p * cm_p + cm_p * cout_p) * bpe
               + 13 * cm_p * 4 + cout_p * 4)
    scratch_b = r_in * Wp2 * cm_p * 4
    interm_b = (r_in * Wp2 * cm_p + 3 * tile_ho * Wout * cm_p
                + tile_ho * Wout * (cm_p + cout_p)) * 4
    need = 2 * x_blk + 2 * o_blk + 2 * w_bytes + scratch_b + interm_b
    cap = _vmem_cap_bytes()
    vmem_limit = int(min(max(32 * (1 << 20), 1.5 * need + (4 << 20)),
                         0.85 * cap))

    flops = N * n_ho * (2 * r_in * Wp2 * cin_p * cm_p
                        + 18 * tile_ho * Wout * cm_p
                        + 2 * tile_ho * Wout * cm_p * cout_p)
    bytes_accessed = int(x_pad.size * bpe
                         + N * n_ho * tile_ho * Wout * cout_p * obpe + w_bytes)

    out = pl.pallas_call(
        kernel,
        out_shape=jax.ShapeDtypeStruct((N, n_ho, tile_ho * Wout, cout_p),
                                       out_dtype),
        grid=(N, n_ho),
        in_specs=[
            # padded image: resident per batch element, reused by every H tile
            pl.BlockSpec((None, Hp, Wp2, cin_p), lambda n, h: (n, 0, 0, 0)),
            # small constants: constant index maps -> loaded once, VMEM resident
            pl.BlockSpec((cin_p, cm_p), lambda n, h: (0, 0)),
            pl.BlockSpec((2, cm_p), lambda n, h: (0, 0)),
            pl.BlockSpec((9, cm_p), lambda n, h: (0, 0)),
            pl.BlockSpec((2, cm_p), lambda n, h: (0, 0)),
            pl.BlockSpec((cm_p, cout_p), lambda n, h: (0, 0)),
            pl.BlockSpec((1, cout_p), lambda n, h: (0, 0)),
        ],
        out_specs=pl.BlockSpec((None, None, tile_ho * Wout, cout_p),
                               lambda n, h: (n, h, 0, 0)),
        scratch_shapes=[pltpu.VMEM((r_in, Wp2, cm_p), jnp.float32)],
        compiler_params=pltpu.CompilerParams(
            dimension_semantics=("parallel", "parallel"),
            vmem_limit_bytes=vmem_limit),
        cost_estimate=pl.CostEstimate(flops=int(flops), transcendentals=0,
                                      bytes_accessed=bytes_accessed),
    )(x_pad, w1, p1, w2, p2, w3, b3)

    out = out.reshape(N, n_ho * tile_ho, Wout, cout_p)
    return out[:, :Hout, :, :Cout]


def pruned_bottleneck_forward(x_nchw, params, *, stride, tile_h_out=16,
                              mxu_dtype=jnp.bfloat16, out_dtype=None):
    """NCHW convenience wrapper (PyTorch layout parity)."""
    x = jnp.transpose(x_nchw, (0, 2, 3, 1))
    y = pruned_bottleneck_nhwc(x, params, stride=stride,
                               tile_h_out=tile_h_out, mxu_dtype=mxu_dtype,
                               out_dtype=out_dtype)
    return jnp.transpose(y, (0, 3, 1, 2))


def init_params(key, in_planes, out_planes, stride, expansion, pruning_rate):
    planes = in_planes * expansion
    cm = int(planes - math.floor(planes * pruning_rate))   # pruned_channel_plane
    ks = jax.random.split(key, 8)
    eps = 1e-5

    def bn_fold(kg, kb, km, kv, c):
        gamma = 1.0 + 0.1 * jax.random.normal(kg, (c,), jnp.float32)
        beta = 0.1 * jax.random.normal(kb, (c,), jnp.float32)
        mean = 0.1 * jax.random.normal(km, (c,), jnp.float32)
        var = 1.0 + 0.1 * jax.random.uniform(kv, (c,), jnp.float32)
        scale = gamma / jnp.sqrt(var + eps)
        bias = beta - mean * scale
        return scale.reshape(1, c), bias.reshape(1, c)

    w1 = 0.2 * jax.random.normal(ks[0], (in_planes, cm), jnp.float32)   # conv1
    w2 = 0.2 * jax.random.normal(ks[1], (3, 3, cm), jnp.float32)        # depthwise
    w3 = 0.2 * jax.random.normal(ks[2], (cm, out_planes), jnp.float32)  # conv3
    s1, b1 = bn_fold(*jax.random.split(ks[3], 4), cm)
    s2, b2 = bn_fold(*jax.random.split(ks[4], 4), cm)
    s3, b3 = bn_fold(*jax.random.split(ks[5], 4), out_planes)
    a1 = jnp.full((1, cm), 0.25, jnp.float32) + 0.05 * jax.random.normal(ks[6], (1, cm))
    a2 = jnp.full((1, cm), 0.25, jnp.float32) + 0.05 * jax.random.normal(ks[7], (1, cm))
    return dict(w1=w1, w2=w2, w3=w3, s1=s1, b1=b1, s2=s2, b2=b2,
                s3=s3, b3=b3, a1=a1, a2=a2)


def reference_forward(x_nchw, p, *, stride, mxu_dtype=jnp.float32):
    """Pure-JAX reference (same math, including the matmul input dtype)."""
    hi = lax.Precision.HIGHEST
    x = jnp.transpose(x_nchw, (0, 2, 3, 1)).astype(mxu_dtype)
    Cin = x.shape[-1]
    Cm = p["w1"].shape[1]
    Cout = p["w3"].shape[1]
    connect = (stride == 1) and (Cin == Cout)
    t = jnp.einsum('nhwc,cm->nhwm', x, p["w1"].astype(mxu_dtype),
                   preferred_element_type=jnp.float32, precision=hi)
    t = t * p["s1"][0] + p["b1"][0]
    t = jnp.where(t > 0, t, t * p["a1"][0])
    w2_hwio = p["w2"].reshape(3, 3, 1, Cm)
    t = lax.conv_general_dilated(
        t, w2_hwio, window_strides=(stride, stride), padding=((1, 1), (1, 1)),
        dimension_numbers=('NHWC', 'HWIO', 'NHWC'), feature_group_count=Cm,
        precision=hi)
    t = t * p["s2"][0] + p["b2"][0]
    t = jnp.where(t > 0, t, t * p["a2"][0])
    t = jnp.einsum('nhwc,cm->nhwm', t.astype(mxu_dtype),
                   p["w3"].astype(mxu_dtype),
                   preferred_element_type=jnp.float32, precision=hi)
    t = t * p["s3"][0] + p["b3"][0]
    if connect:
        t = t + x.astype(jnp.float32)
    return jnp.transpose(t, (0, 3, 1, 2))


if __name__ == "__main__":
    key = jax.random.PRNGKey(0)
    expansion, pruning_rate = 2, 0.25
    # (name, in_planes, out_planes, stride, H, W, tile_h_out)
    cases = [
        ("stride1_residual_16x16", 4, 4, 1, 16, 16, 16),
        ("stride1_multitile_ragged_14x14", 4, 4, 1, 14, 14, 8),
        ("stride2_downsample_15x15", 4, 6, 2, 15, 15, 8),
    ]
    failures = []

    # f32 path: exact parity with the PyTorch (inference-mode) math.
    for idx, (name, cin, cout, stride, H, W, tho) in enumerate(cases):
        kx, kp = jax.random.split(jax.random.fold_in(key, idx))
        x_nchw = jax.random.normal(kx, (2, cin, H, W), jnp.float32)
        params = init_params(kp, cin, cout, stride, expansion, pruning_rate)
        ref = reference_forward(x_nchw, params, stride=stride,
                                mxu_dtype=jnp.float32)
        out = jax.block_until_ready(
            pruned_bottleneck_forward(x_nchw, params, stride=stride,
                                      tile_h_out=tho, mxu_dtype=jnp.float32,
                                      out_dtype=jnp.float32))
        if out.shape != ref.shape:
            failures.append(f"{name}: shape {out.shape} vs {ref.shape}")
            continue
        if not bool(jnp.allclose(out, ref, atol=1e-3, rtol=1e-3)):
            err = float(jnp.max(jnp.abs(out - ref)))
            failures.append(f"{name}: f32 max err {err}")

    # default path: bf16 matmul inputs / bf16 output (v6e/v7x MXU), f32 accum.
    name, cin, cout, stride, H, W, tho = cases[0]
    kx, kp = jax.random.split(jax.random.fold_in(key, 0))
    x_nchw = jax.random.normal(kx, (2, cin, H, W), jnp.float32)
    params = init_params(kp, cin, cout, stride, expansion, pruning_rate)
    out_bf = jax.block_until_ready(
        pruned_bottleneck_forward(x_nchw, params, stride=stride,
                                  tile_h_out=tho)).astype(jnp.float32)
    ref_bf = reference_forward(x_nchw, params, stride=stride,
                               mxu_dtype=jnp.bfloat16)
    if not bool(jnp.allclose(out_bf, ref_bf, atol=4e-2, rtol=4e-2)):
        err = float(jnp.max(jnp.abs(out_bf - ref_bf)))
        failures.append(f"{name}: bf16 max err {err}")

    if failures:
        raise SystemExit("kernel/reference mismatch: " + "; ".join(failures))
    print("KERNEL_OK")
</pallas_src>

<mosaic_0001>
module attributes {stable_mosaic.version = 11 : i64} {
  func.func @_bottleneck_kernel(%arg0: i32, %arg1: i32, %arg2: memref<1x18x18x128xf32, #tpu.memory_space<vmem>>, %arg3: memref<128x128xf32, #tpu.memory_space<vmem>>, %arg4: memref<2x128xf32, #tpu.memory_space<vmem>>, %arg5: memref<9x128xf32, #tpu.memory_space<vmem>>, %arg6: memref<2x128xf32, #tpu.memory_space<vmem>>, %arg7: memref<128x128xf32, #tpu.memory_space<vmem>>, %arg8: memref<1x128xf32, #tpu.memory_space<vmem>>, %arg9: memref<1x1x256x128xf32, #tpu.memory_space<vmem>>, %arg10: memref<18x18x128xf32, #tpu.memory_space<vmem>>) attributes {dimension_semantics = [#tpu.dimension_semantics<parallel>, #tpu.dimension_semantics<parallel>], iteration_bounds = array<i64: 2, 1>, scalar_prefetch = 0 : i64, scratch_operands = 1 : i64, tpu.core_type = #tpu.core_type<tc>, window_params = [{transform_indices = @transform_0, window_bounds = array<i64: 1, 18, 18, 128>}, {pipeline_mode = #tpu.pipeline_mode<synchronous>, transform_indices = @transform_1, window_bounds = array<i64: 128, 128>}, {pipeline_mode = #tpu.pipeline_mode<synchronous>, transform_indices = @transform_2, window_bounds = array<i64: 2, 128>}, {pipeline_mode = #tpu.pipeline_mode<synchronous>, transform_indices = @transform_3, window_bounds = array<i64: 9, 128>}, {pipeline_mode = #tpu.pipeline_mode<synchronous>, transform_indices = @transform_4, window_bounds = array<i64: 2, 128>}, {pipeline_mode = #tpu.pipeline_mode<synchronous>, transform_indices = @transform_5, window_bounds = array<i64: 128, 128>}, {pipeline_mode = #tpu.pipeline_mode<synchronous>, transform_indices = @transform_6, window_bounds = array<i64: 1, 128>}, {transform_indices = @transform_7, window_bounds = array<i64: 1, 1, 256, 128>}]} {
    %c16_i32 = arith.constant 16 : i32
    %0 = arith.muli %arg1, %c16_i32 : i32
    %1 = tpu.assume_multiple %0, 8 : i32
    %c0 = arith.constant 0 : index
    %2 = arith.index_cast %1 : i32 to index
    %c0_0 = arith.constant 0 : index
    %c0_1 = arith.constant 0 : index
    %3 = vector.load %arg2[%c0, %2, %c0_0, %c0_1] : memref<1x18x18x128xf32, #tpu.memory_space<vmem>>, vector<1x18x18x128xf32>
    %4 = vector.shape_cast %3 : vector<1x18x18x128xf32> to vector<18x18x128xf32>
    %5 = vector.shape_cast %4 : vector<18x18x128xf32> to vector<324x128xf32>
    %c0_2 = arith.constant 0 : index
    %c0_3 = arith.constant 0 : index
    %6 = vector.load %arg3[%c0_2, %c0_3] : memref<128x128xf32, #tpu.memory_space<vmem>>, vector<128x128xf32>
    %cst = arith.constant dense<0.000000e+00> : vector<324x128xf32>
    %7 = tpu.matmul %5, %6, %cst {dimension_numbers = #tpu.dot_dimension_numbers<[1], [0], [0], [1], [0, 0, 1, 1], [], []>} : vector<324x128xf32>, vector<128x128xf32>, vector<324x128xf32> -> vector<324x128xf32>
    %c0_4 = arith.constant 0 : index
    %c0_5 = arith.constant 0 : index
    %8 = vector.load %arg4[%c0_4, %c0_5] : memref<2x128xf32, #tpu.memory_space<vmem>>, vector<1x128xf32>
    %9 = vector.broadcast %8 : vector<1x128xf32> to vector<324x128xf32>
    %10 = arith.addf %7, %9 : vector<324x128xf32>
    %cst_6 = arith.constant 0.000000e+00 : f32
    %11 = vector.broadcast %cst_6 : f32 to vector<324x128xf32>
    %12 = arith.cmpf ogt, %10, %11 : vector<324x128xf32>
    %c1 = arith.constant 1 : index
    %c0_7 = arith.constant 0 : index
    %13 = vector.load %arg4[%c1, %c0_7] : memref<2x128xf32, #tpu.memory_space<vmem>>, vector<1x128xf32>
    %14 = vector.broadcast %13 : vector<1x128xf32> to vector<324x128xf32>
    %15 = arith.mulf %10, %14 : vector<324x128xf32>
    %16 = arith.select %12, %10, %15 : vector<324x128xi1>, vector<324x128xf32>
    %17 = vector.shape_cast %16 : vector<324x128xf32> to vector<18x18x128xf32>
    %c0_8 = arith.constant 0 : index
    %c0_9 = arith.constant 0 : index
    %c0_10 = arith.constant 0 : index
    %18 = vector.load %arg10[%c0_8, %c0_9, %c0_10] : memref<18x18x128xf32, #tpu.memory_space<vmem>>, vector<18x18x128xf32>
    tpu.vector_store %arg10[%c0_8, %c0_9, %c0_10], %17 {strides = array<i32>} : memref<18x18x128xf32, #tpu.memory_space<vmem>>, vector<18x18x128xf32>,
    %cst_11 = arith.constant 0.000000e+00 : f32
    %19 = vector.broadcast %cst_11 : f32 to vector<18x1x128xf32>
    %c0_12 = arith.constant 0 : index
    %c0_13 = arith.constant 0 : index
    %c0_14 = arith.constant 0 : index
    %20 = vector.load %arg10[%c0_12, %c0_13, %c0_14] : memref<18x18x128xf32, #tpu.memory_space<vmem>>, vector<18x1x128xf32>
    tpu.vector_store %arg10[%c0_12, %c0_13, %c0_14], %19 {strides = array<i32>} : memref<18x18x128xf32, #tpu.memory_space<vmem>>, vector<18x1x128xf32>,
    %c0_15 = arith.constant 0 : index
    %c17 = arith.constant 17 : index
    %c0_16 = arith.constant 0 : index
    %21 = vector.load %arg10[%c0_15, %c17, %c0_16] : memref<18x18x128xf32, #tpu.memory_space<vmem>>, vector<18x1x128xf32>
    tpu.vector_store %arg10[%c0_15, %c17, %c0_16], %19 {strides = array<i32>} : memref<18x18x128xf32, #tpu.memory_space<vmem>>, vector<18x1x128xf32>,
    %c0_i32 = arith.constant 0 : i32
    %22 = arith.cmpi eq, %arg1, %c0_i32 : i32
    %23 = arith.extui %22 : i1 to i32
    %c0_i32_17 = arith.constant 0 : i32
    %24 = arith.cmpi ne, %23, %c0_i32_17 : i32
    scf.if %24 {
      %cst_65 = arith.constant 0.000000e+00 : f32
      %117 = vector.broadcast %cst_65 : f32 to vector<1x18x128xf32>
      %c0_66 = arith.constant 0 : index
      %c0_67 = arith.constant 0 : index
      %c0_68 = arith.constant 0 : index
      %118 = vector.load %arg10[%c0_66, %c0_67, %c0_68] : memref<18x18x128xf32, #tpu.memory_space<vmem>>, vector<1x18x128xf32>
      tpu.vector_store %arg10[%c0_66, %c0_67, %c0_68], %117 {strides = array<i32>} : memref<18x18x128xf32, #tpu.memory_space<vmem>>, vector<1x18x128xf32>,
    } else {
    }
    %c0_i32_18 = arith.constant 0 : i32
    %25 = arith.cmpi eq, %arg1, %c0_i32_18 : i32
    %26 = arith.extui %25 : i1 to i32
    %c0_i32_19 = arith.constant 0 : i32
    %27 = arith.cmpi ne, %26, %c0_i32_19 : i32
    scf.if %27 {
      %cst_65 = arith.constant 0.000000e+00 : f32
      %117 = vector.broadcast %cst_65 : f32 to vector<1x18x128xf32>
      %c17_66 = arith.constant 17 : index
      %c0_67 = arith.constant 0 : index
      %c0_68 = arith.constant 0 : index
      %118 = vector.load %arg10[%c17_66, %c0_67, %c0_68] : memref<18x18x128xf32, #tpu.memory_space<vmem>>, vector<1x18x128xf32>
      tpu.vector_store %arg10[%c17_66, %c0_67, %c0_68], %117 {strides = array<i32>} : memref<18x18x128xf32, #tpu.memory_space<vmem>>, vector<1x18x128xf32>,
    } else {
    }
    %c0_20 = arith.constant 0 : index
    %c0_21 = arith.constant 0 : index
    %28 = vector.load %arg5[%c0_20, %c0_21] : memref<9x128xf32, #tpu.memory_space<vmem>>, vector<9x128xf32>
    %c0_22 = arith.constant 0 : index
    %c0_23 = arith.constant 0 : index
    %c0_24 = arith.constant 0 : index
    %29 = vector.load %arg10[%c0_22, %c0_23, %c0_24] : memref<18x18x128xf32, #tpu.memory_space<vmem>>, vector<16x16x128xf32>
    %30 = vector.extract_strided_slice %28 {offsets = [0, 0], sizes = [1, 128], strides = [1, 1]} : vector<9x128xf32> to vector<1x128xf32>
    %31 = vector.shape_cast %30 : vector<1x128xf32> to vector<128xf32>
    %32 = vector.shape_cast %31 : vector<128xf32> to vector<1x1x128xf32>
    %33 = vector.broadcast %32 : vector<1x1x128xf32> to vector<16x16x128xf32>
    %34 = arith.mulf %29, %33 : vector<16x16x128xf32>
    %c0_25 = arith.constant 0 : index
    %c1_26 = arith.constant 1 : index
    %c0_27 = arith.constant 0 : index
    %35 = vector.load %arg10[%c0_25, %c1_26, %c0_27] : memref<18x18x128xf32, #tpu.memory_space<vmem>>, vector<16x16x128xf32>
    %36 = vector.extract_strided_slice %28 {offsets = [1, 0], sizes = [1, 128], strides = [1, 1]} : vector<9x128xf32> to vector<1x128xf32>
    %37 = vector.shape_cast %36 : vector<1x128xf32> to vector<128xf32>
    %38 = vector.shape_cast %37 : vector<128xf32> to vector<1x1x128xf32>
    %39 = vector.broadcast %38 : vector<1x1x128xf32> to vector<16x16x128xf32>
    %40 = arith.mulf %35, %39 : vector<16x16x128xf32>
    %41 = arith.addf %34, %40 : vector<16x16x128xf32>
    %c0_28 = arith.constant 0 : index
    %c2 = arith.constant 2 : index
    %c0_29 = arith.constant 0 : index
    %42 = vector.load %arg10[%c0_28, %c2, %c0_29] : memref<18x18x128xf32, #tpu.memory_space<vmem>>, vector<16x16x128xf32>
    %43 = vector.extract_strided_slice %28 {offsets = [2, 0], sizes = [1, 128], strides = [1, 1]} : vector<9x128xf32> to vector<1x128xf32>
    %44 = vector.shape_cast %43 : vector<1x128xf32> to vector<128xf32>
    %45 = vector.shape_cast %44 : vector<128xf32> to vector<1x1x128xf32>
    %46 = vector.broadcast %45 : vector<1x1x128xf32> to vector<16x16x128xf32>
    %47 = arith.mulf %42, %46 : vector<16x16x128xf32>
    %48 = arith.addf %41, %47 : vector<16x16x128xf32>
    %c1_30 = arith.constant 1 : index
    %c0_31 = arith.constant 0 : index
    %c0_32 = arith.constant 0 : index
    %49 = vector.load %arg10[%c1_30, %c0_31, %c0_32] : memref<18x18x128xf32, #tpu.memory_space<vmem>>, vector<16x16x128xf32>
    %50 = vector.extract_strided_slice %28 {offsets = [3, 0], sizes = [1, 128], strides = [1, 1]} : vector<9x128xf32> to vector<1x128xf32>
    %51 = vector.shape_cast %50 : vector<1x128xf32> to vector<128xf32>
    %52 = vector.shape_cast %51 : vector<128xf32> to vector<1x1x128xf32>
    %53 = vector.broadcast %52 : vector<1x1x128xf32> to vector<16x16x128xf32>
    %54 = arith.mulf %49, %53 : vector<16x16x128xf32>
    %55 = arith.addf %48, %54 : vector<16x16x128xf32>
    %c1_33 = arith.constant 1 : index
    %c1_34 = arith.constant 1 : index
    %c0_35 = arith.constant 0 : index
    %56 = vector.load %arg10[%c1_33, %c1_34, %c0_35] : memref<18x18x128xf32, #tpu.memory_space<vmem>>, vector<16x16x128xf32>
    %57 = vector.extract_strided_slice %28 {offsets = [4, 0], sizes = [1, 128], strides = [1, 1]} : vector<9x128xf32> to vector<1x128xf32>
    %58 = vector.shape_cast %57 : vector<1x128xf32> to vector<128xf32>
    %59 = vector.shape_cast %58 : vector<128xf32> to vector<1x1x128xf32>
    %60 = vector.broadcast %59 : vector<1x1x128xf32> to vector<16x16x128xf32>
    %61 = arith.mulf %56, %60 : vector<16x16x128xf32>
    %62 = arith.addf %55, %61 : vector<16x16x128xf32>
    %c1_36 = arith.constant 1 : index
    %c2_37 = arith.constant 2 : index
    %c0_38 = arith.constant 0 : index
    %63 = vector.load %arg10[%c1_36, %c2_37, %c0_38] : memref<18x18x128xf32, #tpu.memory_space<vmem>>, vector<16x16x128xf32>
    %64 = vector.extract_strided_slice %28 {offsets = [5, 0], sizes = [1, 128], strides = [1, 1]} : vector<9x128xf32> to vector<1x128xf32>
    %65 = vector.shape_cast %64 : vector<1x128xf32> to vector<128xf32>
    %66 = vector.shape_cast %65 : vector<128xf32> to vector<1x1x128xf32>
    %67 = vector.broadcast %66 : vector<1x1x128xf32> to vector<16x16x128xf32>
    %68 = arith.mulf %63, %67 : vector<16x16x128xf32>
    %69 = arith.addf %62, %68 : vector<16x16x128xf32>
    %c2_39 = arith.constant 2 : index
    %c0_40 = arith.constant 0 : index
    %c0_41 = arith.constant 0 : index
    %70 = vector.load %arg10[%c2_39, %c0_40, %c0_41] : memref<18x18x128xf32, #tpu.memory_space<vmem>>, vector<16x16x128xf32>
    %71 = vector.extract_strided_slice %28 {offsets = [6, 0], sizes = [1, 128], strides = [1, 1]} : vector<9x128xf32> to vector<1x128xf32>
    %72 = vector.shape_cast %71 : vector<1x128xf32> to vector<128xf32>
    %73 = vector.shape_cast %72 : vector<128xf32> to vector<1x1x128xf32>
    %74 = vector.broadcast %73 : vector<1x1x128xf32> to vector<16x16x128xf32>
    %75 = arith.mulf %70, %74 : vector<16x16x128xf32>
    %76 = arith.addf %69, %75 : vector<16x16x128xf32>
    %c2_42 = arith.constant 2 : index
    %c1_43 = arith.constant 1 : index
    %c0_44 = arith.constant 0 : index
    %77 = vector.load %arg10[%c2_42, %c1_43, %c0_44] : memref<18x18x128xf32, #tpu.memory_space<vmem>>, vector<16x16x128xf32>
    %78 = vector.extract_strided_slice %28 {offsets = [7, 0], sizes = [1, 128], strides = [1, 1]} : vector<9x128xf32> to vector<1x128xf32>
    %79 = vector.shape_cast %78 : vector<1x128xf32> to vector<128xf32>
    %80 = vector.shape_cast %79 : vector<128xf32> to vector<1x1x128xf32>
    %81 = vector.broadcast %80 : vector<1x1x128xf32> to vector<16x16x128xf32>
    %82 = arith.mulf %77, %81 : vector<16x16x128xf32>
    %83 = arith.addf %76, %82 : vector<16x16x128xf32>
    %c2_45 = arith.constant 2 : index
    %c2_46 = arith.constant 2 : index
    %c0_47 = arith.constant 0 : index
    %84 = vector.load %arg10[%c2_45, %c2_46, %c0_47] : memref<18x18x128xf32, #tpu.memory_space<vmem>>, vector<16x16x128xf32>
    %85 = vector.extract_strided_slice %28 {offsets = [8, 0], sizes = [1, 128], strides = [1, 1]} : vector<9x128xf32> to vector<1x128xf32>
    %86 = vector.shape_cast %85 : vector<1x128xf32> to vector<128xf32>
    %87 = vector.shape_cast %86 : vector<128xf32> to vector<1x1x128xf32>
    %88 = vector.broadcast %87 : vector<1x1x128xf32> to vector<16x16x128xf32>
    %89 = arith.mulf %84, %88 : vector<16x16x128xf32>
    %90 = arith.addf %83, %89 : vector<16x16x128xf32>
    %c0_48 = arith.constant 0 : index
    %c0_49 = arith.constant 0 : index
    %91 = vector.load %arg6[%c0_48, %c0_49] : memref<2x128xf32, #tpu.memory_space<vmem>>, vector<1x128xf32>
    %92 = vector.shape_cast %91 : vector<1x128xf32> to vector<1x1x128xf32>
    %93 = vector.broadcast %92 : vector<1x1x128xf32> to vector<16x16x128xf32>
    %94 = arith.addf %90, %93 : vector<16x16x128xf32>
    %cst_50 = arith.constant 0.000000e+00 : f32
    %95 = vector.broadcast %cst_50 : f32 to vector<16x16x128xf32>
    %96 = arith.cmpf ogt, %94, %95 : vector<16x16x128xf32>
    %c1_51 = arith.constant 1 : index
    %c0_52 = arith.constant 0 : index
    %97 = vector.load %arg6[%c1_51, %c0_52] : memref<2x128xf32, #tpu.memory_space<vmem>>, vector<1x128xf32>
    %98 = vector.shape_cast %97 : vector<1x128xf32> to vector<1x1x128xf32>
    %99 = vector.broadcast %98 : vector<1x1x128xf32> to vector<16x16x128xf32>
    %100 = arith.mulf %94, %99 : vector<16x16x128xf32>
    %101 = arith.select %96, %94, %100 : vector<16x16x128xi1>, vector<16x16x128xf32>
    %102 = vector.shape_cast %101 : vector<16x16x128xf32> to vector<256x128xf32>
    %c0_53 = arith.constant 0 : index
    %c0_54 = arith.constant 0 : index
    %103 = vector.load %arg7[%c0_53, %c0_54] : memref<128x128xf32, #tpu.memory_space<vmem>>, vector<128x128xf32>
    %cst_55 = arith.constant dense<0.000000e+00> : vector<256x128xf32>
    %104 = tpu.matmul %102, %103, %cst_55 {dimension_numbers = #tpu.dot_dimension_numbers<[1], [0], [0], [1], [0, 0, 1, 1], [], []>} : vector<256x128xf32>, vector<128x128xf32>, vector<256x128xf32> -> vector<256x128xf32>
    %c0_56 = arith.constant 0 : index
    %c0_57 = arith.constant 0 : index
    %105 = vector.load %arg8[%c0_56, %c0_57] : memref<1x128xf32, #tpu.memory_space<vmem>>, vector<1x128xf32>
    %106 = vector.broadcast %105 : vector<1x128xf32> to vector<256x128xf32>
    %107 = arith.addf %104, %106 : vector<256x128xf32>
    %c1_i32 = arith.constant 1 : i32
    %108 = arith.addi %1, %c1_i32 : i32
    %c0_58 = arith.constant 0 : index
    %109 = arith.index_cast %108 : i32 to index
    %c1_59 = arith.constant 1 : index
    %c0_60 = arith.constant 0 : index
    %110 = vector.load %arg2[%c0_58, %109, %c1_59, %c0_60] : memref<1x18x18x128xf32, #tpu.memory_space<vmem>>, vector<1x16x16x128xf32>
    %111 = vector.shape_cast %110 : vector<1x16x16x128xf32> to vector<16x16x128xf32>
    %112 = vector.shape_cast %111 : vector<16x16x128xf32> to vector<256x128xf32>
    %113 = arith.addf %107, %112 : vector<256x128xf32>
    %c0_61 = arith.constant 0 : index
    %c0_62 = arith.constant 0 : index
    %c0_63 = arith.constant 0 : index
    %c0_64 = arith.constant 0 : index
    %114 = vector.load %arg9[%c0_61, %c0_62, %c0_63, %c0_64] : memref<1x1x256x128xf32, #tpu.memory_space<vmem>>, vector<1x1x256x128xf32>
    %115 = vector.shape_cast %114 : vector<1x1x256x128xf32> to vector<256x128xf32>
    %116 = vector.shape_cast %113 : vector<256x128xf32> to vector<1x1x256x128xf32>
    tpu.vector_store %arg9[%c0_61, %c0_62, %c0_63, %c0_64], %116 {strides = array<i32>} : memref<1x1x256x128xf32, #tpu.memory_space<vmem>>, vector<1x1x256x128xf32>,
    return
  }
  func.func @transform_0(%arg0: i32, %arg1: i32) -> (i32, i32, i32, i32) {
    %c0_i32 = arith.constant 0 : i32
    %c0_i32_0 = arith.constant 0 : i32
    %c0_i32_1 = arith.constant 0 : i32
    %c0_i32_2 = arith.constant 0 : i32
    return %arg0, %c0_i32, %c0_i32_0, %c0_i32_1 : i32, i32, i32, i32
  }
  func.func @transform_1(%arg0: i32, %arg1: i32) -> (i32, i32) {
    %c0_i32 = arith.constant 0 : i32
    %c0_i32_0 = arith.constant 0 : i32
    %c0_i32_1 = arith.constant 0 : i32
    return %c0_i32, %c0_i32_0 : i32, i32
  }
  func.func @transform_2(%arg0: i32, %arg1: i32) -> (i32, i32) {
    %c0_i32 = arith.constant 0 : i32
    %c0_i32_0 = arith.constant 0 : i32
    %c0_i32_1 = arith.constant 0 : i32
    return %c0_i32, %c0_i32_0 : i32, i32
  }
  func.func @transform_3(%arg0: i32, %arg1: i32) -> (i32, i32) {
    %c0_i32 = arith.constant 0 : i32
    %c0_i32_0 = arith.constant 0 : i32
    %c0_i32_1 = arith.constant 0 : i32
    return %c0_i32, %c0_i32_0 : i32, i32
  }
  func.func @transform_4(%arg0: i32, %arg1: i32) -> (i32, i32) {
    %c0_i32 = arith.constant 0 : i32
    %c0_i32_0 = arith.constant 0 : i32
    %c0_i32_1 = arith.constant 0 : i32
    return %c0_i32, %c0_i32_0 : i32, i32
  }
  func.func @transform_5(%arg0: i32, %arg1: i32) -> (i32, i32) {
    %c0_i32 = arith.constant 0 : i32
    %c0_i32_0 = arith.constant 0 : i32
    %c0_i32_1 = arith.constant 0 : i32
    return %c0_i32, %c0_i32_0 : i32, i32
  }
  func.func @transform_6(%arg0: i32, %arg1: i32) -> (i32, i32) {
    %c0_i32 = arith.constant 0 : i32
    %c0_i32_0 = arith.constant 0 : i32
    %c0_i32_1 = arith.constant 0 : i32
    return %c0_i32, %c0_i32_0 : i32, i32
  }
  func.func @transform_7(%arg0: i32, %arg1: i32) -> (i32, i32, i32, i32) {
    %c0_i32 = arith.constant 0 : i32
    %c0_i32_0 = arith.constant 0 : i32
    %c0_i32_1 = arith.constant 0 : i32
    return %arg0, %arg1, %c0_i32, %c0_i32_0 : i32, i32, i32, i32
  }
}

</mosaic_0001>

<llo_original>
// kernel: tpu_custom_call.1
$region0: #{tpu_custom_call.1}
  #allocation0 [shape = 'u32[]', space=smem, size = 0x4, offset = 0x4, fixed_abs, tag = 'smem constant byte address 0x4 - core index']
  #allocation1 [shape = 'u32[72,128]{1,0:T(1,128)}', space=vmem, size = 0x9000, scoped, tag = 'internal scratch']
  #allocation2 [shape = 'f32[18,18,128]{2,1,0:T(8,128)}', space=vmem, size = 0x36000, scoped, tag = 'scratch operand']
  %s0 = inlined_call_operand.vmem [shape: f32[2,18,18,128], index: 0, kind: input, shape index: {}]
  %s1 = inlined_call_operand.vmem [shape: f32[128,128], index: 1, kind: input, shape index: {}]
  %s2 = inlined_call_operand.vmem [shape: f32[2,128], index: 2, kind: input, shape index: {}]
  %s3 = inlined_call_operand.vmem [shape: f32[9,128], index: 3, kind: input, shape index: {}]
  %s4 = inlined_call_operand.vmem [shape: f32[2,128], index: 4, kind: input, shape index: {}]
  %s5 = inlined_call_operand.vmem [shape: f32[128,128], index: 5, kind: input, shape index: {}]
  %s6 = inlined_call_operand.vmem [shape: f32[1,128], index: 6, kind: input, shape index: {}]
  %s7 = inlined_call_operand.hbm [shape: f32[2,1,256,128], index: 7, kind: output, shape index: {}]
  %s8 = sld [smem:[#allocation0]]
  $region65: #{tpu_custom_call.1} parent=0
    _
  %s10 = ssub.s32 1, %s8
  %s11 = scalar_select 0, %s10, %s8
  $region1: #{tpu_custom_call.1} parent=0
    #allocation3 [shape = 'u8[262144]{0}', space=vmem, size = 0x40000, scoped, tag = 'output window, operand 0']
    #allocation4 [shape = 's32[2]{0}', space=sflag, size = 0x8, scoped, tag = 'scoped memory for tpu_custom_call.1']
    %12 = vsyncpa [#allocation4], 0
    %s13 = scalar_lea.sflag [#allocation4], 1
    %14 = vsyncpa %s13, 0
    loop: start=0, step=1, limit=4
    $region2: #{tpu_custom_call.1} parent=1 // loop_pre_header
      _
    $region3: #{tpu_custom_call.1} parent=1 // loop_header
      %s16 = sphi 0, %s20
      %p17 = scmp.ge.s32.totalorder %s16, 4
      %s23 = sphi 0, %s35
      %s24 = sphi 0, %s31
      %s25 = sphi 0, %s23
      %s26 = sphi 0, %s24
      %s27 = sphi 0, %s25
      %s28 = sphi 0, %s26
      %s38 = sphi 0, %s40
      %s41 = sphi 0, %s38
      %s42 = sphi 0, %s41
      %s58 = sphi 0, %s42
      %s62 = sphi 0, %s62
      %s64 = sphi 0, %s62
      %s65 = sphi 0, %s64
      %s79 = sphi 0, %s65
      %s83 = sphi 0, %s83
      %s85 = sphi 0, %s83
      %s86 = sphi 0, %s85
      %s100 = sphi 0, %s86
      %s104 = sphi 0, %s104
      %s106 = sphi 0, %s104
      %s107 = sphi 0, %s106
      %s121 = sphi 0, %s107
      %s125 = sphi 0, %s125
      %s127 = sphi 0, %s125
      %s128 = sphi 0, %s127
      %s142 = sphi 0, %s128
      %s146 = sphi 0, %s146
      %s148 = sphi 0, %s146
      %s149 = sphi 0, %s148
      %s163 = sphi 0, %s149
      %s167 = sphi 0, %s167
      %s169 = sphi 0, %s167
      %s170 = sphi 0, %s169
      %s184 = sphi 0, %s170
      %s192 = sphi 0, %s194
      %s195 = sphi 0, %s192
      %s196 = sphi 0, %s195
      %s212 = sphi 0, %s196
    $region4: #{tpu_custom_call.1} parent=1 // loop_header_branch
      %19 = sbr.rel (%p17) target = $region8
    $region5: #{tpu_custom_call.1} parent=1 // loop_body
      %s21 = ssub.s32 %s16, 1
      %s22 = ssub.s32 %s16, 2
      %s29 = sadd.s32 1, %s24
      %p30 = scmp.ge.s32.totalorder %s29, 1
      %s31 = scalar_select %p30, 0, %s29
      %s32 = sadd.s32 1, %s23
      %s33 = scalar_select %p30, %s32, %s23
      %p34 = scmp.ge.s32.totalorder %s33, 2
      %s35 = scalar_select %p34, 0, %s33
      %s36 = ssub.s32 %s23, %s35
      %p37 = scmp.eq.s32.totalorder %s36, 0
      %s39 = sadd.s32 %s38, 1
      %s40 = scalar_select %p37, %s38, %s39
      %p43 = pneg %p37
      %p44 = scmp.eq.s32.totalorder %s16, 1
      %p45 = por %p43, %p44
      %p46 = scmp.ne.s32.totalorder %s38, %s41
      %p47 = scmp.eq.s32.totalorder %s16, 0
      %p48 = por %p46, %p47
      %p49 = scmp.ne.s32.totalorder %s38, %s41
      %p50 = scmp.eq.s32.totalorder %s21, 1
      %p51 = por %p49, %p50
      %p52 = scmp.ne.s32.totalorder %s41, %s42
      %p53 = scmp.eq.s32.totalorder %s21, 0
      %p54 = por %p52, %p53
      %p55 = scmp.ne.s32.totalorder %s41, %s42
      %p56 = scmp.eq.s32.totalorder %s22, 1
      %p57 = por %p55, %p56
      %p59 = scmp.ne.s32.totalorder %s42, %s58
      %p60 = scmp.eq.s32.totalorder %s22, 0
      %p61 = por %p59, %p60
      %s63 = sadd.s32 %s62, 1
      %p66 = scmp.eq.s32.totalorder %s16, 1
      %p67 = scmp.ne.s32.totalorder %s62, %s64
      %p68 = scmp.eq.s32.totalorder %s16, 0
      %p69 = por %p67, %p68
      %p70 = scmp.ne.s32.totalorder %s62, %s64
      %p71 = scmp.eq.s32.totalorder %s21, 1
      %p72 = por %p70, %p71
      %p73 = scmp.ne.s32.totalorder %s64, %s65
      %p74 = scmp.eq.s32.totalorder %s21, 0
      %p75 = por %p73, %p74
      %p76 = scmp.ne.s32.totalorder %s64, %s65
      %p77 = scmp.eq.s32.totalorder %s22, 1
      %p78 = por %p76, %p77
      %p80 = scmp.ne.s32.totalorder %s65, %s79
      %p81 = scmp.eq.s32.totalorder %s22, 0
      %p82 = por %p80, %p81
      %s84 = sadd.s32 %s83, 1
      %p87 = scmp.eq.s32.totalorder %s16, 1
      %p88 = scmp.ne.s32.totalorder %s83, %s85
      %p89 = scmp.eq.s32.totalorder %s16, 0
      %p90 = por %p88, %p89
      %p91 = scmp.ne.s32.totalorder %s83, %s85
      %p92 = scmp.eq.s32.totalorder %s21, 1
      %p93 = por %p91, %p92
      %p94 = scmp.ne.s32.totalorder %s85, %s86
      %p95 = scmp.eq.s32.totalorder %s21, 0
      %p96 = por %p94, %p95
      %p97 = scmp.ne.s32.totalorder %s85, %s86
      %p98 = scmp.eq.s32.totalorder %s22, 1
      %p99 = por %p97, %p98
      %p101 = scmp.ne.s32.totalorder %s86, %s100
      %p102 = scmp.eq.s32.totalorder %s22, 0
      %p103 = por %p101, %p102
      %s105 = sadd.s32 %s104, 1
      %p108 = scmp.eq.s32.totalorder %s16, 1
      %p109 = scmp.ne.s32.totalorder %s104, %s106
      %p110 = scmp.eq.s32.totalorder %s16, 0
      %p111 = por %p109, %p110
      %p112 = scmp.ne.s32.totalorder %s104, %s106
      %p113 = scmp.eq.s32.totalorder %s21, 1
      %p114 = por %p112, %p113
      %p115 = scmp.ne.s32.totalorder %s106, %s107
      %p116 = scmp.eq.s32.totalorder %s21, 0
      %p117 = por %p115, %p116
      %p118 = scmp.ne.s32.totalorder %s106, %s107
      %p119 = scmp.eq.s32.totalorder %s22, 1
      %p120 = por %p118, %p119
      %p122 = scmp.ne.s32.totalorder %s107, %s121
      %p123 = scmp.eq.s32.totalorder %s22, 0
      %p124 = por %p122, %p123
      %s126 = sadd.s32 %s125, 1
      %p129 = scmp.eq.s32.totalorder %s16, 1
      %p130 = scmp.ne.s32.totalorder %s125, %s127
      %p131 = scmp.eq.s32.totalorder %s16, 0
      %p132 = por %p130, %p131
      %p133 = scmp.ne.s32.totalorder %s125, %s127
      %p134 = scmp.eq.s32.totalorder %s21, 1
      %p135 = por %p133, %p134
      %p136 = scmp.ne.s32.totalorder %s127, %s128
      %p137 = scmp.eq.s32.totalorder %s21, 0
      %p138 = por %p136, %p137
      %p139 = scmp.ne.s32.totalorder %s127, %s128
      %p140 = scmp.eq.s32.totalorder %s22, 1
      %p141 = por %p139, %p140
      %p143 = scmp.ne.s32.totalorder %s128, %s142
      %p144 = scmp.eq.s32.totalorder %s22, 0
      %p145 = por %p143, %p144
      %s147 = sadd.s32 %s146, 1
      %p150 = scmp.eq.s32.totalorder %s16, 1
      %p151 = scmp.ne.s32.totalorder %s146, %s148
      %p152 = scmp.eq.s32.totalorder %s16, 0
      %p153 = por %p151, %p152
      %p154 = scmp.ne.s32.totalorder %s146, %s148
      %p155 = scmp.eq.s32.totalorder %s21, 1
      %p156 = por %p154, %p155
      %p157 = scmp.ne.s32.totalorder %s148, %s149
      %p158 = scmp.eq.s32.totalorder %s21, 0
      %p159 = por %p157, %p158
      %p160 = scmp.ne.s32.totalorder %s148, %s149
      %p161 = scmp.eq.s32.totalorder %s22, 1
      %p162 = por %p160, %p161
      %p164 = scmp.ne.s32.totalorder %s149, %s163
      %p165 = scmp.eq.s32.totalorder %s22, 0
      %p166 = por %p164, %p165
      %s168 = sadd.s32 %s167, 1
      %p171 = scmp.eq.s32.totalorder %s16, 1
      %p172 = scmp.ne.s32.totalorder %s167, %s169
      %p173 = scmp.eq.s32.totalorder %s16, 0
      %p174 = por %p172, %p173
      %p175 = scmp.ne.s32.totalorder %s167, %s169
      %p176 = scmp.eq.s32.totalorder %s21, 1
      %p177 = por %p175, %p176
      %p178 = scmp.ne.s32.totalorder %s169, %s170
      %p179 = scmp.eq.s32.totalorder %s21, 0
      %p180 = por %p178, %p179
      %p181 = scmp.ne.s32.totalorder %s169, %s170
      %p182 = scmp.eq.s32.totalorder %s22, 1
      %p183 = por %p181, %p182
      %p185 = scmp.ne.s32.totalorder %s170, %s184
      %p186 = scmp.eq.s32.totalorder %s22, 0
      %p187 = por %p185, %p186
      %s188 = ssub.s32 %s23, %s35
      %s189 = ssub.s32 %s24, %s31
      %s190 = sor.u32 %s188, %s189
      %p191 = scmp.eq.s32.totalorder %s190, 0
      %s193 = sadd.s32 %s192, 1
      %s194 = scalar_select %p191, %s192, %s193
      %p197 = pneg %p191
      %p198 = scmp.eq.s32.totalorder %s16, 1
      %p199 = por %p197, %p198
      %p200 = scmp.ne.s32.totalorder %s192, %s195
      %p201 = scmp.eq.s32.totalorder %s16, 0
      %p202 = por %p200, %p201
      %p203 = scmp.ne.s32.totalorder %s192, %s195
      %p204 = scmp.eq.s32.totalorder %s21, 1
      %p205 = por %p203, %p204
      %p206 = scmp.ne.s32.totalorder %s195, %s196
      %p207 = scmp.eq.s32.totalorder %s21, 0
      %p208 = por %p206, %p207
      %p209 = scmp.ne.s32.totalorder %s195, %s196
      %p210 = scmp.eq.s32.totalorder %s22, 1
      %p211 = por %p209, %p210
      %p213 = scmp.ne.s32.totalorder %s196, %s212
      %p214 = scmp.eq.s32.totalorder %s22, 0
      %p215 = por %p213, %p214
      %p216 = scmp.le.s32.totalorder 1, %s16
      %p217 = scmp.lt.s32.totalorder %s16, 3
      %p218 = pnand %p216, %p217
      %p219 = pneg %p218
      // Predicated region
      $region9: #{tpu_custom_call.1} parent=5 // pred_check
        _
      $region10: #{tpu_custom_call.1} parent=5 // pred_check_branch
        %221 = sbr.rel (%p218) target = $region12
      $region11: #{tpu_custom_call.1} parent=5 // pred_region
        %s222 = ssub.s32 %s16, 1
        // Predicated region
        $region13: #{tpu_custom_call.1} parent=11 // pred_check
          %p223 = pneg %p75
        $region14: #{tpu_custom_call.1} parent=11 // pred_check_branch
          %225 = sbr.rel (%p223) target = $region16
        $region15: #{tpu_custom_call.1} parent=11 // pred_region
          _
        $region16: #{tpu_custom_call.1} parent=11 // pred_fallthru
          _
        // Predicated region
        $region17: #{tpu_custom_call.1} parent=11 // pred_check
          %p226 = pneg %p96
        $region18: #{tpu_custom_call.1} parent=11 // pred_check_branch
          %228 = sbr.rel (%p226) target = $region20
        $region19: #{tpu_custom_call.1} parent=11 // pred_region
          _
        $region20: #{tpu_custom_call.1} parent=11 // pred_fallthru
          _
        // Predicated region
        $region21: #{tpu_custom_call.1} parent=11 // pred_check
          %p229 = pneg %p117
        $region22: #{tpu_custom_call.1} parent=11 // pred_check_branch
          %231 = sbr.rel (%p229) target = $region24
        $region23: #{tpu_custom_call.1} parent=11 // pred_region
          _
        $region24: #{tpu_custom_call.1} parent=11 // pred_fallthru
          _
        // Predicated region
        $region25: #{tpu_custom_call.1} parent=11 // pred_check
          %p232 = pneg %p138
        $region26: #{tpu_custom_call.1} parent=11 // pred_check_branch
          %234 = sbr.rel (%p232) target = $region28
        $region27: #{tpu_custom_call.1} parent=11 // pred_region
          _
        $region28: #{tpu_custom_call.1} parent=11 // pred_fallthru
          _
        // Predicated region
        $region29: #{tpu_custom_call.1} parent=11 // pred_check
          %p235 = pneg %p159
        $region30: #{tpu_custom_call.1} parent=11 // pred_check_branch
          %237 = sbr.rel (%p235) target = $region32
        $region31: #{tpu_custom_call.1} parent=11 // pred_region
          _
        $region32: #{tpu_custom_call.1} parent=11 // pred_fallthru
          _
        // Predicated region
        $region33: #{tpu_custom_call.1} parent=11 // pred_check
          %p238 = pneg %p180
        $region34: #{tpu_custom_call.1} parent=11 // pred_check_branch
          %240 = sbr.rel (%p238) target = $region36
        $region35: #{tpu_custom_call.1} parent=11 // pred_region
          _
        $region36: #{tpu_custom_call.1} parent=11 // pred_fallthru
          _
      $region12: #{tpu_custom_call.1} parent=5 // pred_fallthru
        _
      %p241 = scmp.lt.s32.totalorder %s16, 2
      // Predicated region
      $region37: #{tpu_custom_call.1} parent=5 // pred_check
        %p242 = pneg %p241
      $region38: #{tpu_custom_call.1} parent=5 // pred_check_branch
        %244 = sbr.rel (%p242) target = $region40
      $region39: #{tpu_custom_call.1} parent=5 // pred_region
        // Predicated region
        $region41: #{tpu_custom_call.1} parent=39 // pred_check
          %p245 = pneg %p48
        $region42: #{tpu_custom_call.1} parent=39 // pred_check_branch
          %247 = sbr.rel (%p245) target = $region44
        $region43: #{tpu_custom_call.1} parent=39 // pred_region
          %p248 = scmp.lt.s32.totalorder %s23, 1
          %s249 = scalar_select %p248, %s23, 1
          %s250 = smul.addr %s249, 54
          %s251 = smul.addr %s250, 8
          %s252 = scalar_lea.vmem %s0, %s251
        $region44: #{tpu_custom_call.1} parent=39 // pred_fallthru
          _
      $region40: #{tpu_custom_call.1} parent=5 // pred_fallthru
        _
      %p253 = scmp.le.s32.totalorder 1, %s16
      %p254 = scmp.lt.s32.totalorder %s16, 3
      %p255 = pnand %p253, %p254
      %p256 = pneg %p255
      // Predicated region
      $region45: #{tpu_custom_call.1} parent=5 // pred_check
        _
      $region46: #{tpu_custom_call.1} parent=5 // pred_check_branch
        %258 = sbr.rel (%p255) target = $region48
      $region47: #{tpu_custom_call.1} parent=5 // pred_region
        %s259 = ssub.s32 %s16, 1
        %p260 = scmp.lt.s32.totalorder %s25, 1
        %s261 = scalar_select %p260, %s25, 1
        %s262 = smul.addr %s261, 54
        %s263 = smul.addr %s262, 8
        %s264 = scalar_lea.vmem %s0, %s263
        %p265 = pneg %p54
        %p266 = pneg %p51
        %p267 = pneg %p75
        %p268 = pneg %p72
        %p269 = pneg %p96
        %p270 = pneg %p93
        %p271 = pneg %p117
        %p272 = pneg %p114
        %p273 = pneg %p138
        %p274 = pneg %p135
        %p275 = pneg %p159
        %p276 = pneg %p156
        %p277 = pneg %p180
        %p278 = pneg %p177
        %p279 = pneg %p208
        %p280 = pneg %p205
        %s281 = sand.u32 %s195, 1
        %s282 = scalar_lea.sflag [#allocation4], %s281
        %s283 = sand.u32 %s195, 1
        %s284 = smul.addr %s283, 256
        %s285 = scalar_lea.vmem [#allocation3], %s284
        %p286 = scmp.lt.s32.totalorder %s25, 1
        %s287 = scalar_select %p286, %s25, 1
        %s288 = smul.addr %s287, 54
        %s289 = smul.addr %s288, 8
        %s290 = scalar_lea.vmem %s0, %s289
        %s291 = smul.u32 %s26, 16
        %s292 = smul.u32 %s291, 24
        %s293 = scalar_lea.vmem %s290, %s292
        %v294 = vld [vmem:[%s293] sm:$0xff]
        %v295 = vld [vmem:[%s293 + $0x8] sm:$0xff]
        %v296 = vld [vmem:[%s293 + $0x10] sm:$0x3]
        %v297 = vld [vmem:[%s293 + $0x18] sm:$0xff]
        %v298 = vld [vmem:[%s293 + $0x20] sm:$0xff]
        %v299 = vld [vmem:[%s293 + $0x28] sm:$0x3]
        %v300 = vld [vmem:[%s293 + $0x30] sm:$0xff]
        %v301 = vld [vmem:[%s293 + $0x38] sm:$0xff]
        %v302 = vld [vmem:[%s293 + $0x40] sm:$0x3]
        %v303 = vld [vmem:[%s293 + $0x48] sm:$0xff]
        %v304 = vld [vmem:[%s293 + $0x50] sm:$0xff]
        %v305 = vld [vmem:[%s293 + $0x58] sm:$0x3]
        %v306 = vld [vmem:[%s293 + $0x60] sm:$0xff]
        %v307 = vld [vmem:[%s293 + $0x68] sm:$0xff]
        %v308 = vld [vmem:[%s293 + $0x70] sm:$0x3]
        %v309 = vld [vmem:[%s293 + $0x78] sm:$0xff]
        %v310 = vld [vmem:[%s293 + $0x80] sm:$0xff]
        %v311 = vld [vmem:[%s293 + $0x88] sm:$0x3]
        %v312 = vld [vmem:[%s293 + $0x90] sm:$0xff]
        %v313 = vld [vmem:[%s293 + $0x98] sm:$0xff]
        %v314 = vld [vmem:[%s293 + $0xa0] sm:$0x3]
        %v315 = vld [vmem:[%s293 + $0xa8] sm:$0xff]
        %v316 = vld [vmem:[%s293 + $0xb0] sm:$0xff]
        %v317 = vld [vmem:[%s293 + $0xb8] sm:$0x3]
        %v318 = vld [vmem:[%s293 + $0xc0] sm:$0xff]
        %v319 = vld [vmem:[%s293 + $0xc8] sm:$0xff]
        %v320 = vld [vmem:[%s293 + $0xd0] sm:$0x3]
        %v321 = vld [vmem:[%s293 + $0xd8] sm:$0xff]
        %v322 = vld [vmem:[%s293 + $0xe0] sm:$0xff]
        %v323 = vld [vmem:[%s293 + $0xe8] sm:$0x3]
        %v324 = vld [vmem:[%s293 + $0xf0] sm:$0xff]
        %v325 = vld [vmem:[%s293 + $0xf8] sm:$0xff]
        %v326 = vld [vmem:[%s293 + $0x100] sm:$0x3]
        %v327 = vld [vmem:[%s293 + $0x108] sm:$0xff]
        %v328 = vld [vmem:[%s293 + $0x110] sm:$0xff]
        %v329 = vld [vmem:[%s293 + $0x118] sm:$0x3]
        %v330 = vld [vmem:[%s293 + $0x120] sm:$0xff]
        %v331 = vld [vmem:[%s293 + $0x128] sm:$0xff]
        %v332 = vld [vmem:[%s293 + $0x130] sm:$0x3]
        %v333 = vld [vmem:[%s293 + $0x138] sm:$0xff]
        %v334 = vld [vmem:[%s293 + $0x140] sm:$0xff]
        %v335 = vld [vmem:[%s293 + $0x148] sm:$0x3]
        %v336 = vld [vmem:[%s293 + $0x150] sm:$0xff]
        %v337 = vld [vmem:[%s293 + $0x158] sm:$0xff]
        %v338 = vld [vmem:[%s293 + $0x160] sm:$0x3]
        %v339 = vld [vmem:[%s293 + $0x168] sm:$0xff]
        %v340 = vld [vmem:[%s293 + $0x170] sm:$0xff]
        %v341 = vld [vmem:[%s293 + $0x178] sm:$0x3]
        %v342 = vld [vmem:[%s293 + $0x180] sm:$0xff]
        %v343 = vld [vmem:[%s293 + $0x188] sm:$0xff]
        %v344 = vld [vmem:[%s293 + $0x190] sm:$0x3]
        %v345 = vld [vmem:[%s293 + $0x198] sm:$0xff]
        %v346 = vld [vmem:[%s293 + $0x1a0] sm:$0xff]
        %v347 = vld [vmem:[%s293 + $0x1a8] sm:$0x3]
        %v402 = vrot.slane %v294, 2
        %v403 = vrot.slane %v294, 4
        %v404 = vrot.slane %v294, 6
        %v405 = vrot.slane %v295, 2
        %v406 = vrot.slane %v295, 4
        %v407 = vrot.slane %v295, 6
        %v408 = vrot.slane %v297, 2
        %v409 = vrot.slane %v297, 4
        %v410 = vrot.slane %v297, 6
        %v411 = vrot.slane %v298, 2
        %v412 = vrot.slane %v298, 4
        %v413 = vrot.slane %v298, 6
        %v414 = vrot.slane %v300, 2
        %v415 = vrot.slane %v300, 4
        %v416 = vrot.slane %v300, 6
        %v417 = vrot.slane %v301, 2
        %v418 = vrot.slane %v301, 4
        %v419 = vrot.slane %v301, 6
        %v420 = vrot.slane %v303, 2
        %v421 = vrot.slane %v303, 4
        %v422 = vrot.slane %v303, 6
        %v423 = vrot.slane %v304, 2
        %v424 = vrot.slane %v304, 4
        %v425 = vrot.slane %v304, 6
        %v426 = vrot.slane %v306, 2
        %v427 = vrot.slane %v306, 4
        %v428 = vrot.slane %v306, 6
        %v429 = vrot.slane %v307, 2
        %v430 = vrot.slane %v307, 4
        %v431 = vrot.slane %v307, 6
        %v432 = vrot.slane %v309, 2
        %v433 = vrot.slane %v309, 4
        %v434 = vrot.slane %v309, 6
        %v435 = vrot.slane %v310, 2
        %v436 = vrot.slane %v310, 4
        %v437 = vrot.slane %v310, 6
        %v438 = vrot.slane %v312, 2
        %v439 = vrot.slane %v312, 4
        %v440 = vrot.slane %v312, 6
        %v441 = vrot.slane %v313, 2
        %v442 = vrot.slane %v313, 4
        %v443 = vrot.slane %v313, 6
        %v444 = vrot.slane %v315, 2
        %v445 = vrot.slane %v315, 4
        %v446 = vrot.slane %v315, 6
        %v447 = vrot.slane %v316, 2
        %v448 = vrot.slane %v316, 4
        %v449 = vrot.slane %v316, 6
        %v450 = vrot.slane %v318, 2
        %v451 = vrot.slane %v318, 4
        %v452 = vrot.slane %v318, 6
        %v453 = vrot.slane %v319, 2
        %v454 = vrot.slane %v319, 4
        %v455 = vrot.slane %v319, 6
        %v456 = vrot.slane %v321, 2
        %v457 = vrot.slane %v321, 4
        %v458 = vrot.slane %v321, 6
        %v459 = vrot.slane %v322, 2
        %v460 = vrot.slane %v322, 4
        %v461 = vrot.slane %v322, 6
        %v462 = vrot.slane %v324, 2
        %v463 = vrot.slane %v324, 4
        %v464 = vrot.slane %v324, 6
        %v465 = vrot.slane %v325, 2
        %v466 = vrot.slane %v325, 4
        %v467 = vrot.slane %v325, 6
        %v468 = vrot.slane %v327, 2
        %v469 = vrot.slane %v327, 4
        %v470 = vrot.slane %v327, 6
        %v471 = vrot.slane %v328, 2
        %v472 = vrot.slane %v328, 4
        %v473 = vrot.slane %v328, 6
        %v474 = vrot.slane %v330, 2
        %v475 = vrot.slane %v330, 4
        %v476 = vrot.slane %v330, 6
        %v477 = vrot.slane %v331, 2
        %v478 = vrot.slane %v331, 4
        %v479 = vrot.slane %v331, 6
        %v480 = vrot.slane %v333, 2
        %v481 = vrot.slane %v333, 4
        %v482 = vrot.slane %v333, 6
        %v483 = vrot.slane %v334, 2
        %v484 = vrot.slane %v334, 4
        %v485 = vrot.slane %v334, 6
        %v486 = vrot.slane %v336, 2
        %v487 = vrot.slane %v336, 4
        %v488 = vrot.slane %v336, 6
        %v489 = vrot.slane %v337, 2
        %v490 = vrot.slane %v337, 4
        %v491 = vrot.slane %v337, 6
        %v492 = vrot.slane %v339, 2
        %v493 = vrot.slane %v339, 4
        %v494 = vrot.slane %v339, 6
        %v495 = vrot.slane %v340, 2
        %v496 = vrot.slane %v340, 4
        %v497 = vrot.slane %v340, 6
        %v498 = vrot.slane %v342, 2
        %v499 = vrot.slane %v342, 4
        %v500 = vrot.slane %v342, 6
        %v501 = vrot.slane %v343, 2
        %v502 = vrot.slane %v343, 4
        %v503 = vrot.slane %v343, 6
        %v504 = vrot.slane %v345, 2
        %v505 = vrot.slane %v345, 4
        %v506 = vrot.slane %v345, 6
        %v507 = vrot.slane %v346, 2
        %v508 = vrot.slane %v346, 4
        %v509 = vrot.slane %v346, 6
        %v510 = vld [vmem:[%s1] sm:$0xff]
        %v511 = vld [vmem:[%s1 + $0x8] sm:$0xff]
        %v512 = vld [vmem:[%s1 + $0x10] sm:$0xff]
        %v513 = vld [vmem:[%s1 + $0x18] sm:$0xff]
        %v514 = vld [vmem:[%s1 + $0x20] sm:$0xff]
        %v515 = vld [vmem:[%s1 + $0x28] sm:$0xff]
        %v516 = vld [vmem:[%s1 + $0x30] sm:$0xff]
        %v517 = vld [vmem:[%s1 + $0x38] sm:$0xff]
        %v518 = vld [vmem:[%s1 + $0x40] sm:$0xff]
        %v519 = vld [vmem:[%s1 + $0x48] sm:$0xff]
        %v520 = vld [vmem:[%s1 + $0x50] sm:$0xff]
        %v521 = vld [vmem:[%s1 + $0x58] sm:$0xff]
        %v522 = vld [vmem:[%s1 + $0x60] sm:$0xff]
        %v523 = vld [vmem:[%s1 + $0x68] sm:$0xff]
        %v524 = vld [vmem:[%s1 + $0x70] sm:$0xff]
        %v525 = vld [vmem:[%s1 + $0x78] sm:$0xff]
        %v526 = vld [vmem:[%s2] sm:$0x1]
        %v527 = vperm.slane %v526, 0
        %528 = vst [vmem:[#allocation1] ss:$4 sm:$0xff] %v294
        %s529 = scalar_lea.vmem [#allocation1], 1
        %530 = vst [vmem:[%s529] ss:$4 sm:$0xff] %v402
        %s531 = scalar_lea.vmem [#allocation1], 2
        %532 = vst [vmem:[%s531] ss:$4 sm:$0xff] %v403
        %s533 = scalar_lea.vmem [#allocation1], 3
        %534 = vst [vmem:[%s533] ss:$4 sm:$0xff] %v404
        %s535 = scalar_lea.vmem [#allocation1], 32
        %536 = vst [vmem:[%s535] ss:$4 sm:$0xff] %v295
        %s537 = scalar_lea.vmem [#allocation1], 33
        %538 = vst [vmem:[%s537] ss:$4 sm:$0xff] %v405
        %s539 = scalar_lea.vmem [#allocation1], 34
        %540 = vst [vmem:[%s539] ss:$4 sm:$0xff] %v406
        %s541 = scalar_lea.vmem [#allocation1], 35
        %542 = vst [vmem:[%s541] ss:$4 sm:$0xff] %v407
        %v543 = vld.sshfl [vmem:[#allocation1] sm:$0xff pattern:$0x73625140]
        %v544 = vld.sshfl [vmem:[#allocation1 + $0x20] sm:$0xff pattern:$0x73625140]
        %545 = vst [vmem:[#allocation1] ss:$4 sm:$0xff] %v296
        %546 = vst [vmem:[%s529] ss:$4 sm:$0xff] %v297
        %547 = vst [vmem:[%s531] ss:$4 sm:$0xff] %v408
        %548 = vst [vmem:[%s533] ss:$4 sm:$0xff] %v409
        %549 = vst [vmem:[%s535] ss:$4 sm:$0xff] %v410
        %550 = vst [vmem:[%s537] ss:$4 sm:$0xff] %v298
        %551 = vst [vmem:[%s539] ss:$4 sm:$0xff] %v411
        %552 = vst [vmem:[%s541] ss:$4 sm:$0xff] %v412
        %v553 = vld.sshfl [vmem:[#allocation1] sm:$0xff pattern:$0x73625140]
        %v554 = vld.sshfl [vmem:[#allocation1 + $0x20] sm:$0xff pattern:$0x73625140]
        %555 = vst [vmem:[#allocation1] ss:$4 sm:$0xff] %v413
        %556 = vst [vmem:[%s529] ss:$4 sm:$0xff] %v299
        %557 = vst [vmem:[%s531] ss:$4 sm:$0xff] %v300
        %558 = vst [vmem:[%s533] ss:$4 sm:$0xff] %v414
        %559 = vst [vmem:[%s535] ss:$4 sm:$0xff] %v415
        %560 = vst [vmem:[%s537] ss:$4 sm:$0xff] %v416
        %561 = vst [vmem:[%s539] ss:$4 sm:$0xff] %v301
        %562 = vst [vmem:[%s541] ss:$4 sm:$0xff] %v417
        %v563 = vld.sshfl [vmem:[#allocation1] sm:$0xff pattern:$0x73625140]
        %v564 = vld.sshfl [vmem:[#allocation1 + $0x20] sm:$0xff pattern:$0x73625140]
        %565 = vst [vmem:[#allocation1] ss:$4 sm:$0xff] %v418
        %566 = vst [vmem:[%s529] ss:$4 sm:$0xff] %v419
        %567 = vst [vmem:[%s531] ss:$4 sm:$0xff] %v302
        %568 = vst [vmem:[%s533] ss:$4 sm:$0xff] %v303
        %569 = vst [vmem:[%s535] ss:$4 sm:$0xff] %v420
        %570 = vst [vmem:[%s537] ss:$4 sm:$0xff] %v421
        %571 = vst [vmem:[%s539] ss:$4 sm:$0xff] %v422
        %572 = vst [vmem:[%s541] ss:$4 sm:$0xff] %v304
        %v573 = vld.sshfl [vmem:[#allocation1] sm:$0xff pattern:$0x73625140]
        %v574 = vld.sshfl [vmem:[#allocation1 + $0x20] sm:$0xff pattern:$0x73625140]
        %575 = vst [vmem:[#allocation1] ss:$4 sm:$0xff] %v423
        %576 = vst [vmem:[%s529] ss:$4 sm:$0xff] %v424
        %577 = vst [vmem:[%s531] ss:$4 sm:$0xff] %v425
        %578 = vst [vmem:[%s533] ss:$4 sm:$0xff] %v305
        %579 = vst [vmem:[%s535] ss:$4 sm:$0xff] %v306
        %580 = vst [vmem:[%s537] ss:$4 sm:$0xff] %v426
        %581 = vst [vmem:[%s539] ss:$4 sm:$0xff] %v427
        %582 = vst [vmem:[%s541] ss:$4 sm:$0xff] %v428
        %v583 = vld.sshfl [vmem:[#allocation1] sm:$0xff pattern:$0x73625140]
        %v584 = vld.sshfl [vmem:[#allocation1 + $0x20] sm:$0xff pattern:$0x73625140]
        %585 = vst [vmem:[#allocation1] ss:$4 sm:$0xff] %v307
        %586 = vst [vmem:[%s529] ss:$4 sm:$0xff] %v429
        %587 = vst [vmem:[%s531] ss:$4 sm:$0xff] %v430
        %588 = vst [vmem:[%s533] ss:$4 sm:$0xff] %v431
        %589 = vst [vmem:[%s535] ss:$4 sm:$0xff] %v308
        %590 = vst [vmem:[%s537] ss:$4 sm:$0xff] %v309
        %591 = vst [vmem:[%s539] ss:$4 sm:$0xff] %v432
        %592 = vst [vmem:[%s541] ss:$4 sm:$0xff] %v433
        %v593 = vld.sshfl [vmem:[#allocation1] sm:$0xff pattern:$0x73625140]
        %v594 = vld.sshfl [vmem:[#allocation1 + $0x20] sm:$0xff pattern:$0x73625140]
        %595 = vst [vmem:[#allocation1] ss:$4 sm:$0xff] %v434
        %596 = vst [vmem:[%s529] ss:$4 sm:$0xff] %v310
        %597 = vst [vmem:[%s531] ss:$4 sm:$0xff] %v435
        %598 = vst [vmem:[%s533] ss:$4 sm:$0xff] %v436
        %599 = vst [vmem:[%s535] ss:$4 sm:$0xff] %v437
        %600 = vst [vmem:[%s537] ss:$4 sm:$0xff] %v311
        %601 = vst [vmem:[%s539] ss:$4 sm:$0xff] %v312
        %602 = vst [vmem:[%s541] ss:$4 sm:$0xff] %v438
        %v603 = vld.sshfl [vmem:[#allocation1] sm:$0xff pattern:$0x73625140]
        %v604 = vld.sshfl [vmem:[#allocation1 + $0x20] sm:$0xff pattern:$0x73625140]
        %605 = vst [vmem:[#allocation1] ss:$4 sm:$0xff] %v439
        %606 = vst [vmem:[%s529] ss:$4 sm:$0xff] %v440
        %607 = vst [vmem:[%s531] ss:$4 sm:$0xff] %v313
        %608 = vst [vmem:[%s533] ss:$4 sm:$0xff] %v441
        %609 = vst [vmem:[%s535] ss:$4 sm:$0xff] %v442
        %610 = vst [vmem:[%s537] ss:$4 sm:$0xff] %v443
        %611 = vst [vmem:[%s539] ss:$4 sm:$0xff] %v314
        %612 = vst [vmem:[%s541] ss:$4 sm:$0xff] %v315
        %v613 = vld.sshfl [vmem:[#allocation1] sm:$0xff pattern:$0x73625140]
        %v614 = vld.sshfl [vmem:[#allocation1 + $0x20] sm:$0xff pattern:$0x73625140]
        %615 = vst [vmem:[#allocation1] ss:$4 sm:$0xff] %v444
        %616 = vst [vmem:[%s529] ss:$4 sm:$0xff] %v445
        %617 = vst [vmem:[%s531] ss:$4 sm:$0xff] %v446
        %618 = vst [vmem:[%s533] ss:$4 sm:$0xff] %v316
        %619 = vst [vmem:[%s535] ss:$4 sm:$0xff] %v447
        %620 = vst [vmem:[%s537] ss:$4 sm:$0xff] %v448
        %621 = vst [vmem:[%s539] ss:$4 sm:$0xff] %v449
        %622 = vst [vmem:[%s541] ss:$4 sm:$0xff] %v317
        %v623 = vld.sshfl [vmem:[#allocation1] sm:$0xff pattern:$0x73625140]
        %v624 = vld.sshfl [vmem:[#allocation1 + $0x20] sm:$0xff pattern:$0x73625140]
        %625 = vst [vmem:[#allocation1] ss:$4 sm:$0xff] %v318
        %626 = vst [vmem:[%s529] ss:$4 sm:$0xff] %v450
        %627 = vst [vmem:[%s531] ss:$4 sm:$0xff] %v451
        %628 = vst [vmem:[%s533] ss:$4 sm:$0xff] %v452
        %629 = vst [vmem:[%s535] ss:$4 sm:$0xff] %v319
        %630 = vst [vmem:[%s537] ss:$4 sm:$0xff] %v453
        %631 = vst [vmem:[%s539] ss:$4 sm:$0xff] %v454
        %632 = vst [vmem:[%s541] ss:$4 sm:$0xff] %v455
        %v633 = vld.sshfl [vmem:[#allocation1] sm:$0xff pattern:$0x73625140]
        %v634 = vld.sshfl [vmem:[#allocation1 + $0x20] sm:$0xff pattern:$0x73625140]
        %635 = vst [vmem:[#allocation1] ss:$4 sm:$0xff] %v320
        %636 = vst [vmem:[%s529] ss:$4 sm:$0xff] %v321
        %637 = vst [vmem:[%s531] ss:$4 sm:$0xff] %v456
        %638 = vst [vmem:[%s533] ss:$4 sm:$0xff] %v457
        %639 = vst [vmem:[%s535] ss:$4 sm:$0xff] %v458
        %640 = vst [vmem:[%s537] ss:$4 sm:$0xff] %v322
        %641 = vst [vmem:[%s539] ss:$4 sm:$0xff] %v459
        %642 = vst [vmem:[%s541] ss:$4 sm:$0xff] %v460
        %v643 = vld.sshfl [vmem:[#allocation1] sm:$0xff pattern:$0x73625140]
        %v644 = vld.sshfl [vmem:[#allocation1 + $0x20] sm:$0xff pattern:$0x73625140]
        %645 = vst [vmem:[#allocation1] ss:$4 sm:$0xff] %v461
        %646 = vst [vmem:[%s529] ss:$4 sm:$0xff] %v323
        %647 = vst [vmem:[%s531] ss:$4 sm:$0xff] %v324
        %648 = vst [vmem:[%s533] ss:$4 sm:$0xff] %v462
        %649 = vst [vmem:[%s535] ss:$4 sm:$0xff] %v463
        %650 = vst [vmem:[%s537] ss:$4 sm:$0xff] %v464
        %651 = vst [vmem:[%s539] ss:$4 sm:$0xff] %v325
        %652 = vst [vmem:[%s541] ss:$4 sm:$0xff] %v465
        %v653 = vld.sshfl [vmem:[#allocation1] sm:$0xff pattern:$0x73625140]
        %v654 = vld.sshfl [vmem:[#allocation1 + $0x20] sm:$0xff pattern:$0x73625140]
        %655 = vst [vmem:[#allocation1] ss:$4 sm:$0xff] %v466
        %656 = vst [vmem:[%s529] ss:$4 sm:$0xff] %v467
        %657 = vst [vmem:[%s531] ss:$4 sm:$0xff] %v326
        %658 = vst [vmem:[%s533] ss:$4 sm:$0xff] %v327
        %659 = vst [vmem:[%s535] ss:$4 sm:$0xff] %v468
        %660 = vst [vmem:[%s537] ss:$4 sm:$0xff] %v469
        %661 = vst [vmem:[%s539] ss:$4 sm:$0xff] %v470
        %662 = vst [vmem:[%s541] ss:$4 sm:$0xff] %v328
        %v663 = vld.sshfl [vmem:[#allocation1] sm:$0xff pattern:$0x73625140]
        %v664 = vld.sshfl [vmem:[#allocation1 + $0x20] sm:$0xff pattern:$0x73625140]
        %665 = vst [vmem:[#allocation1] ss:$4 sm:$0xff] %v471
        %666 = vst [vmem:[%s529] ss:$4 sm:$0xff] %v472
        %667 = vst [vmem:[%s531] ss:$4 sm:$0xff] %v473
        %668 = vst [vmem:[%s533] ss:$4 sm:$0xff] %v329
        %669 = vst [vmem:[%s535] ss:$4 sm:$0xff] %v330
        %670 = vst [vmem:[%s537] ss:$4 sm:$0xff] %v474
        %671 = vst [vmem:[%s539] ss:$4 sm:$0xff] %v475
        %672 = vst [vmem:[%s541] ss:$4 sm:$0xff] %v476
        %v673 = vld.sshfl [vmem:[#allocation1] sm:$0xff pattern:$0x73625140]
        %v674 = vld.sshfl [vmem:[#allocation1 + $0x20] sm:$0xff pattern:$0x73625140]
        %675 = vst [vmem:[#allocation1] ss:$4 sm:$0xff] %v331
        %676 = vst [vmem:[%s529] ss:$4 sm:$0xff] %v477
        %677 = vst [vmem:[%s531] ss:$4 sm:$0xff] %v478
        %678 = vst [vmem:[%s533] ss:$4 sm:$0xff] %v479
        %679 = vst [vmem:[%s535] ss:$4 sm:$0xff] %v332
        %680 = vst [vmem:[%s537] ss:$4 sm:$0xff] %v333
        %681 = vst [vmem:[%s539] ss:$4 sm:$0xff] %v480
        %682 = vst [vmem:[%s541] ss:$4 sm:$0xff] %v481
        %v683 = vld.sshfl [vmem:[#allocation1] sm:$0xff pattern:$0x73625140]
        %v684 = vld.sshfl [vmem:[#allocation1 + $0x20] sm:$0xff pattern:$0x73625140]
        %685 = vst [vmem:[#allocation1] ss:$4 sm:$0xff] %v482
        %686 = vst [vmem:[%s529] ss:$4 sm:$0xff] %v334
        %687 = vst [vmem:[%s531] ss:$4 sm:$0xff] %v483
        %688 = vst [vmem:[%s533] ss:$4 sm:$0xff] %v484
        %689 = vst [vmem:[%s535] ss:$4 sm:$0xff] %v485
        %690 = vst [vmem:[%s537] ss:$4 sm:$0xff] %v335
        %691 = vst [vmem:[%s539] ss:$4 sm:$0xff] %v336
        %692 = vst [vmem:[%s541] ss:$4 sm:$0xff] %v486
        %v693 = vld.sshfl [vmem:[#allocation1] sm:$0xff pattern:$0x73625140]
        %v694 = vld.sshfl [vmem:[#allocation1 + $0x20] sm:$0xff pattern:$0x73625140]
        %695 = vst [vmem:[#allocation1] ss:$4 sm:$0xff] %v487
        %696 = vst [vmem:[%s529] ss:$4 sm:$0xff] %v488
        %697 = vst [vmem:[%s531] ss:$4 sm:$0xff] %v337
        %698 = vst [vmem:[%s533] ss:$4 sm:$0xff] %v489
        %699 = vst [vmem:[%s535] ss:$4 sm:$0xff] %v490
        %700 = vst [vmem:[%s537] ss:$4 sm:$0xff] %v491
        %701 = vst [vmem:[%s539] ss:$4 sm:$0xff] %v338
        %702 = vst [vmem:[%s541] ss:$4 sm:$0xff] %v339
        %v703 = vld.sshfl [vmem:[#allocation1] sm:$0xff pattern:$0x73625140]
        %v704 = vld.sshfl [vmem:[#allocation1 + $0x20] sm:$0xff pattern:$0x73625140]
        %705 = vst [vmem:[#allocation1] ss:$4 sm:$0xff] %v492
        %706 = vst [vmem:[%s529] ss:$4 sm:$0xff] %v493
        %707 = vst [vmem:[%s531] ss:$4 sm:$0xff] %v494
        %708 = vst [vmem:[%s533] ss:$4 sm:$0xff] %v340
        %709 = vst [vmem:[%s535] ss:$4 sm:$0xff] %v495
        %710 = vst [vmem:[%s537] ss:$4 sm:$0xff] %v496
        %711 = vst [vmem:[%s539] ss:$4 sm:$0xff] %v497
        %712 = vst [vmem:[%s541] ss:$4 sm:$0xff] %v341
        %v713 = vld.sshfl [vmem:[#allocation1] sm:$0xff pattern:$0x73625140]
        %v714 = vld.sshfl [vmem:[#allocation1 + $0x20] sm:$0xff pattern:$0x73625140]
        %715 = vst [vmem:[#allocation1] ss:$4 sm:$0xff] %v342
        %716 = vst [vmem:[%s529] ss:$4 sm:$0xff] %v498
        %717 = vst [vmem:[%s531] ss:$4 sm:$0xff] %v499
        %718 = vst [vmem:[%s533] ss:$4 sm:$0xff] %v500
        %719 = vst [vmem:[%s535] ss:$4 sm:$0xff] %v343
        %720 = vst [vmem:[%s537] ss:$4 sm:$0xff] %v501
        %721 = vst [vmem:[%s539] ss:$4 sm:$0xff] %v502
        %722 = vst [vmem:[%s541] ss:$4 sm:$0xff] %v503
        %v723 = vld.sshfl [vmem:[#allocation1] sm:$0xff pattern:$0x73625140]
        %v724 = vld.sshfl [vmem:[#allocation1 + $0x20] sm:$0xff pattern:$0x73625140]
        %725 = vst [vmem:[#allocation1] ss:$4 sm:$0xff] %v344
        %726 = vst [vmem:[%s529] ss:$4 sm:$0xff] %v345
        %727 = vst [vmem:[%s531] ss:$4 sm:$0xff] %v504
        %728 = vst [vmem:[%s533] ss:$4 sm:$0xff] %v505
        %729 = vst [vmem:[%s535] ss:$4 sm:$0xff] %v506
        %730 = vst [vmem:[%s537] ss:$4 sm:$0xff] %v346
        %731 = vst [vmem:[%s539] ss:$4 sm:$0xff] %v507
        %732 = vst [vmem:[%s541] ss:$4 sm:$0xff] %v508
        %v733 = vld.sshfl [vmem:[#allocation1] sm:$0xff pattern:$0x73625140]
        %v734 = vld.sshfl [vmem:[#allocation1 + $0x20] sm:$0xff pattern:$0x73625140]
        %735 = vst [vmem:[#allocation1] ss:$4 sm:$0xff] %v509
        %736 = vst [vmem:[%s529] ss:$4 sm:$0xff] %v347
        %v737 = vld.sshfl [vmem:[#allocation1] sm:$0xff pattern:$0x73625140]
        %779 = vmatpush.msra.mxu0 %v525
        %780 = vmatpush.msra.mxu0 %v524
        %781 = vmatpush.msra.mxu0 %v523
        %782 = vmatpush.msra.mxu0 %v522
        %783 = vmatpush.msra.mxu0 %v521
        %784 = vmatpush.msra.mxu0 %v520
        %785 = vmatpush.msra.mxu0 %v519
        %786 = vmatpush.msra.mxu0 %v518
        %787 = vmatpush.msra.mxu0 %v517
        %788 = vmatpush.msra.mxu0 %v516
        %789 = vmatpush.msra.mxu0 %v515
        %790 = vmatpush.msra.mxu0 %v514
        %791 = vmatpush.msra.mxu0 %v513
        %792 = vmatpush.msra.mxu0 %v512
        %793 = vmatpush.msra.mxu0 %v511
        %794 = vmatpush.msra.mxu0 %v510
        %795 = vmatmul.f32.gmra.mxu0 %v543
        %v796 = vpop.f32.mrf.mxu0
        %v797 = vadd.f32 %v527, %v796
        %798 = vmatmul.f32.gmra.mxu0 %v544
        %v799 = vpop.f32.mrf.mxu0
        %v800 = vadd.f32 %v527, %v799
        %801 = vmatmul.f32.gmra.mxu0 %v553
        %v802 = vpop.f32.mrf.mxu0
        %v803 = vadd.f32 %v527, %v802
        %804 = vmatmul.f32.gmra.mxu0 %v554
        %v805 = vpop.f32.mrf.mxu0
        %v806 = vadd.f32 %v527, %v805
        %807 = vmatmul.f32.gmra.mxu0 %v563
        %v808 = vpop.f32.mrf.mxu0
        %v809 = vadd.f32 %v527, %v808
        %810 = vmatmul.f32.gmra.mxu0 %v564
        %v811 = vpop.f32.mrf.mxu0
        %v812 = vadd.f32 %v527, %v811
        %813 = vmatmul.f32.gmra.mxu0 %v573
        %v814 = vpop.f32.mrf.mxu0
        %v815 = vadd.f32 %v527, %v814
        %816 = vmatmul.f32.gmra.mxu0 %v574
        %v817 = vpop.f32.mrf.mxu0
        %v818 = vadd.f32 %v527, %v817
        %819 = vmatmul.f32.gmra.mxu0 %v583
        %v820 = vpop.f32.mrf.mxu0
        %v821 = vadd.f32 %v527, %v820
        %822 = vmatmul.f32.gmra.mxu0 %v584
        %v823 = vpop.f32.mrf.mxu0
        %v824 = vadd.f32 %v527, %v823
        %825 = vmatmul.f32.gmra.mxu0 %v593
        %v826 = vpop.f32.mrf.mxu0
        %v827 = vadd.f32 %v527, %v826
        %828 = vmatmul.f32.gmra.mxu0 %v594
        %v829 = vpop.f32.mrf.mxu0
        %v830 = vadd.f32 %v527, %v829
        %831 = vmatmul.f32.gmra.mxu0 %v603
        %v832 = vpop.f32.mrf.mxu0
        %v833 = vadd.f32 %v527, %v832
        %834 = vmatmul.f32.gmra.mxu0 %v604
        %v835 = vpop.f32.mrf.mxu0
        %v836 = vadd.f32 %v527, %v835
        %837 = vmatmul.f32.gmra.mxu0 %v613
        %v838 = vpop.f32.mrf.mxu0
        %v839 = vadd.f32 %v527, %v838
        %840 = vmatmul.f32.gmra.mxu0 %v614
        %v841 = vpop.f32.mrf.mxu0
        %v842 = vadd.f32 %v527, %v841
        %843 = vmatmul.f32.gmra.mxu0 %v623
        %v844 = vpop.f32.mrf.mxu0
        %v845 = vadd.f32 %v527, %v844
        %846 = vmatmul.f32.gmra.mxu0 %v624
        %v847 = vpop.f32.mrf.mxu0
        %v848 = vadd.f32 %v527, %v847
        %849 = vmatmul.f32.gmra.mxu0 %v633
        %v850 = vpop.f32.mrf.mxu0
        %v851 = vadd.f32 %v527, %v850
        %852 = vmatmul.f32.gmra.mxu0 %v634
        %v853 = vpop.f32.mrf.mxu0
        %v854 = vadd.f32 %v527, %v853
        %855 = vmatmul.f32.gmra.mxu0 %v643
        %v856 = vpop.f32.mrf.mxu0
        %v857 = vadd.f32 %v527, %v856
        %858 = vmatmul.f32.gmra.mxu0 %v644
        %v859 = vpop.f32.mrf.mxu0
        %v860 = vadd.f32 %v527, %v859
        %861 = vmatmul.f32.gmra.mxu0 %v653
        %v862 = vpop.f32.mrf.mxu0
        %v863 = vadd.f32 %v527, %v862
        %864 = vmatmul.f32.gmra.mxu0 %v654
        %v865 = vpop.f32.mrf.mxu0
        %v866 = vadd.f32 %v527, %v865
        %867 = vmatmul.f32.gmra.mxu0 %v663
        %v868 = vpop.f32.mrf.mxu0
        %v869 = vadd.f32 %v527, %v868
        %870 = vmatmul.f32.gmra.mxu0 %v664
        %v871 = vpop.f32.mrf.mxu0
        %v872 = vadd.f32 %v527, %v871
        %873 = vmatmul.f32.gmra.mxu0 %v673
        %v874 = vpop.f32.mrf.mxu0
        %v875 = vadd.f32 %v527, %v874
        %876 = vmatmul.f32.gmra.mxu0 %v674
        %v877 = vpop.f32.mrf.mxu0
        %v878 = vadd.f32 %v527, %v877
        %879 = vmatmul.f32.gmra.mxu0 %v683
        %v880 = vpop.f32.mrf.mxu0
        %v881 = vadd.f32 %v527, %v880
        %882 = vmatmul.f32.gmra.mxu0 %v684
        %v883 = vpop.f32.mrf.mxu0
        %v884 = vadd.f32 %v527, %v883
        %885 = vmatmul.f32.gmra.mxu0 %v693
        %v886 = vpop.f32.mrf.mxu0
        %v887 = vadd.f32 %v527, %v886
        %888 = vmatmul.f32.gmra.mxu0 %v694
        %v889 = vpop.f32.mrf.mxu0
        %v890 = vadd.f32 %v527, %v889
        %891 = vmatmul.f32.gmra.mxu0 %v703
        %v892 = vpop.f32.mrf.mxu0
        %v893 = vadd.f32 %v527, %v892
        %894 = vmatmul.f32.gmra.mxu0 %v704
        %v895 = vpop.f32.mrf.mxu0
        %v896 = vadd.f32 %v527, %v895
        %897 = vmatmul.f32.gmra.mxu0 %v713
        %v898 = vpop.f32.mrf.mxu0
        %v899 = vadd.f32 %v527, %v898
        %900 = vmatmul.f32.gmra.mxu0 %v714
        %v901 = vpop.f32.mrf.mxu0
        %v902 = vadd.f32 %v527, %v901
        %903 = vmatmul.f32.gmra.mxu0 %v723
        %v904 = vpop.f32.mrf.mxu0
        %v905 = vadd.f32 %v527, %v904
        %906 = vmatmul.f32.gmra.mxu0 %v724
        %v907 = vpop.f32.mrf.mxu0
        %v908 = vadd.f32 %v527, %v907
        %909 = vmatmul.f32.gmra.mxu0 %v733
        %v910 = vpop.f32.mrf.mxu0
        %v911 = vadd.f32 %v527, %v910
        %912 = vmatmul.f32.gmra.mxu0 %v734
        %v913 = vpop.f32.mrf.mxu0
        %v914 = vadd.f32 %v527, %v913
        %915 = vmatmul.f32.gmra.mxu0 %v737
        %v916 = vpop.f32.mrf.mxu0
        %v917 = vadd.f32 %v527, %v916
        %918 = vdwg.mxu0
        %vm919 = vcmp.gt.f32.partialorder %v797, 0.0
        %vm920 = vcmp.gt.f32.partialorder %v800, 0.0
        %vm921 = vcmp.gt.f32.partialorder %v803, 0.0
        %vm922 = vcmp.gt.f32.partialorder %v806, 0.0
        %vm923 = vcmp.gt.f32.partialorder %v809, 0.0
        %vm924 = vcmp.gt.f32.partialorder %v812, 0.0
        %vm925 = vcmp.gt.f32.partialorder %v815, 0.0
        %vm926 = vcmp.gt.f32.partialorder %v818, 0.0
        %vm927 = vcmp.gt.f32.partialorder %v821, 0.0
        %vm928 = vcmp.gt.f32.partialorder %v824, 0.0
        %vm929 = vcmp.gt.f32.partialorder %v827, 0.0
        %vm930 = vcmp.gt.f32.partialorder %v830, 0.0
        %vm931 = vcmp.gt.f32.partialorder %v833, 0.0
        %vm932 = vcmp.gt.f32.partialorder %v836, 0.0
        %vm933 = vcmp.gt.f32.partialorder %v839, 0.0
        %vm934 = vcmp.gt.f32.partialorder %v842, 0.0
        %vm935 = vcmp.gt.f32.partialorder %v845, 0.0
        %vm936 = vcmp.gt.f32.partialorder %v848, 0.0
        %vm937 = vcmp.gt.f32.partialorder %v851, 0.0
        %vm938 = vcmp.gt.f32.partialorder %v854, 0.0
        %vm939 = vcmp.gt.f32.partialorder %v857, 0.0
        %vm940 = vcmp.gt.f32.partialorder %v860, 0.0
        %vm941 = vcmp.gt.f32.partialorder %v863, 0.0
        %vm942 = vcmp.gt.f32.partialorder %v866, 0.0
        %vm943 = vcmp.gt.f32.partialorder %v869, 0.0
        %vm944 = vcmp.gt.f32.partialorder %v872, 0.0
        %vm945 = vcmp.gt.f32.partialorder %v875, 0.0
        %vm946 = vcmp.gt.f32.partialorder %v878, 0.0
        %vm947 = vcmp.gt.f32.partialorder %v881, 0.0
        %vm948 = vcmp.gt.f32.partialorder %v884, 0.0
        %vm949 = vcmp.gt.f32.partialorder %v887, 0.0
        %vm950 = vcmp.gt.f32.partialorder %v890, 0.0
        %vm951 = vcmp.gt.f32.partialorder %v893, 0.0
        %vm952 = vcmp.gt.f32.partialorder %v896, 0.0
        %vm953 = vcmp.gt.f32.partialorder %v899, 0.0
        %vm954 = vcmp.gt.f32.partialorder %v902, 0.0
        %vm955 = vcmp.gt.f32.partialorder %v905, 0.0
        %vm956 = vcmp.gt.f32.partialorder %v908, 0.0
        %vm957 = vcmp.gt.f32.partialorder %v911, 0.0
        %vm958 = vcmp.gt.f32.partialorder %v914, 0.0
        %vm959 = vcmp.gt.f32.partialorder %v917, 0.0
        %v960 = vld [vmem:[%s2 + $0x1] sm:$0x1]
        %v961 = vperm.slane %v960, 0
        %v962 = vmul.f32 %v797, %v961
        %v963 = vmul.f32 %v800, %v961
        %v964 = vmul.f32 %v803, %v961
        %v965 = vmul.f32 %v806, %v961
        %v966 = vmul.f32 %v809, %v961
        %v967 = vmul.f32 %v812, %v961
        %v968 = vmul.f32 %v815, %v961
        %v969 = vmul.f32 %v818, %v961
        %v970 = vmul.f32 %v821, %v961
        %v971 = vmul.f32 %v824, %v961
        %v972 = vmul.f32 %v827, %v961
        %v973 = vmul.f32 %v830, %v961
        %v974 = vmul.f32 %v833, %v961
        %v975 = vmul.f32 %v836, %v961
        %v976 = vmul.f32 %v839, %v961
        %v977 = vmul.f32 %v842, %v961
        %v978 = vmul.f32 %v845, %v961
        %v979 = vmul.f32 %v848, %v961
        %v980 = vmul.f32 %v851, %v961
        %v981 = vmul.f32 %v854, %v961
        %v982 = vmul.f32 %v857, %v961
        %v983 = vmul.f32 %v860, %v961
        %v984 = vmul.f32 %v863, %v961
        %v985 = vmul.f32 %v866, %v961
        %v986 = vmul.f32 %v869, %v961
        %v987 = vmul.f32 %v872, %v961
        %v988 = vmul.f32 %v875, %v961
        %v989 = vmul.f32 %v878, %v961
        %v990 = vmul.f32 %v881, %v961
        %v991 = vmul.f32 %v884, %v961
        %v992 = vmul.f32 %v887, %v961
        %v993 = vmul.f32 %v890, %v961
        %v994 = vmul.f32 %v893, %v961
        %v995 = vmul.f32 %v896, %v961
        %v996 = vmul.f32 %v899, %v961
        %v997 = vmul.f32 %v902, %v961
        %v998 = vmul.f32 %v905, %v961
        %v999 = vmul.f32 %v908, %v961
        %v1000 = vmul.f32 %v911, %v961
        %v1001 = vmul.f32 %v914, %v961
        %v1002 = vmul.f32 %v917, %v961
        %v1003 = vsel %vm919, %v797, %v962
        %v1004 = vsel %vm920, %v800, %v963
        %v1005 = vsel %vm921, %v803, %v964
        %v1006 = vsel %vm922, %v806, %v965
        %v1007 = vsel %vm923, %v809, %v966
        %v1008 = vsel %vm924, %v812, %v967
        %v1009 = vsel %vm925, %v815, %v968
        %v1010 = vsel %vm926, %v818, %v969
        %v1011 = vsel %vm927, %v821, %v970
        %v1012 = vsel %vm928, %v824, %v971
        %v1013 = vsel %vm929, %v827, %v972
        %v1014 = vsel %vm930, %v830, %v973
        %v1015 = vsel %vm931, %v833, %v974
        %v1016 = vsel %vm932, %v836, %v975
        %v1017 = vsel %vm933, %v839, %v976
        %v1018 = vsel %vm934, %v842, %v977
        %v1019 = vsel %vm935, %v845, %v978
        %v1020 = vsel %vm936, %v848, %v979
        %v1021 = vsel %vm937, %v851, %v980
        %v1022 = vsel %vm938, %v854, %v981
        %v1023 = vsel %vm939, %v857, %v982
        %v1024 = vsel %vm940, %v860, %v983
        %v1025 = vsel %vm941, %v863, %v984
        %v1026 = vsel %vm942, %v866, %v985
        %v1027 = vsel %vm943, %v869, %v986
        %v1028 = vsel %vm944, %v872, %v987
        %v1029 = vsel %vm945, %v875, %v988
        %v1030 = vsel %vm946, %v878, %v989
        %v1031 = vsel %vm947, %v881, %v990
        %v1032 = vsel %vm948, %v884, %v991
        %v1033 = vsel %vm949, %v887, %v992
        %v1034 = vsel %vm950, %v890, %v993
        %v1035 = vsel %vm951, %v893, %v994
        %v1036 = vsel %vm952, %v896, %v995
        %v1037 = vsel %vm953, %v899, %v996
        %v1038 = vsel %vm954, %v902, %v997
        %v1039 = vsel %vm955, %v905, %v998
        %v1040 = vsel %vm956, %v908, %v999
        %v1041 = vsel %vm957, %v911, %v1000
        %v1042 = vsel %vm958, %v914, %v1001
        %v1043 = vsel %vm959, %v917, %v1002
        %v1085 = vrot.slane %v1003, 2
        %v1086 = vrot.slane %v1003, 4
        %v1087 = vrot.slane %v1003, 6
        %v1088 = vrot.slane %v1004, 2
        %v1089 = vrot.slane %v1004, 4
        %v1090 = vrot.slane %v1004, 6
        %v1091 = vrot.slane %v1005, 2
        %v1092 = vrot.slane %v1005, 4
        %v1093 = vrot.slane %v1005, 6
        %v1094 = vrot.slane %v1006, 2
        %v1095 = vrot.slane %v1006, 4
        %v1096 = vrot.slane %v1006, 6
        %v1097 = vrot.slane %v1007, 2
        %v1098 = vrot.slane %v1007, 4
        %v1099 = vrot.slane %v1007, 6
        %v1100 = vrot.slane %v1008, 2
        %v1101 = vrot.slane %v1008, 4
        %v1102 = vrot.slane %v1008, 6
        %v1103 = vrot.slane %v1009, 2
        %v1104 = vrot.slane %v1009, 4
        %v1105 = vrot.slane %v1009, 6
        %v1106 = vrot.slane %v1010, 2
        %v1107 = vrot.slane %v1010, 4
        %v1108 = vrot.slane %v1010, 6
        %v1109 = vrot.slane %v1011, 2
        %v1110 = vrot.slane %v1011, 4
        %v1111 = vrot.slane %v1011, 6
        %v1112 = vrot.slane %v1012, 2
        %v1113 = vrot.slane %v1012, 4
        %v1114 = vrot.slane %v1012, 6
        %v1115 = vrot.slane %v1013, 2
        %v1116 = vrot.slane %v1013, 4
        %v1117 = vrot.slane %v1013, 6
        %v1118 = vrot.slane %v1014, 2
        %v1119 = vrot.slane %v1014, 4
        %v1120 = vrot.slane %v1014, 6
        %v1121 = vrot.slane %v1015, 2
        %v1122 = vrot.slane %v1015, 4
        %v1123 = vrot.slane %v1015, 6
        %v1124 = vrot.slane %v1016, 2
        %v1125 = vrot.slane %v1016, 4
        %v1126 = vrot.slane %v1016, 6
        %v1127 = vrot.slane %v1017, 2
        %v1128 = vrot.slane %v1017, 4
        %v1129 = vrot.slane %v1017, 6
        %v1130 = vrot.slane %v1018, 2
        %v1131 = vrot.slane %v1018, 4
        %v1132 = vrot.slane %v1018, 6
        %v1133 = vrot.slane %v1019, 2
        %v1134 = vrot.slane %v1019, 4
        %v1135 = vrot.slane %v1019, 6
        %v1136 = vrot.slane %v1020, 2
        %v1137 = vrot.slane %v1020, 4
        %v1138 = vrot.slane %v1020, 6
        %v1139 = vrot.slane %v1021, 2
        %v1140 = vrot.slane %v1021, 4
        %v1141 = vrot.slane %v1021, 6
        %v1142 = vrot.slane %v1022, 2
        %v1143 = vrot.slane %v1022, 4
        %v1144 = vrot.slane %v1022, 6
        %v1145 = vrot.slane %v1023, 2
        %v1146 = vrot.slane %v1023, 4
        %v1147 = vrot.slane %v1023, 6
        %v1148 = vrot.slane %v1024, 2
        %v1149 = vrot.slane %v1024, 4
        %v1150 = vrot.slane %v1024, 6
        %v1151 = vrot.slane %v1025, 2
        %v1152 = vrot.slane %v1025, 4
        %v1153 = vrot.slane %v1025, 6
        %v1154 = vrot.slane %v1026, 2
        %v1155 = vrot.slane %v1026, 4
        %v1156 = vrot.slane %v1026, 6
        %v1157 = vrot.slane %v1027, 2
        %v1158 = vrot.slane %v1027, 4
        %v1159 = vrot.slane %v1027, 6
        %v1160 = vrot.slane %v1028, 2
        %v1161 = vrot.slane %v1028, 4
        %v1162 = vrot.slane %v1028, 6
        %v1163 = vrot.slane %v1029, 2
        %v1164 = vrot.slane %v1029, 4
        %v1165 = vrot.slane %v1029, 6
        %v1166 = vrot.slane %v1030, 2
        %v1167 = vrot.slane %v1030, 4
        %v1168 = vrot.slane %v1030, 6
        %v1169 = vrot.slane %v1031, 2
        %v1170 = vrot.slane %v1031, 4
        %v1171 = vrot.slane %v1031, 6
        %v1172 = vrot.slane %v1032, 2
        %v1173 = vrot.slane %v1032, 4
        %v1174 = vrot.slane %v1032, 6
        %v1175 = vrot.slane %v1033, 2
        %v1176 = vrot.slane %v1033, 4
        %v1177 = vrot.slane %v1033, 6
        %v1178 = vrot.slane %v1034, 2
        %v1179 = vrot.slane %v1034, 4
        %v1180 = vrot.slane %v1034, 6
        %v1181 = vrot.slane %v1035, 2
        %v1182 = vrot.slane %v1035, 4
        %v1183 = vrot.slane %v1035, 6
        %v1184 = vrot.slane %v1036, 2
        %v1185 = vrot.slane %v1036, 4
        %v1186 = vrot.slane %v1036, 6
        %v1187 = vrot.slane %v1037, 2
        %v1188 = vrot.slane %v1037, 4
        %v1189 = vrot.slane %v1037, 6
        %v1190 = vrot.slane %v1038, 2
        %v1191 = vrot.slane %v1038, 4
        %v1192 = vrot.slane %v1038, 6
        %v1193 = vrot.slane %v1039, 2
        %v1194 = vrot.slane %v1039, 4
        %v1195 = vrot.slane %v1039, 6
        %v1196 = vrot.slane %v1040, 2
        %v1197 = vrot.slane %v1040, 4
        %v1198 = vrot.slane %v1040, 6
        %v1199 = vrot.slane %v1041, 2
        %v1200 = vrot.slane %v1041, 4
        %v1201 = vrot.slane %v1041, 6
        %v1202 = vrot.slane %v1042, 2
        %v1203 = vrot.slane %v1042, 4
        %v1204 = vrot.slane %v1042, 6
        %v1205 = vrot.slane %v1043, 2
        %1206 = vst [vmem:[#allocation1] ss:$4 sm:$0xff] %v1003
        %s1207 = scalar_lea.vmem [#allocation1], 1
        %1208 = vst [vmem:[%s1207] ss:$4 sm:$0xff] %v1085
        %s1209 = scalar_lea.vmem [#allocation1], 2
        %1210 = vst [vmem:[%s1209] ss:$4 sm:$0xff] %v1086
        %s1211 = scalar_lea.vmem [#allocation1], 3
        %1212 = vst [vmem:[%s1211] ss:$4 sm:$0xff] %v1087
        %s1213 = scalar_lea.vmem [#allocation1], 32
        %1214 = vst [vmem:[%s1213] ss:$4 sm:$0xff] %v1004
        %s1215 = scalar_lea.vmem [#allocation1], 33
        %1216 = vst [vmem:[%s1215] ss:$4 sm:$0xff] %v1088
        %s1217 = scalar_lea.vmem [#allocation1], 34
        %1218 = vst [vmem:[%s1217] ss:$4 sm:$0xff] %v1089
        %s1219 = scalar_lea.vmem [#allocation1], 35
        %1220 = vst [vmem:[%s1219] ss:$4 sm:$0xff] %v1090
        %v1221 = vld.sshfl [vmem:[#allocation1] sm:$0xff pattern:$0x73625140]
        %v1222 = vld.sshfl [vmem:[#allocation1 + $0x20] sm:$0xff pattern:$0x73625140]
        %1223 = vst [vmem:[#allocation1] ss:$4 sm:$0xff] %v1005
        %v1224 = vld.sshfl [vmem:[#allocation1] sm:$0xff pattern:$0x73625140]
        %1225 = vst [vmem:[%s1213] ss:$4 sm:$0xff] %v1091
        %1226 = vst [vmem:[%s1215] ss:$4 sm:$0xff] %v1092
        %1227 = vst [vmem:[%s1217] ss:$4 sm:$0xff] %v1093
        %1228 = vst [vmem:[%s1219] ss:$4 sm:$0xff] %v1006
        %v1229 = vld.sshfl [vmem:[#allocation1 + $0x20] sm:$0xff pattern:$0x73625140]
        %1230 = vst [vmem:[#allocation1] ss:$4 sm:$0xff] %v1094
        %1231 = vst [vmem:[%s1207] ss:$4 sm:$0xff] %v1095
        %1232 = vst [vmem:[%s1209] ss:$4 sm:$0xff] %v1096
        %1233 = vst [vmem:[%s1211] ss:$4 sm:$0xff] %v1007
        %1234 = vst [vmem:[%s1213] ss:$4 sm:$0xff] %v1097
        %v1235 = vld.sshfl [vmem:[#allocation1] sm:$0xff pattern:$0x73625140]
        %v1236 = vld.sshfl [vmem:[#allocation1 + $0x20] sm:$0xff pattern:$0x73625140]
        %1237 = vst [vmem:[#allocation1] ss:$4 sm:$0xff] %v1098
        %1238 = vst [vmem:[%s1207] ss:$4 sm:$0xff] %v1099
        %1239 = vst [vmem:[%s1209] ss:$4 sm:$0xff] %v1008
        %1240 = vst [vmem:[%s1211] ss:$4 sm:$0xff] %v1100
        %1241 = vst [vmem:[%s1213] ss:$4 sm:$0xff] %v1101
        %1242 = vst [vmem:[%s1215] ss:$4 sm:$0xff] %v1102
        %1243 = vst [vmem:[%s1217] ss:$4 sm:$0xff] %v1009
        %1244 = vst [vmem:[%s1219] ss:$4 sm:$0xff] %v1103
        %v1245 = vld.sshfl [vmem:[#allocation1] sm:$0xff pattern:$0x73625140]
        %v1246 = vld.sshfl [vmem:[#allocation1 + $0x20] sm:$0xff pattern:$0x73625140]
        %1247 = vst [vmem:[#allocation1] ss:$4 sm:$0xff] %v1104
        %v1248 = vld.sshfl [vmem:[#allocation1] sm:$0xff pattern:$0x73625140]
        %1249 = vst [vmem:[%s1213] ss:$4 sm:$0xff] %v1105
        %1250 = vst [vmem:[%s1215] ss:$4 sm:$0xff] %v1010
        %1251 = vst [vmem:[%s1217] ss:$4 sm:$0xff] %v1106
        %1252 = vst [vmem:[%s1219] ss:$4 sm:$0xff] %v1107
        %v1253 = vld.sshfl [vmem:[#allocation1 + $0x20] sm:$0xff pattern:$0x73625140]
        %1254 = vst [vmem:[#allocation1] ss:$4 sm:$0xff] %v1108
        %1255 = vst [vmem:[%s1207] ss:$4 sm:$0xff] %v1011
        %1256 = vst [vmem:[%s1209] ss:$4 sm:$0xff] %v1109
        %1257 = vst [vmem:[%s1211] ss:$4 sm:$0xff] %v1110
        %1258 = vst [vmem:[%s1213] ss:$4 sm:$0xff] %v1111
        %v1259 = vld.sshfl [vmem:[#allocation1] sm:$0xff pattern:$0x73625140]
        %v1260 = vld.sshfl [vmem:[#allocation1 + $0x20] sm:$0xff pattern:$0x73625140]
        %1261 = vst [vmem:[#allocation1] ss:$4 sm:$0xff] %v1012
        %1262 = vst [vmem:[%s1207] ss:$4 sm:$0xff] %v1112
        %1263 = vst [vmem:[%s1209] ss:$4 sm:$0xff] %v1113
        %1264 = vst [vmem:[%s1211] ss:$4 sm:$0xff] %v1114
        %1265 = vst [vmem:[%s1213] ss:$4 sm:$0xff] %v1013
        %1266 = vst [vmem:[%s1215] ss:$4 sm:$0xff] %v1115
        %1267 = vst [vmem:[%s1217] ss:$4 sm:$0xff] %v1116
        %1268 = vst [vmem:[%s1219] ss:$4 sm:$0xff] %v1117
        %v1269 = vld.sshfl [vmem:[#allocation1] sm:$0xff pattern:$0x73625140]
        %v1270 = vld.sshfl [vmem:[#allocation1 + $0x20] sm:$0xff pattern:$0x73625140]
        %1271 = vst [vmem:[#allocation1] ss:$4 sm:$0xff] %v1014
        %v1272 = vld.sshfl [vmem:[#allocation1] sm:$0xff pattern:$0x73625140]
        %1273 = vst [vmem:[%s1213] ss:$4 sm:$0xff] %v1118
        %1274 = vst [vmem:[%s1215] ss:$4 sm:$0xff] %v1119
        %1275 = vst [vmem:[%s1217] ss:$4 sm:$0xff] %v1120
        %1276 = vst [vmem:[%s1219] ss:$4 sm:$0xff] %v1015
        %v1277 = vld.sshfl [vmem:[#allocation1 + $0x20] sm:$0xff pattern:$0x73625140]
        %1278 = vst [vmem:[#allocation1] ss:$4 sm:$0xff] %v1121
        %1279 = vst [vmem:[%s1207] ss:$4 sm:$0xff] %v1122
        %1280 = vst [vmem:[%s1209] ss:$4 sm:$0xff] %v1123
        %1281 = vst [vmem:[%s1211] ss:$4 sm:$0xff] %v1016
        %1282 = vst [vmem:[%s1213] ss:$4 sm:$0xff] %v1124
        %v1283 = vld.sshfl [vmem:[#allocation1] sm:$0xff pattern:$0x73625140]
        %v1284 = vld.sshfl [vmem:[#allocation1 + $0x20] sm:$0xff pattern:$0x73625140]
        %1285 = vst [vmem:[#allocation1] ss:$4 sm:$0xff] %v1125
        %1286 = vst [vmem:[%s1207] ss:$4 sm:$0xff] %v1126
        %1287 = vst [vmem:[%s1209] ss:$4 sm:$0xff] %v1017
        %1288 = vst [vmem:[%s1211] ss:$4 sm:$0xff] %v1127
        %1289 = vst [vmem:[%s1213] ss:$4 sm:$0xff] %v1128
        %1290 = vst [vmem:[%s1215] ss:$4 sm:$0xff] %v1129
        %1291 = vst [vmem:[%s1217] ss:$4 sm:$0xff] %v1018
        %1292 = vst [vmem:[%s1219] ss:$4 sm:$0xff] %v1130
        %v1293 = vld.sshfl [vmem:[#allocation1] sm:$0xff pattern:$0x73625140]
        %v1294 = vld.sshfl [vmem:[#allocation1 + $0x20] sm:$0xff pattern:$0x73625140]
        %1295 = vst [vmem:[#allocation1] ss:$4 sm:$0xff] %v1131
        %v1296 = vld.sshfl [vmem:[#allocation1] sm:$0xff pattern:$0x73625140]
        %1297 = vst [vmem:[%s1213] ss:$4 sm:$0xff] %v1132
        %1298 = vst [vmem:[%s1215] ss:$4 sm:$0xff] %v1019
        %1299 = vst [vmem:[%s1217] ss:$4 sm:$0xff] %v1133
        %1300 = vst [vmem:[%s1219] ss:$4 sm:$0xff] %v1134
        %v1301 = vld.sshfl [vmem:[#allocation1 + $0x20] sm:$0xff pattern:$0x73625140]
        %1302 = vst [vmem:[#allocation1] ss:$4 sm:$0xff] %v1135
        %1303 = vst [vmem:[%s1207] ss:$4 sm:$0xff] %v1020
        %1304 = vst [vmem:[%s1209] ss:$4 sm:$0xff] %v1136
        %1305 = vst [vmem:[%s1211] ss:$4 sm:$0xff] %v1137
        %1306 = vst [vmem:[%s1213] ss:$4 sm:$0xff] %v1138
        %v1307 = vld.sshfl [vmem:[#allocation1] sm:$0xff pattern:$0x73625140]
        %v1308 = vld.sshfl [vmem:[#allocation1 + $0x20] sm:$0xff pattern:$0x73625140]
        %1309 = vst [vmem:[#allocation1] ss:$4 sm:$0xff] %v1021
        %1310 = vst [vmem:[%s1207] ss:$4 sm:$0xff] %v1139
        %1311 = vst [vmem:[%s1209] ss:$4 sm:$0xff] %v1140
        %1312 = vst [vmem:[%s1211] ss:$4 sm:$0xff] %v1141
        %1313 = vst [vmem:[%s1213] ss:$4 sm:$0xff] %v1022
        %1314 = vst [vmem:[%s1215] ss:$4 sm:$0xff] %v1142
        %1315 = vst [vmem:[%s1217] ss:$4 sm:$0xff] %v1143
        %1316 = vst [vmem:[%s1219] ss:$4 sm:$0xff] %v1144
        %v1317 = vld.sshfl [vmem:[#allocation1] sm:$0xff pattern:$0x73625140]
        %v1318 = vld.sshfl [vmem:[#allocation1 + $0x20] sm:$0xff pattern:$0x73625140]
        %1319 = vst [vmem:[#allocation1] ss:$4 sm:$0xff] %v1023
        %v1320 = vld.sshfl [vmem:[#allocation1] sm:$0xff pattern:$0x73625140]
        %1321 = vst [vmem:[%s1213] ss:$4 sm:$0xff] %v1145
        %1322 = vst [vmem:[%s1215] ss:$4 sm:$0xff] %v1146
        %1323 = vst [vmem:[%s1217] ss:$4 sm:$0xff] %v1147
        %1324 = vst [vmem:[%s1219] ss:$4 sm:$0xff] %v1024
        %v1325 = vld.sshfl [vmem:[#allocation1 + $0x20] sm:$0xff pattern:$0x73625140]
        %1326 = vst [vmem:[#allocation1] ss:$4 sm:$0xff] %v1148
        %1327 = vst [vmem:[%s1207] ss:$4 sm:$0xff] %v1149
        %1328 = vst [vmem:[%s1209] ss:$4 sm:$0xff] %v1150
        %1329 = vst [vmem:[%s1211] ss:$4 sm:$0xff] %v1025
        %1330 = vst [vmem:[%s1213] ss:$4 sm:$0xff] %v1151
        %v1331 = vld.sshfl [vmem:[#allocation1] sm:$0xff pattern:$0x73625140]
        %v1332 = vld.sshfl [vmem:[#allocation1 + $0x20] sm:$0xff pattern:$0x73625140]
        %1333 = vst [vmem:[#allocation1] ss:$4 sm:$0xff] %v1152
        %1334 = vst [vmem:[%s1207] ss:$4 sm:$0xff] %v1153
        %1335 = vst [vmem:[%s1209] ss:$4 sm:$0xff] %v1026
        %1336 = vst [vmem:[%s1211] ss:$4 sm:$0xff] %v1154
        %1337 = vst [vmem:[%s1213] ss:$4 sm:$0xff] %v1155
        %1338 = vst [vmem:[%s1215] ss:$4 sm:$0xff] %v1156
        %1339 = vst [vmem:[%s1217] ss:$4 sm:$0xff] %v1027
        %1340 = vst [vmem:[%s1219] ss:$4 sm:$0xff] %v1157
        %v1341 = vld.sshfl [vmem:[#allocation1] sm:$0xff pattern:$0x73625140]
        %v1342 = vld.sshfl [vmem:[#allocation1 + $0x20] sm:$0xff pattern:$0x73625140]
        %1343 = vst [vmem:[#allocation1] ss:$4 sm:$0xff] %v1158
        %v1344 = vld.sshfl [vmem:[#allocation1] sm:$0xff pattern:$0x73625140]
        %1345 = vst [vmem:[%s1213] ss:$4 sm:$0xff] %v1159
        %1346 = vst [vmem:[%s1215] ss:$4 sm:$0xff] %v1028
        %1347 = vst [vmem:[%s1217] ss:$4 sm:$0xff] %v1160
        %1348 = vst [vmem:[%s1219] ss:$4 sm:$0xff] %v1161
        %v1349 = vld.sshfl [vmem:[#allocation1 + $0x20] sm:$0xff pattern:$0x73625140]
        %1350 = vst [vmem:[#allocation1] ss:$4 sm:$0xff] %v1162
        %1351 = vst [vmem:[%s1207] ss:$4 sm:$0xff] %v1029
        %1352 = vst [vmem:[%s1209] ss:$4 sm:$0xff] %v1163
        %1353 = vst [vmem:[%s1211] ss:$4 sm:$0xff] %v1164
        %1354 = vst [vmem:[%s1213] ss:$4 sm:$0xff] %v1165
        %v1355 = vld.sshfl [vmem:[#allocation1] sm:$0xff pattern:$0x73625140]
        %v1356 = vld.sshfl [vmem:[#allocation1 + $0x20] sm:$0xff pattern:$0x73625140]
        %1357 = vst [vmem:[#allocation1] ss:$4 sm:$0xff] %v1030
        %1358 = vst [vmem:[%s1207] ss:$4 sm:$0xff] %v1166
        %1359 = vst [vmem:[%s1209] ss:$4 sm:$0xff] %v1167
        %1360 = vst [vmem:[%s1211] ss:$4 sm:$0xff] %v1168
        %1361 = vst [vmem:[%s1213] ss:$4 sm:$0xff] %v1031
        %1362 = vst [vmem:[%s1215] ss:$4 sm:$0xff] %v1169
        %1363 = vst [vmem:[%s1217] ss:$4 sm:$0xff] %v1170
        %1364 = vst [vmem:[%s1219] ss:$4 sm:$0xff] %v1171
        %v1365 = vld.sshfl [vmem:[#allocation1] sm:$0xff pattern:$0x73625140]
        %v1366 = vld.sshfl [vmem:[#allocation1 + $0x20] sm:$0xff pattern:$0x73625140]
        %1367 = vst [vmem:[#allocation1] ss:$4 sm:$0xff] %v1032
        %v1368 = vld.sshfl [vmem:[#allocation1] sm:$0xff pattern:$0x73625140]
        %1369 = vst [vmem:[%s1213] ss:$4 sm:$0xff] %v1172
        %1370 = vst [vmem:[%s1215] ss:$4 sm:$0xff] %v1173
        %1371 = vst [vmem:[%s1217] ss:$4 sm:$0xff] %v1174
        %1372 = vst [vmem:[%s1219] ss:$4 sm:$0xff] %v1033
        %v1373 = vld.sshfl [vmem:[#allocation1 + $0x20] sm:$0xff pattern:$0x73625140]
        %1374 = vst [vmem:[#allocation1] ss:$4 sm:$0xff] %v1175
        %1375 = vst [vmem:[%s1207] ss:$4 sm:$0xff] %v1176
        %1376 = vst [vmem:[%s1209] ss:$4 sm:$0xff] %v1177
        %1377 = vst [vmem:[%s1211] ss:$4 sm:$0xff] %v1034
        %1378 = vst [vmem:[%s1213] ss:$4 sm:$0xff] %v1178
        %v1379 = vld.sshfl [vmem:[#allocation1] sm:$0xff pattern:$0x73625140]
        %v1380 = vld.sshfl [vmem:[#allocation1 + $0x20] sm:$0xff pattern:$0x73625140]
        %1381 = vst [vmem:[#allocation1] ss:$4 sm:$0xff] %v1179
        %1382 = vst [vmem:[%s1207] ss:$4 sm:$0xff] %v1180
        %1383 = vst [vmem:[%s1209] ss:$4 sm:$0xff] %v1035
        %1384 = vst [vmem:[%s1211] ss:$4 sm:$0xff] %v1181
        %1385 = vst [vmem:[%s1213] ss:$4 sm:$0xff] %v1182
        %1386 = vst [vmem:[%s1215] ss:$4 sm:$0xff] %v1183
        %1387 = vst [vmem:[%s1217] ss:$4 sm:$0xff] %v1036
        %1388 = vst [vmem:[%s1219] ss:$4 sm:$0xff] %v1184
        %v1389 = vld.sshfl [vmem:[#allocation1] sm:$0xff pattern:$0x73625140]
        %v1390 = vld.sshfl [vmem:[#allocation1 + $0x20] sm:$0xff pattern:$0x73625140]
        %1391 = vst [vmem:[#allocation1] ss:$4 sm:$0xff] %v1185
        %v1392 = vld.sshfl [vmem:[#allocation1] sm:$0xff pattern:$0x73625140]
        %1393 = vst [vmem:[%s1213] ss:$4 sm:$0xff] %v1186
        %1394 = vst [vmem:[%s1215] ss:$4 sm:$0xff] %v1037
        %1395 = vst [vmem:[%s1217] ss:$4 sm:$0xff] %v1187
        %1396 = vst [vmem:[%s1219] ss:$4 sm:$0xff] %v1188
        %v1397 = vld.sshfl [vmem:[#allocation1 + $0x20] sm:$0xff pattern:$0x73625140]
        %1398 = vst [vmem:[#allocation1] ss:$4 sm:$0xff] %v1189
        %1399 = vst [vmem:[%s1207] ss:$4 sm:$0xff] %v1038
        %1400 = vst [vmem:[%s1209] ss:$4 sm:$0xff] %v1190
        %1401 = vst [vmem:[%s1211] ss:$4 sm:$0xff] %v1191
        %1402 = vst [vmem:[%s1213] ss:$4 sm:$0xff] %v1192
        %v1403 = vld.sshfl [vmem:[#allocation1] sm:$0xff pattern:$0x73625140]
        %v1404 = vld.sshfl [vmem:[#allocation1 + $0x20] sm:$0xff pattern:$0x73625140]
        %1405 = vst [vmem:[#allocation1] ss:$4 sm:$0xff] %v1039
        %1406 = vst [vmem:[%s1207] ss:$4 sm:$0xff] %v1193
        %1407 = vst [vmem:[%s1209] ss:$4 sm:$0xff] %v1194
        %1408 = vst [vmem:[%s1211] ss:$4 sm:$0xff] %v1195
        %1409 = vst [vmem:[%s1213] ss:$4 sm:$0xff] %v1040
        %1410 = vst [vmem:[%s1215] ss:$4 sm:$0xff] %v1196
        %1411 = vst [vmem:[%s1217] ss:$4 sm:$0xff] %v1197
        %1412 = vst [vmem:[%s1219] ss:$4 sm:$0xff] %v1198
        %v1413 = vld.sshfl [vmem:[#allocation1] sm:$0xff pattern:$0x73625140]
        %v1414 = vld.sshfl [vmem:[#allocation1 + $0x20] sm:$0xff pattern:$0x73625140]
        %1415 = vst [vmem:[#allocation1] ss:$4 sm:$0xff] %v1041
        %v1416 = vld.sshfl [vmem:[#allocation1] sm:$0xff pattern:$0x73625140]
        %1417 = vst [vmem:[%s1213] ss:$4 sm:$0xff] %v1199
        %1418 = vst [vmem:[%s1215] ss:$4 sm:$0xff] %v1200
        %1419 = vst [vmem:[%s1217] ss:$4 sm:$0xff] %v1201
        %1420 = vst [vmem:[%s1219] ss:$4 sm:$0xff] %v1042
        %v1421 = vld.sshfl [vmem:[#allocation1 + $0x20] sm:$0xff pattern:$0x73625140]
        %1422 = vst [vmem:[#allocation1] ss:$4 sm:$0xff] %v1202
        %1423 = vst [vmem:[%s1207] ss:$4 sm:$0xff] %v1203
        %1424 = vst [vmem:[%s1209] ss:$4 sm:$0xff] %v1204
        %1425 = vst [vmem:[%s1211] ss:$4 sm:$0xff] %v1043
        %1426 = vst [vmem:[%s1213] ss:$4 sm:$0xff] %v1205
        %v1427 = vld.sshfl [vmem:[#allocation1] sm:$0xff pattern:$0x73625140]
        %v1428 = vld.sshfl [vmem:[#allocation1 + $0x20] sm:$0xff pattern:$0x73625140]
        %1483 = vst [vmem:[#allocation2] sm:$0xff] %v1221
        %1484 = vst [vmem:[#allocation2 + $0x8] sm:$0xff] %v1222
        %1485 = vst [vmem:[#allocation2 + $0x10] sm:$0x3] %v1224
        %1486 = vst [vmem:[#allocation2 + $0x18] sm:$0xff] %v1229
        %1487 = vst [vmem:[#allocation2 + $0x20] sm:$0xff] %v1235
        %1488 = vst [vmem:[#allocation2 + $0x28] sm:$0x3] %v1236
        %1489 = vst [vmem:[#allocation2 + $0x30] sm:$0xff] %v1245
        %1490 = vst [vmem:[#allocation2 + $0x38] sm:$0xff] %v1246
        %1491 = vst [vmem:[#allocation2 + $0x40] sm:$0x3] %v1248
        %1492 = vst [vmem:[#allocation2 + $0x48] sm:$0xff] %v1253
        %1493 = vst [vmem:[#allocation2 + $0x50] sm:$0xff] %v1259
        %1494 = vst [vmem:[#allocation2 + $0x58] sm:$0x3] %v1260
        %1495 = vst [vmem:[#allocation2 + $0x60] sm:$0xff] %v1269
        %1496 = vst [vmem:[#allocation2 + $0x68] sm:$0xff] %v1270
        %1497 = vst [vmem:[#allocation2 + $0x70] sm:$0x3] %v1272
        %1498 = vst [vmem:[#allocation2 + $0x78] sm:$0xff] %v1277
        %1499 = vst [vmem:[#allocation2 + $0x80] sm:$0xff] %v1283
        %1500 = vst [vmem:[#allocation2 + $0x88] sm:$0x3] %v1284
        %1501 = vst [vmem:[#allocation2 + $0x90] sm:$0xff] %v1293
        %1502 = vst [vmem:[#allocation2 + $0x98] sm:$0xff] %v1294
        %1503 = vst [vmem:[#allocation2 + $0xa0] sm:$0x3] %v1296
        %1504 = vst [vmem:[#allocation2 + $0xa8] sm:$0xff] %v1301
        %1505 = vst [vmem:[#allocation2 + $0xb0] sm:$0xff] %v1307
        %1506 = vst [vmem:[#allocation2 + $0xb8] sm:$0x3] %v1308
        %1507 = vst [vmem:[#allocation2 + $0xc0] sm:$0xff] %v1317
        %1508 = vst [vmem:[#allocation2 + $0xc8] sm:$0xff] %v1318
        %1509 = vst [vmem:[#allocation2 + $0xd0] sm:$0x3] %v1320
        %1510 = vst [vmem:[#allocation2 + $0xd8] sm:$0xff] %v1325
        %1511 = vst [vmem:[#allocation2 + $0xe0] sm:$0xff] %v1331
        %1512 = vst [vmem:[#allocation2 + $0xe8] sm:$0x3] %v1332
        %1513 = vst [vmem:[#allocation2 + $0xf0] sm:$0xff] %v1341
        %1514 = vst [vmem:[#allocation2 + $0xf8] sm:$0xff] %v1342
        %1515 = vst [vmem:[#allocation2 + $0x100] sm:$0x3] %v1344
        %1516 = vst [vmem:[#allocation2 + $0x108] sm:$0xff] %v1349
        %1517 = vst [vmem:[#allocation2 + $0x110] sm:$0xff] %v1355
        %1518 = vst [vmem:[#allocation2 + $0x118] sm:$0x3] %v1356
        %1519 = vst [vmem:[#allocation2 + $0x120] sm:$0xff] %v1365
        %1520 = vst [vmem:[#allocation2 + $0x128] sm:$0xff] %v1366
        %1521 = vst [vmem:[#allocation2 + $0x130] sm:$0x3] %v1368
        %1522 = vst [vmem:[#allocation2 + $0x138] sm:$0xff] %v1373
        %1523 = vst [vmem:[#allocation2 + $0x140] sm:$0xff] %v1379
        %1524 = vst [vmem:[#allocation2 + $0x148] sm:$0x3] %v1380
        %1525 = vst [vmem:[#allocation2 + $0x150] sm:$0xff] %v1389
        %1526 = vst [vmem:[#allocation2 + $0x158] sm:$0xff] %v1390
        %1527 = vst [vmem:[#allocation2 + $0x160] sm:$0x3] %v1392
        %1528 = vst [vmem:[#allocation2 + $0x168] sm:$0xff] %v1397
        %1529 = vst [vmem:[#allocation2 + $0x170] sm:$0xff] %v1403
        %1530 = vst [vmem:[#allocation2 + $0x178] sm:$0x3] %v1404
        %1531 = vst [vmem:[#allocation2 + $0x180] sm:$0xff] %v1413
        %1532 = vst [vmem:[#allocation2 + $0x188] sm:$0xff] %v1414
        %1533 = vst [vmem:[#allocation2 + $0x190] sm:$0x3] %v1416
        %1534 = vst [vmem:[#allocation2 + $0x198] sm:$0xff] %v1421
        %1535 = vst [vmem:[#allocation2 + $0x1a0] sm:$0xff] %v1427
        %1536 = vst [vmem:[#allocation2 + $0x1a8] sm:$0x3] %v1428
        %1537 = vst [vmem:[#allocation2] sm:$0x1] 0.0
        %1538 = vst [vmem:[#allocation2 + $0x18] sm:$0x1] 0.0
        %1539 = vst [vmem:[#allocation2 + $0x30] sm:$0x1] 0.0
        %1540 = vst [vmem:[#allocation2 + $0x48] sm:$0x1] 0.0
        %1541 = vst [vmem:[#allocation2 + $0x60] sm:$0x1] 0.0
        %1542 = vst [vmem:[#allocation2 + $0x78] sm:$0x1] 0.0
        %1543 = vst [vmem:[#allocation2 + $0x90] sm:$0x1] 0.0
        %1544 = vst [vmem:[#allocation2 + $0xa8] sm:$0x1] 0.0
        %1545 = vst [vmem:[#allocation2 + $0xc0] sm:$0x1] 0.0
        %1546 = vst [vmem:[#allocation2 + $0xd8] sm:$0x1] 0.0
        %1547 = vst [vmem:[#allocation2 + $0xf0] sm:$0x1] 0.0
        %1548 = vst [vmem:[#allocation2 + $0x108] sm:$0x1] 0.0
        %1549 = vst [vmem:[#allocation2 + $0x120] sm:$0x1] 0.0
        %1550 = vst [vmem:[#allocation2 + $0x138] sm:$0x1] 0.0
        %1551 = vst [vmem:[#allocation2 + $0x150] sm:$0x1] 0.0
        %1552 = vst [vmem:[#allocation2 + $0x168] sm:$0x1] 0.0
        %1553 = vst [vmem:[#allocation2 + $0x180] sm:$0x1] 0.0
        %1554 = vst [vmem:[#allocation2 + $0x198] sm:$0x1] 0.0
        %1555 = vst [vmem:[#allocation2 + $0x11] sm:$0x1] 0.0
        %1556 = vst [vmem:[#allocation2 + $0x29] sm:$0x1] 0.0
        %1557 = vst [vmem:[#allocation2 + $0x41] sm:$0x1] 0.0
        %1558 = vst [vmem:[#allocation2 + $0x59] sm:$0x1] 0.0
        %1559 = vst [vmem:[#allocation2 + $0x71] sm:$0x1] 0.0
        %1560 = vst [vmem:[#allocation2 + $0x89] sm:$0x1] 0.0
        %1561 = vst [vmem:[#allocation2 + $0xa1] sm:$0x1] 0.0
        %1562 = vst [vmem:[#allocation2 + $0xb9] sm:$0x1] 0.0
        %1563 = vst [vmem:[#allocation2 + $0xd1] sm:$0x1] 0.0
        %1564 = vst [vmem:[#allocation2 + $0xe9] sm:$0x1] 0.0
        %1565 = vst [vmem:[#allocation2 + $0x101] sm:$0x1] 0.0
        %1566 = vst [vmem:[#allocation2 + $0x119] sm:$0x1] 0.0
        %1567 = vst [vmem:[#allocation2 + $0x131] sm:$0x1] 0.0
        %1568 = vst [vmem:[#allocation2 + $0x149] sm:$0x1] 0.0
        %1569 = vst [vmem:[#allocation2 + $0x161] sm:$0x1] 0.0
        %1570 = vst [vmem:[#allocation2 + $0x179] sm:$0x1] 0.0
        %1571 = vst [vmem:[#allocation2 + $0x191] sm:$0x1] 0.0
        %1572 = vst [vmem:[#allocation2 + $0x1a9] sm:$0x1] 0.0
        %p1573 = scmp.eq.s32.totalorder %s26, 0
        // Predicated region
        $region49: #{tpu_custom_call.1} parent=47 // pred_check
          %p1574 = pneg %p1573
        $region50: #{tpu_custom_call.1} parent=47 // pred_check_branch
          %1576 = sbr.rel (%p1574) target = $region52
        $region51: #{tpu_custom_call.1} parent=47 // pred_region
          %1577 = vst [vmem:[#allocation2] sm:$0xff] 0.0
          %1578 = vst [vmem:[#allocation2 + $0x8] sm:$0xff] 0.0
          %1579 = vst [vmem:[#allocation2 + $0x10] sm:$0x3] 0.0
          %s1580 = scalar_lea.vmem [#allocation2], 408
          %1581 = vst [vmem:[%s1580] sm:$0xff] 0.0
          %1582 = vst [vmem:[%s1580 + $0x8] sm:$0xff] 0.0
          %1583 = vst [vmem:[%s1580 + $0x10] sm:$0x3] 0.0
        $region52: #{tpu_custom_call.1} parent=47 // pred_fallthru
          _
        %v1584 = vld [vmem:[%s3] sm:$0xff]
        %v1585 = vld [vmem:[%s3 + $0x8] sm:$0x1]
        %v1586 = vld [vmem:[#allocation2] sm:$0xff]
        %v1587 = vld [vmem:[#allocation2 + $0x8] sm:$0xff]
        %v1588 = vld [vmem:[#allocation2 + $0x18] sm:$0xff]
        %v1589 = vld [vmem:[#allocation2 + $0x20] sm:$0xff]
        %v1590 = vld [vmem:[#allocation2 + $0x30] sm:$0xff]
        %v1591 = vld [vmem:[#allocation2 + $0x38] sm:$0xff]
        %v1592 = vld [vmem:[#allocation2 + $0x48] sm:$0xff]
        %v1593 = vld [vmem:[#allocation2 + $0x50] sm:$0xff]
        %v1594 = vld [vmem:[#allocation2 + $0x60] sm:$0xff]
        %v1595 = vld [vmem:[#allocation2 + $0x68] sm:$0xff]
        %v1596 = vld [vmem:[#allocation2 + $0x78] sm:$0xff]
        %v1597 = vld [vmem:[#allocation2 + $0x80] sm:$0xff]
        %v1598 = vld [vmem:[#allocation2 + $0x90] sm:$0xff]
        %v1599 = vld [vmem:[#allocation2 + $0x98] sm:$0xff]
        %v1600 = vld [vmem:[#allocation2 + $0xa8] sm:$0xff]
        %v1601 = vld [vmem:[#allocation2 + $0xb0] sm:$0xff]
        %v1602 = vld [vmem:[#allocation2 + $0xc0] sm:$0xff]
        %v1603 = vld [vmem:[#allocation2 + $0xc8] sm:$0xff]
        %v1604 = vld [vmem:[#allocation2 + $0xd8] sm:$0xff]
        %v1605 = vld [vmem:[#allocation2 + $0xe0] sm:$0xff]
        %v1606 = vld [vmem:[#allocation2 + $0xf0] sm:$0xff]
        %v1607 = vld [vmem:[#allocation2 + $0xf8] sm:$0xff]
        %v1608 = vld [vmem:[#allocation2 + $0x108] sm:$0xff]
        %v1609 = vld [vmem:[#allocation2 + $0x110] sm:$0xff]
        %v1610 = vld [vmem:[#allocation2 + $0x120] sm:$0xff]
        %v1611 = vld [vmem:[#allocation2 + $0x128] sm:$0xff]
        %v1612 = vld [vmem:[#allocation2 + $0x138] sm:$0xff]
        %v1613 = vld [vmem:[#allocation2 + $0x140] sm:$0xff]
        %v1614 = vld [vmem:[#allocation2 + $0x150] sm:$0xff]
        %v1615 = vld [vmem:[#allocation2 + $0x158] sm:$0xff]
        %v1616 = vld [vmem:[#allocation2 + $0x168] sm:$0xff]
        %v1617 = vld [vmem:[#allocation2 + $0x170] sm:$0xff]
        %v1618 = vperm.slane %v1584, 0
        %v1619 = vmul.f32 %v1586, %v1618
        %v1620 = vmul.f32 %v1587, %v1618
        %v1621 = vmul.f32 %v1588, %v1618
        %v1622 = vmul.f32 %v1589, %v1618
        %v1623 = vmul.f32 %v1590, %v1618
        %v1624 = vmul.f32 %v1591, %v1618
        %v1625 = vmul.f32 %v1592, %v1618
        %v1626 = vmul.f32 %v1593, %v1618
        %v1627 = vmul.f32 %v1594, %v1618
        %v1628 = vmul.f32 %v1595, %v1618
        %v1629 = vmul.f32 %v1596, %v1618
        %v1630 = vmul.f32 %v1597, %v1618
        %v1631 = vmul.f32 %v1598, %v1618
        %v1632 = vmul.f32 %v1599, %v1618
        %v1633 = vmul.f32 %v1600, %v1618
        %v1634 = vmul.f32 %v1601, %v1618
        %v1635 = vmul.f32 %v1602, %v1618
        %v1636 = vmul.f32 %v1603, %v1618
        %v1637 = vmul.f32 %v1604, %v1618
        %v1638 = vmul.f32 %v1605, %v1618
        %v1639 = vmul.f32 %v1606, %v1618
        %v1640 = vmul.f32 %v1607, %v1618
        %v1641 = vmul.f32 %v1608, %v1618
        %v1642 = vmul.f32 %v1609, %v1618
        %v1643 = vmul.f32 %v1610, %v1618
        %v1644 = vmul.f32 %v1611, %v1618
        %v1645 = vmul.f32 %v1612, %v1618
        %v1646 = vmul.f32 %v1613, %v1618
        %v1647 = vmul.f32 %v1614, %v1618
        %v1648 = vmul.f32 %v1615, %v1618
        %v1649 = vmul.f32 %v1616, %v1618
        %v1650 = vmul.f32 %v1617, %v1618
        %v1651 = vld [vmem:[#allocation2 + $0x1] sm:$0xff]
        %v1652 = vld [vmem:[#allocation2 + $0x9] sm:$0xff]
        %v1653 = vld [vmem:[#allocation2 + $0x19] sm:$0xff]
        %v1654 = vld [vmem:[#allocation2 + $0x21] sm:$0xff]
        %v1655 = vld [vmem:[#allocation2 + $0x31] sm:$0xff]
        %v1656 = vld [vmem:[#allocation2 + $0x39] sm:$0xff]
        %v1657 = vld [vmem:[#allocation2 + $0x49] sm:$0xff]
        %v1658 = vld [vmem:[#allocation2 + $0x51] sm:$0xff]
        %v1659 = vld [vmem:[#allocation2 + $0x61] sm:$0xff]
        %v1660 = vld [vmem:[#allocation2 + $0x69] sm:$0xff]
        %v1661 = vld [vmem:[#allocation2 + $0x79] sm:$0xff]
        %v1662 = vld [vmem:[#allocation2 + $0x81] sm:$0xff]
        %v1663 = vld [vmem:[#allocation2 + $0x91] sm:$0xff]
        %v1664 = vld [vmem:[#allocation2 + $0x99] sm:$0xff]
        %v1665 = vld [vmem:[#allocation2 + $0xa9] sm:$0xff]
        %v1666 = vld [vmem:[#allocation2 + $0xb1] sm:$0xff]
        %v1667 = vld [vmem:[#allocation2 + $0xc1] sm:$0xff]
        %v1668 = vld [vmem:[#allocation2 + $0xc9] sm:$0xff]
        %v1669 = vld [vmem:[#allocation2 + $0xd9] sm:$0xff]
        %v1670 = vld [vmem:[#allocation2 + $0xe1] sm:$0xff]
        %v1671 = vld [vmem:[#allocation2 + $0xf1] sm:$0xff]
        %v1672 = vld [vmem:[#allocation2 + $0xf9] sm:$0xff]
        %v1673 = vld [vmem:[#allocation2 + $0x109] sm:$0xff]
        %v1674 = vld [vmem:[#allocation2 + $0x111] sm:$0xff]
        %v1675 = vld [vmem:[#allocation2 + $0x121] sm:$0xff]
        %v1676 = vld [vmem:[#allocation2 + $0x129] sm:$0xff]
        %v1677 = vld [vmem:[#allocation2 + $0x139] sm:$0xff]
        %v1678 = vld [vmem:[#allocation2 + $0x141] sm:$0xff]
        %v1679 = vld [vmem:[#allocation2 + $0x151] sm:$0xff]
        %v1680 = vld [vmem:[#allocation2 + $0x159] sm:$0xff]
        %v1681 = vld [vmem:[#allocation2 + $0x169] sm:$0xff]
        %v1682 = vld [vmem:[#allocation2 + $0x171] sm:$0xff]
        %v1683 = vperm.slane %v1584, 1
        %v1684 = vmul.f32 %v1651, %v1683
        %v1685 = vmul.f32 %v1652, %v1683
        %v1686 = vmul.f32 %v1653, %v1683
        %v1687 = vmul.f32 %v1654, %v1683
        %v1688 = vmul.f32 %v1655, %v1683
        %v1689 = vmul.f32 %v1656, %v1683
        %v1690 = vmul.f32 %v1657, %v1683
        %v1691 = vmul.f32 %v1658, %v1683
        %v1692 = vmul.f32 %v1659, %v1683
        %v1693 = vmul.f32 %v1660, %v1683
        %v1694 = vmul.f32 %v1661, %v1683
        %v1695 = vmul.f32 %v1662, %v1683
        %v1696 = vmul.f32 %v1663, %v1683
        %v1697 = vmul.f32 %v1664, %v1683
        %v1698 = vmul.f32 %v1665, %v1683
        %v1699 = vmul.f32 %v1666, %v1683
        %v1700 = vmul.f32 %v1667, %v1683
        %v1701 = vmul.f32 %v1668, %v1683
        %v1702 = vmul.f32 %v1669, %v1683
        %v1703 = vmul.f32 %v1670, %v1683
        %v1704 = vmul.f32 %v1671, %v1683
        %v1705 = vmul.f32 %v1672, %v1683
        %v1706 = vmul.f32 %v1673, %v1683
        %v1707 = vmul.f32 %v1674, %v1683
        %v1708 = vmul.f32 %v1675, %v1683
        %v1709 = vmul.f32 %v1676, %v1683
        %v1710 = vmul.f32 %v1677, %v1683
        %v1711 = vmul.f32 %v1678, %v1683
        %v1712 = vmul.f32 %v1679, %v1683
        %v1713 = vmul.f32 %v1680, %v1683
        %v1714 = vmul.f32 %v1681, %v1683
        %v1715 = vmul.f32 %v1682, %v1683
        %v1716 = vadd.f32 %v1619, %v1684
        %v1717 = vadd.f32 %v1620, %v1685
        %v1718 = vadd.f32 %v1621, %v1686
        %v1719 = vadd.f32 %v1622, %v1687
        %v1720 = vadd.f32 %v1623, %v1688
        %v1721 = vadd.f32 %v1624, %v1689
        %v1722 = vadd.f32 %v1625, %v1690
        %v1723 = vadd.f32 %v1626, %v1691
        %v1724 = vadd.f32 %v1627, %v1692
        %v1725 = vadd.f32 %v1628, %v1693
        %v1726 = vadd.f32 %v1629, %v1694
        %v1727 = vadd.f32 %v1630, %v1695
        %v1728 = vadd.f32 %v1631, %v1696
        %v1729 = vadd.f32 %v1632, %v1697
        %v1730 = vadd.f32 %v1633, %v1698
        %v1731 = vadd.f32 %v1634, %v1699
        %v1732 = vadd.f32 %v1635, %v1700
        %v1733 = vadd.f32 %v1636, %v1701
        %v1734 = vadd.f32 %v1637, %v1702
        %v1735 = vadd.f32 %v1638, %v1703
        %v1736 = vadd.f32 %v1639, %v1704
        %v1737 = vadd.f32 %v1640, %v1705
        %v1738 = vadd.f32 %v1641, %v1706
        %v1739 = vadd.f32 %v1642, %v1707
        %v1740 = vadd.f32 %v1643, %v1708
        %v1741 = vadd.f32 %v1644, %v1709
        %v1742 = vadd.f32 %v1645, %v1710
        %v1743 = vadd.f32 %v1646, %v1711
        %v1744 = vadd.f32 %v1647, %v1712
        %v1745 = vadd.f32 %v1648, %v1713
        %v1746 = vadd.f32 %v1649, %v1714
        %v1747 = vadd.f32 %v1650, %v1715
        %v1748 = vld [vmem:[#allocation2 + $0x2] sm:$0xff]
        %v1749 = vld [vmem:[#allocation2 + $0xa] sm:$0xff]
        %v1750 = vld [vmem:[#allocation2 + $0x1a] sm:$0xff]
        %v1751 = vld [vmem:[#allocation2 + $0x22] sm:$0xff]
        %v1752 = vld [vmem:[#allocation2 + $0x32] sm:$0xff]
        %v1753 = vld [vmem:[#allocation2 + $0x3a] sm:$0xff]
        %v1754 = vld [vmem:[#allocation2 + $0x4a] sm:$0xff]
        %v1755 = vld [vmem:[#allocation2 + $0x52] sm:$0xff]
        %v1756 = vld [vmem:[#allocation2 + $0x62] sm:$0xff]
        %v1757 = vld [vmem:[#allocation2 + $0x6a] sm:$0xff]
        %v1758 = vld [vmem:[#allocation2 + $0x7a] sm:$0xff]
        %v1759 = vld [vmem:[#allocation2 + $0x82] sm:$0xff]
        %v1760 = vld [vmem:[#allocation2 + $0x92] sm:$0xff]
        %v1761 = vld [vmem:[#allocation2 + $0x9a] sm:$0xff]
        %v1762 = vld [vmem:[#allocation2 + $0xaa] sm:$0xff]
        %v1763 = vld [vmem:[#allocation2 + $0xb2] sm:$0xff]
        %v1764 = vld [vmem:[#allocation2 + $0xc2] sm:$0xff]
        %v1765 = vld [vmem:[#allocation2 + $0xca] sm:$0xff]
        %v1766 = vld [vmem:[#allocation2 + $0xda] sm:$0xff]
        %v1767 = vld [vmem:[#allocation2 + $0xe2] sm:$0xff]
        %v1768 = vld [vmem:[#allocation2 + $0xf2] sm:$0xff]
        %v1769 = vld [vmem:[#allocation2 + $0xfa] sm:$0xff]
        %v1770 = vld [vmem:[#allocation2 + $0x10a] sm:$0xff]
        %v1771 = vld [vmem:[#allocation2 + $0x112] sm:$0xff]
        %v1772 = vld [vmem:[#allocation2 + $0x122] sm:$0xff]
        %v1773 = vld [vmem:[#allocation2 + $0x12a] sm:$0xff]
        %v1774 = vld [vmem:[#allocation2 + $0x13a] sm:$0xff]
        %v1775 = vld [vmem:[#allocation2 + $0x142] sm:$0xff]
        %v1776 = vld [vmem:[#allocation2 + $0x152] sm:$0xff]
        %v1777 = vld [vmem:[#allocation2 + $0x15a] sm:$0xff]
        %v1778 = vld [vmem:[#allocation2 + $0x16a] sm:$0xff]
        %v1779 = vld [vmem:[#allocation2 + $0x172] sm:$0xff]
        %v1780 = vperm.slane %v1584, 2
        %v1781 = vmul.f32 %v1748, %v1780
        %v1782 = vmul.f32 %v1749, %v1780
        %v1783 = vmul.f32 %v1750, %v1780
        %v1784 = vmul.f32 %v1751, %v1780
        %v1785 = vmul.f32 %v1752, %v1780
        %v1786 = vmul.f32 %v1753, %v1780
        %v1787 = vmul.f32 %v1754, %v1780
        %v1788 = vmul.f32 %v1755, %v1780
        %v1789 = vmul.f32 %v1756, %v1780
        %v1790 = vmul.f32 %v1757, %v1780
        %v1791 = vmul.f32 %v1758, %v1780
        %v1792 = vmul.f32 %v1759, %v1780
        %v1793 = vmul.f32 %v1760, %v1780
        %v1794 = vmul.f32 %v1761, %v1780
        %v1795 = vmul.f32 %v1762, %v1780
        %v1796 = vmul.f32 %v1763, %v1780
        %v1797 = vmul.f32 %v1764, %v1780
        %v1798 = vmul.f32 %v1765, %v1780
        %v1799 = vmul.f32 %v1766, %v1780
        %v1800 = vmul.f32 %v1767, %v1780
        %v1801 = vmul.f32 %v1768, %v1780
        %v1802 = vmul.f32 %v1769, %v1780
        %v1803 = vmul.f32 %v1770, %v1780
        %v1804 = vmul.f32 %v1771, %v1780
        %v1805 = vmul.f32 %v1772, %v1780
        %v1806 = vmul.f32 %v1773, %v1780
        %v1807 = vmul.f32 %v1774, %v1780
        %v1808 = vmul.f32 %v1775, %v1780
        %v1809 = vmul.f32 %v1776, %v1780
        %v1810 = vmul.f32 %v1777, %v1780
        %v1811 = vmul.f32 %v1778, %v1780
        %v1812 = vmul.f32 %v1779, %v1780
        %v1813 = vadd.f32 %v1716, %v1781
        %v1814 = vadd.f32 %v1717, %v1782
        %v1815 = vadd.f32 %v1718, %v1783
        %v1816 = vadd.f32 %v1719, %v1784
        %v1817 = vadd.f32 %v1720, %v1785
        %v1818 = vadd.f32 %v1721, %v1786
        %v1819 = vadd.f32 %v1722, %v1787
        %v1820 = vadd.f32 %v1723, %v1788
        %v1821 = vadd.f32 %v1724, %v1789
        %v1822 = vadd.f32 %v1725, %v1790
        %v1823 = vadd.f32 %v1726, %v1791
        %v1824 = vadd.f32 %v1727, %v1792
        %v1825 = vadd.f32 %v1728, %v1793
        %v1826 = vadd.f32 %v1729, %v1794
        %v1827 = vadd.f32 %v1730, %v1795
        %v1828 = vadd.f32 %v1731, %v1796
        %v1829 = vadd.f32 %v1732, %v1797
        %v1830 = vadd.f32 %v1733, %v1798
        %v1831 = vadd.f32 %v1734, %v1799
        %v1832 = vadd.f32 %v1735, %v1800
        %v1833 = vadd.f32 %v1736, %v1801
        %v1834 = vadd.f32 %v1737, %v1802
        %v1835 = vadd.f32 %v1738, %v1803
        %v1836 = vadd.f32 %v1739, %v1804
        %v1837 = vadd.f32 %v1740, %v1805
        %v1838 = vadd.f32 %v1741, %v1806
        %v1839 = vadd.f32 %v1742, %v1807
        %v1840 = vadd.f32 %v1743, %v1808
        %v1841 = vadd.f32 %v1744, %v1809
        %v1842 = vadd.f32 %v1745, %v1810
        %v1843 = vadd.f32 %v1746, %v1811
        %v1844 = vadd.f32 %v1747, %v1812
        %s1845 = scalar_lea.vmem [#allocation2], 24
        %v1846 = vld [vmem:[%s1845] sm:$0xff]
        %v1847 = vld [vmem:[%s1845 + $0x8] sm:$0xff]
        %v1848 = vld [vmem:[%s1845 + $0x18] sm:$0xff]
        %v1849 = vld [vmem:[%s1845 + $0x20] sm:$0xff]
        %v1850 = vld [vmem:[%s1845 + $0x30] sm:$0xff]
        %v1851 = vld [vmem:[%s1845 + $0x38] sm:$0xff]
        %v1852 = vld [vmem:[%s1845 + $0x48] sm:$0xff]
        %v1853 = vld [vmem:[%s1845 + $0x50] sm:$0xff]
        %v1854 = vld [vmem:[%s1845 + $0x60] sm:$0xff]
        %v1855 = vld [vmem:[%s1845 + $0x68] sm:$0xff]
        %v1856 = vld [vmem:[%s1845 + $0x78] sm:$0xff]
        %v1857 = vld [vmem:[%s1845 + $0x80] sm:$0xff]
        %v1858 = vld [vmem:[%s1845 + $0x90] sm:$0xff]
        %v1859 = vld [vmem:[%s1845 + $0x98] sm:$0xff]
        %v1860 = vld [vmem:[%s1845 + $0xa8] sm:$0xff]
        %v1861 = vld [vmem:[%s1845 + $0xb0] sm:$0xff]
        %v1862 = vld [vmem:[%s1845 + $0xc0] sm:$0xff]
        %v1863 = vld [vmem:[%s1845 + $0xc8] sm:$0xff]
        %v1864 = vld [vmem:[%s1845 + $0xd8] sm:$0xff]
        %v1865 = vld [vmem:[%s1845 + $0xe0] sm:$0xff]
        %v1866 = vld [vmem:[%s1845 + $0xf0] sm:$0xff]
        %v1867 = vld [vmem:[%s1845 + $0xf8] sm:$0xff]
        %v1868 = vld [vmem:[%s1845 + $0x108] sm:$0xff]
        %v1869 = vld [vmem:[%s1845 + $0x110] sm:$0xff]
        %v1870 = vld [vmem:[%s1845 + $0x120] sm:$0xff]
        %v1871 = vld [vmem:[%s1845 + $0x128] sm:$0xff]
        %v1872 = vld [vmem:[%s1845 + $0x138] sm:$0xff]
        %v1873 = vld [vmem:[%s1845 + $0x140] sm:$0xff]
        %v1874 = vld [vmem:[%s1845 + $0x150] sm:$0xff]
        %v1875 = vld [vmem:[%s1845 + $0x158] sm:$0xff]
        %v1876 = vld [vmem:[%s1845 + $0x168] sm:$0xff]
        %v1877 = vld [vmem:[%s1845 + $0x170] sm:$0xff]
        %v1878 = vperm.slane %v1584, 3
        %v1879 = vmul.f32 %v1846, %v1878
        %v1880 = vmul.f32 %v1847, %v1878
        %v1881 = vmul.f32 %v1848, %v1878
        %v1882 = vmul.f32 %v1849, %v1878
        %v1883 = vmul.f32 %v1850, %v1878
        %v1884 = vmul.f32 %v1851, %v1878
        %v1885 = vmul.f32 %v1852, %v1878
        %v1886 = vmul.f32 %v1853, %v1878
        %v1887 = vmul.f32 %v1854, %v1878
        %v1888 = vmul.f32 %v1855, %v1878
        %v1889 = vmul.f32 %v1856, %v1878
        %v1890 = vmul.f32 %v1857, %v1878
        %v1891 = vmul.f32 %v1858, %v1878
        %v1892 = vmul.f32 %v1859, %v1878
        %v1893 = vmul.f32 %v1860, %v1878
        %v1894 = vmul.f32 %v1861, %v1878
        %v1895 = vmul.f32 %v1862, %v1878
        %v1896 = vmul.f32 %v1863, %v1878
        %v1897 = vmul.f32 %v1864, %v1878
        %v1898 = vmul.f32 %v1865, %v1878
        %v1899 = vmul.f32 %v1866, %v1878
        %v1900 = vmul.f32 %v1867, %v1878
        %v1901 = vmul.f32 %v1868, %v1878
        %v1902 = vmul.f32 %v1869, %v1878
        %v1903 = vmul.f32 %v1870, %v1878
        %v1904 = vmul.f32 %v1871, %v1878
        %v1905 = vmul.f32 %v1872, %v1878
        %v1906 = vmul.f32 %v1873, %v1878
        %v1907 = vmul.f32 %v1874, %v1878
        %v1908 = vmul.f32 %v1875, %v1878
        %v1909 = vmul.f32 %v1876, %v1878
        %v1910 = vmul.f32 %v1877, %v1878
        %v1911 = vadd.f32 %v1813, %v1879
        %v1912 = vadd.f32 %v1814, %v1880
        %v1913 = vadd.f32 %v1815, %v1881
        %v1914 = vadd.f32 %v1816, %v1882
        %v1915 = vadd.f32 %v1817, %v1883
        %v1916 = vadd.f32 %v1818, %v1884
        %v1917 = vadd.f32 %v1819, %v1885
        %v1918 = vadd.f32 %v1820, %v1886
        %v1919 = vadd.f32 %v1821, %v1887
        %v1920 = vadd.f32 %v1822, %v1888
        %v1921 = vadd.f32 %v1823, %v1889
        %v1922 = vadd.f32 %v1824, %v1890
        %v1923 = vadd.f32 %v1825, %v1891
        %v1924 = vadd.f32 %v1826, %v1892
        %v1925 = vadd.f32 %v1827, %v1893
        %v1926 = vadd.f32 %v1828, %v1894
        %v1927 = vadd.f32 %v1829, %v1895
        %v1928 = vadd.f32 %v1830, %v1896
        %v1929 = vadd.f32 %v1831, %v1897
        %v1930 = vadd.f32 %v1832, %v1898
        %v1931 = vadd.f32 %v1833, %v1899
        %v1932 = vadd.f32 %v1834, %v1900
        %v1933 = vadd.f32 %v1835, %v1901
        %v1934 = vadd.f32 %v1836, %v1902
        %v1935 = vadd.f32 %v1837, %v1903
        %v1936 = vadd.f32 %v1838, %v1904
        %v1937 = vadd.f32 %v1839, %v1905
        %v1938 = vadd.f32 %v1840, %v1906
        %v1939 = vadd.f32 %v1841, %v1907
        %v1940 = vadd.f32 %v1842, %v1908
        %v1941 = vadd.f32 %v1843, %v1909
        %v1942 = vadd.f32 %v1844, %v1910
        %v1943 = vld [vmem:[%s1845 + $0x1] sm:$0xff]
        %v1944 = vld [vmem:[%s1845 + $0x9] sm:$0xff]
        %v1945 = vld [vmem:[%s1845 + $0x19] sm:$0xff]
        %v1946 = vld [vmem:[%s1845 + $0x21] sm:$0xff]
        %v1947 = vld [vmem:[%s1845 + $0x31] sm:$0xff]
        %v1948 = vld [vmem:[%s1845 + $0x39] sm:$0xff]
        %v1949 = vld [vmem:[%s1845 + $0x49] sm:$0xff]
        %v1950 = vld [vmem:[%s1845 + $0x51] sm:$0xff]
        %v1951 = vld [vmem:[%s1845 + $0x61] sm:$0xff]
        %v1952 = vld [vmem:[%s1845 + $0x69] sm:$0xff]
        %v1953 = vld [vmem:[%s1845 + $0x79] sm:$0xff]
        %v1954 = vld [vmem:[%s1845 + $0x81] sm:$0xff]
        %v1955 = vld [vmem:[%s1845 + $0x91] sm:$0xff]
        %v1956 = vld [vmem:[%s1845 + $0x99] sm:$0xff]
        %v1957 = vld [vmem:[%s1845 + $0xa9] sm:$0xff]
        %v1958 = vld [vmem:[%s1845 + $0xb1] sm:$0xff]
        %v1959 = vld [vmem:[%s1845 + $0xc1] sm:$0xff]
        %v1960 = vld [vmem:[%s1845 + $0xc9] sm:$0xff]
        %v1961 = vld [vmem:[%s1845 + $0xd9] sm:$0xff]
        %v1962 = vld [vmem:[%s1845 + $0xe1] sm:$0xff]
        %v1963 = vld [vmem:[%s1845 + $0xf1] sm:$0xff]
        %v1964 = vld [vmem:[%s1845 + $0xf9] sm:$0xff]
        %v1965 = vld [vmem:[%s1845 + $0x109] sm:$0xff]
        %v1966 = vld [vmem:[%s1845 + $0x111] sm:$0xff]
        %v1967 = vld [vmem:[%s1845 + $0x121] sm:$0xff]
        %v1968 = vld [vmem:[%s1845 + $0x129] sm:$0xff]
        %v1969 = vld [vmem:[%s1845 + $0x139] sm:$0xff]
        %v1970 = vld [vmem:[%s1845 + $0x141] sm:$0xff]
        %v1971 = vld [vmem:[%s1845 + $0x151] sm:$0xff]
        %v1972 = vld [vmem:[%s1845 + $0x159] sm:$0xff]
        %v1973 = vld [vmem:[%s1845 + $0x169] sm:$0xff]
        %v1974 = vld [vmem:[%s1845 + $0x171] sm:$0xff]
        %v1975 = vperm.slane %v1584, 4
        %v1976 = vmul.f32 %v1943, %v1975
        %v1977 = vmul.f32 %v1944, %v1975
        %v1978 = vmul.f32 %v1945, %v1975
        %v1979 = vmul.f32 %v1946, %v1975
        %v1980 = vmul.f32 %v1947, %v1975
        %v1981 = vmul.f32 %v1948, %v1975
        %v1982 = vmul.f32 %v1949, %v1975
        %v1983 = vmul.f32 %v1950, %v1975
        %v1984 = vmul.f32 %v1951, %v1975
        %v1985 = vmul.f32 %v1952, %v1975
        %v1986 = vmul.f32 %v1953, %v1975
        %v1987 = vmul.f32 %v1954, %v1975
        %v1988 = vmul.f32 %v1955, %v1975
        %v1989 = vmul.f32 %v1956, %v1975
        %v1990 = vmul.f32 %v1957, %v1975
        %v1991 = vmul.f32 %v1958, %v1975
        %v1992 = vmul.f32 %v1959, %v1975
        %v1993 = vmul.f32 %v1960, %v1975
        %v1994 = vmul.f32 %v1961, %v1975
        %v1995 = vmul.f32 %v1962, %v1975
        %v1996 = vmul.f32 %v1963, %v1975
        %v1997 = vmul.f32 %v1964, %v1975
        %v1998 = vmul.f32 %v1965, %v1975
        %v1999 = vmul.f32 %v1966, %v1975
        %v2000 = vmul.f32 %v1967, %v1975
        %v2001 = vmul.f32 %v1968, %v1975
        %v2002 = vmul.f32 %v1969, %v1975
        %v2003 = vmul.f32 %v1970, %v1975
        %v2004 = vmul.f32 %v1971, %v1975
        %v2005 = vmul.f32 %v1972, %v1975
        %v2006 = vmul.f32 %v1973, %v1975
        %v2007 = vmul.f32 %v1974, %v1975
        %v2008 = vadd.f32 %v1911, %v1976
        %v2009 = vadd.f32 %v1912, %v1977
        %v2010 = vadd.f32 %v1913, %v1978
        %v2011 = vadd.f32 %v1914, %v1979
        %v2012 = vadd.f32 %v1915, %v1980
        %v2013 = vadd.f32 %v1916, %v1981
        %v2014 = vadd.f32 %v1917, %v1982
        %v2015 = vadd.f32 %v1918, %v1983
        %v2016 = vadd.f32 %v1919, %v1984
        %v2017 = vadd.f32 %v1920, %v1985
        %v2018 = vadd.f32 %v1921, %v1986
        %v2019 = vadd.f32 %v1922, %v1987
        %v2020 = vadd.f32 %v1923, %v1988
        %v2021 = vadd.f32 %v1924, %v1989
        %v2022 = vadd.f32 %v1925, %v1990
        %v2023 = vadd.f32 %v1926, %v1991
        %v2024 = vadd.f32 %v1927, %v1992
        %v2025 = vadd.f32 %v1928, %v1993
        %v2026 = vadd.f32 %v1929, %v1994
        %v2027 = vadd.f32 %v1930, %v1995
        %v2028 = vadd.f32 %v1931, %v1996
        %v2029 = vadd.f32 %v1932, %v1997
        %v2030 = vadd.f32 %v1933, %v1998
        %v2031 = vadd.f32 %v1934, %v1999
        %v2032 = vadd.f32 %v1935, %v2000
        %v2033 = vadd.f32 %v1936, %v2001
        %v2034 = vadd.f32 %v1937, %v2002
        %v2035 = vadd.f32 %v1938, %v2003
        %v2036 = vadd.f32 %v1939, %v2004
        %v2037 = vadd.f32 %v1940, %v2005
        %v2038 = vadd.f32 %v1941, %v2006
        %v2039 = vadd.f32 %v1942, %v2007
        %v2040 = vld [vmem:[%s1845 + $0x2] sm:$0xff]
        %v2041 = vld [vmem:[%s1845 + $0xa] sm:$0xff]
        %v2042 = vld [vmem:[%s1845 + $0x1a] sm:$0xff]
        %v2043 = vld [vmem:[%s1845 + $0x22] sm:$0xff]
        %v2044 = vld [vmem:[%s1845 + $0x32] sm:$0xff]
        %v2045 = vld [vmem:[%s1845 + $0x3a] sm:$0xff]
        %v2046 = vld [vmem:[%s1845 + $0x4a] sm:$0xff]
        %v2047 = vld [vmem:[%s1845 + $0x52] sm:$0xff]
        %v2048 = vld [vmem:[%s1845 + $0x62] sm:$0xff]
        %v2049 = vld [vmem:[%s1845 + $0x6a] sm:$0xff]
        %v2050 = vld [vmem:[%s1845 + $0x7a] sm:$0xff]
        %v2051 = vld [vmem:[%s1845 + $0x82] sm:$0xff]
        %v2052 = vld [vmem:[%s1845 + $0x92] sm:$0xff]
        %v2053 = vld [vmem:[%s1845 + $0x9a] sm:$0xff]
        %v2054 = vld [vmem:[%s1845 + $0xaa] sm:$0xff]
        %v2055 = vld [vmem:[%s1845 + $0xb2] sm:$0xff]
        %v2056 = vld [vmem:[%s1845 + $0xc2] sm:$0xff]
        %v2057 = vld [vmem:[%s1845 + $0xca] sm:$0xff]
        %v2058 = vld [vmem:[%s1845 + $0xda] sm:$0xff]
        %v2059 = vld [vmem:[%s1845 + $0xe2] sm:$0xff]
        %v2060 = vld [vmem:[%s1845 + $0xf2] sm:$0xff]
        %v2061 = vld [vmem:[%s1845 + $0xfa] sm:$0xff]
        %v2062 = vld [vmem:[%s1845 + $0x10a] sm:$0xff]
        %v2063 = vld [vmem:[%s1845 + $0x112] sm:$0xff]
        %v2064 = vld [vmem:[%s1845 + $0x122] sm:$0xff]
        %v2065 = vld [vmem:[%s1845 + $0x12a] sm:$0xff]
        %v2066 = vld [vmem:[%s1845 + $0x13a] sm:$0xff]
        %v2067 = vld [vmem:[%s1845 + $0x142] sm:$0xff]
        %v2068 = vld [vmem:[%s1845 + $0x152] sm:$0xff]
        %v2069 = vld [vmem:[%s1845 + $0x15a] sm:$0xff]
        %v2070 = vld [vmem:[%s1845 + $0x16a] sm:$0xff]
        %v2071 = vld [vmem:[%s1845 + $0x172] sm:$0xff]
        %v2072 = vperm.slane %v1584, 5
        %v2073 = vmul.f32 %v2040, %v2072
        %v2074 = vmul.f32 %v2041, %v2072
        %v2075 = vmul.f32 %v2042, %v2072
        %v2076 = vmul.f32 %v2043, %v2072
        %v2077 = vmul.f32 %v2044, %v2072
        %v2078 = vmul.f32 %v2045, %v2072
        %v2079 = vmul.f32 %v2046, %v2072
        %v2080 = vmul.f32 %v2047, %v2072
        %v2081 = vmul.f32 %v2048, %v2072
        %v2082 = vmul.f32 %v2049, %v2072
        %v2083 = vmul.f32 %v2050, %v2072
        %v2084 = vmul.f32 %v2051, %v2072
        %v2085 = vmul.f32 %v2052, %v2072
        %v2086 = vmul.f32 %v2053, %v2072
        %v2087 = vmul.f32 %v2054, %v2072
        %v2088 = vmul.f32 %v2055, %v2072
        %v2089 = vmul.f32 %v2056, %v2072
        %v2090 = vmul.f32 %v2057, %v2072
        %v2091 = vmul.f32 %v2058, %v2072
        %v2092 = vmul.f32 %v2059, %v2072
        %v2093 = vmul.f32 %v2060, %v2072
        %v2094 = vmul.f32 %v2061, %v2072
        %v2095 = vmul.f32 %v2062, %v2072
        %v2096 = vmul.f32 %v2063, %v2072
        %v2097 = vmul.f32 %v2064, %v2072
        %v2098 = vmul.f32 %v2065, %v2072
        %v2099 = vmul.f32 %v2066, %v2072
        %v2100 = vmul.f32 %v2067, %v2072
        %v2101 = vmul.f32 %v2068, %v2072
        %v2102 = vmul.f32 %v2069, %v2072
        %v2103 = vmul.f32 %v2070, %v2072
        %v2104 = vmul.f32 %v2071, %v2072
        %v2105 = vadd.f32 %v2008, %v2073
        %v2106 = vadd.f32 %v2009, %v2074
        %v2107 = vadd.f32 %v2010, %v2075
        %v2108 = vadd.f32 %v2011, %v2076
        %v2109 = vadd.f32 %v2012, %v2077
        %v2110 = vadd.f32 %v2013, %v2078
        %v2111 = vadd.f32 %v2014, %v2079
        %v2112 = vadd.f32 %v2015, %v2080
        %v2113 = vadd.f32 %v2016, %v2081
        %v2114 = vadd.f32 %v2017, %v2082
        %v2115 = vadd.f32 %v2018, %v2083
        %v2116 = vadd.f32 %v2019, %v2084
        %v2117 = vadd.f32 %v2020, %v2085
        %v2118 = vadd.f32 %v2021, %v2086
        %v2119 = vadd.f32 %v2022, %v2087
        %v2120 = vadd.f32 %v2023, %v2088
        %v2121 = vadd.f32 %v2024, %v2089
        %v2122 = vadd.f32 %v2025, %v2090
        %v2123 = vadd.f32 %v2026, %v2091
        %v2124 = vadd.f32 %v2027, %v2092
        %v2125 = vadd.f32 %v2028, %v2093
        %v2126 = vadd.f32 %v2029, %v2094
        %v2127 = vadd.f32 %v2030, %v2095
        %v2128 = vadd.f32 %v2031, %v2096
        %v2129 = vadd.f32 %v2032, %v2097
        %v2130 = vadd.f32 %v2033, %v2098
        %v2131 = vadd.f32 %v2034, %v2099
        %v2132 = vadd.f32 %v2035, %v2100
        %v2133 = vadd.f32 %v2036, %v2101
        %v2134 = vadd.f32 %v2037, %v2102
        %v2135 = vadd.f32 %v2038, %v2103
        %v2136 = vadd.f32 %v2039, %v2104
        %s2137 = scalar_lea.vmem [#allocation2], 48
        %v2138 = vld [vmem:[%s2137] sm:$0xff]
        %v2139 = vld [vmem:[%s2137 + $0x8] sm:$0xff]
        %v2140 = vld [vmem:[%s2137 + $0x18] sm:$0xff]
        %v2141 = vld [vmem:[%s2137 + $0x20] sm:$0xff]
        %v2142 = vld [vmem:[%s2137 + $0x30] sm:$0xff]
        %v2143 = vld [vmem:[%s2137 + $0x38] sm:$0xff]
        %v2144 = vld [vmem:[%s2137 + $0x48] sm:$0xff]
        %v2145 = vld [vmem:[%s2137 + $0x50] sm:$0xff]
        %v2146 = vld [vmem:[%s2137 + $0x60] sm:$0xff]
        %v2147 = vld [vmem:[%s2137 + $0x68] sm:$0xff]
        %v2148 = vld [vmem:[%s2137 + $0x78] sm:$0xff]
        %v2149 = vld [vmem:[%s2137 + $0x80] sm:$0xff]
        %v2150 = vld [vmem:[%s2137 + $0x90] sm:$0xff]
        %v2151 = vld [vmem:[%s2137 + $0x98] sm:$0xff]
        %v2152 = vld [vmem:[%s2137 + $0xa8] sm:$0xff]
        %v2153 = vld [vmem:[%s2137 + $0xb0] sm:$0xff]
        %v2154 = vld [vmem:[%s2137 + $0xc0] sm:$0xff]
        %v2155 = vld [vmem:[%s2137 + $0xc8] sm:$0xff]
        %v2156 = vld [vmem:[%s2137 + $0xd8] sm:$0xff]
        %v2157 = vld [vmem:[%s2137 + $0xe0] sm:$0xff]
        %v2158 = vld [vmem:[%s2137 + $0xf0] sm:$0xff]
        %v2159 = vld [vmem:[%s2137 + $0xf8] sm:$0xff]
        %v2160 = vld [vmem:[%s2137 + $0x108] sm:$0xff]
        %v2161 = vld [vmem:[%s2137 + $0x110] sm:$0xff]
        %v2162 = vld [vmem:[%s2137 + $0x120] sm:$0xff]
        %v2163 = vld [vmem:[%s2137 + $0x128] sm:$0xff]
        %v2164 = vld [vmem:[%s2137 + $0x138] sm:$0xff]
        %v2165 = vld [vmem:[%s2137 + $0x140] sm:$0xff]
        %v2166 = vld [vmem:[%s2137 + $0x150] sm:$0xff]
        %v2167 = vld [vmem:[%s2137 + $0x158] sm:$0xff]
        %v2168 = vld [vmem:[%s2137 + $0x168] sm:$0xff]
        %v2169 = vld [vmem:[%s2137 + $0x170] sm:$0xff]
        %v2170 = vperm.slane %v1584, 6
        %v2171 = vmul.f32 %v2138, %v2170
        %v2172 = vmul.f32 %v2139, %v2170
        %v2173 = vmul.f32 %v2140, %v2170
        %v2174 = vmul.f32 %v2141, %v2170
        %v2175 = vmul.f32 %v2142, %v2170
        %v2176 = vmul.f32 %v2143, %v2170
        %v2177 = vmul.f32 %v2144, %v2170
        %v2178 = vmul.f32 %v2145, %v2170
        %v2179 = vmul.f32 %v2146, %v2170
        %v2180 = vmul.f32 %v2147, %v2170
        %v2181 = vmul.f32 %v2148, %v2170
        %v2182 = vmul.f32 %v2149, %v2170
        %v2183 = vmul.f32 %v2150, %v2170
        %v2184 = vmul.f32 %v2151, %v2170
        %v2185 = vmul.f32 %v2152, %v2170
        %v2186 = vmul.f32 %v2153, %v2170
        %v2187 = vmul.f32 %v2154, %v2170
        %v2188 = vmul.f32 %v2155, %v2170
        %v2189 = vmul.f32 %v2156, %v2170
        %v2190 = vmul.f32 %v2157, %v2170
        %v2191 = vmul.f32 %v2158, %v2170
        %v2192 = vmul.f32 %v2159, %v2170
        %v2193 = vmul.f32 %v2160, %v2170
        %v2194 = vmul.f32 %v2161, %v2170
        %v2195 = vmul.f32 %v2162, %v2170
        %v2196 = vmul.f32 %v2163, %v2170
        %v2197 = vmul.f32 %v2164, %v2170
        %v2198 = vmul.f32 %v2165, %v2170
        %v2199 = vmul.f32 %v2166, %v2170
        %v2200 = vmul.f32 %v2167, %v2170
        %v2201 = vmul.f32 %v2168, %v2170
        %v2202 = vmul.f32 %v2169, %v2170
        %v2203 = vadd.f32 %v2105, %v2171
        %v2204 = vadd.f32 %v2106, %v2172
        %v2205 = vadd.f32 %v2107, %v2173
        %v2206 = vadd.f32 %v2108, %v2174
        %v2207 = vadd.f32 %v2109, %v2175
        %v2208 = vadd.f32 %v2110, %v2176
        %v2209 = vadd.f32 %v2111, %v2177
        %v2210 = vadd.f32 %v2112, %v2178
        %v2211 = vadd.f32 %v2113, %v2179
        %v2212 = vadd.f32 %v2114, %v2180
        %v2213 = vadd.f32 %v2115, %v2181
        %v2214 = vadd.f32 %v2116, %v2182
        %v2215 = vadd.f32 %v2117, %v2183
        %v2216 = vadd.f32 %v2118, %v2184
        %v2217 = vadd.f32 %v2119, %v2185
        %v2218 = vadd.f32 %v2120, %v2186
        %v2219 = vadd.f32 %v2121, %v2187
        %v2220 = vadd.f32 %v2122, %v2188
        %v2221 = vadd.f32 %v2123, %v2189
        %v2222 = vadd.f32 %v2124, %v2190
        %v2223 = vadd.f32 %v2125, %v2191
        %v2224 = vadd.f32 %v2126, %v2192
        %v2225 = vadd.f32 %v2127, %v2193
        %v2226 = vadd.f32 %v2128, %v2194
        %v2227 = vadd.f32 %v2129, %v2195
        %v2228 = vadd.f32 %v2130, %v2196
        %v2229 = vadd.f32 %v2131, %v2197
        %v2230 = vadd.f32 %v2132, %v2198
        %v2231 = vadd.f32 %v2133, %v2199
        %v2232 = vadd.f32 %v2134, %v2200
        %v2233 = vadd.f32 %v2135, %v2201
        %v2234 = vadd.f32 %v2136, %v2202
        %v2235 = vld [vmem:[%s2137 + $0x1] sm:$0xff]
        %v2236 = vld [vmem:[%s2137 + $0x9] sm:$0xff]
        %v2237 = vld [vmem:[%s2137 + $0x19] sm:$0xff]
        %v2238 = vld [vmem:[%s2137 + $0x21] sm:$0xff]
        %v2239 = vld [vmem:[%s2137 + $0x31] sm:$0xff]
        %v2240 = vld [vmem:[%s2137 + $0x39] sm:$0xff]
        %v2241 = vld [vmem:[%s2137 + $0x49] sm:$0xff]
        %v2242 = vld [vmem:[%s2137 + $0x51] sm:$0xff]
        %v2243 = vld [vmem:[%s2137 + $0x61] sm:$0xff]
        %v2244 = vld [vmem:[%s2137 + $0x69] sm:$0xff]
        %v2245 = vld [vmem:[%s2137 + $0x79] sm:$0xff]
        %v2246 = vld [vmem:[%s2137 + $0x81] sm:$0xff]
        %v2247 = vld [vmem:[%s2137 + $0x91] sm:$0xff]
        %v2248 = vld [vmem:[%s2137 + $0x99] sm:$0xff]
        %v2249 = vld [vmem:[%s2137 + $0xa9] sm:$0xff]
        %v2250 = vld [vmem:[%s2137 + $0xb1] sm:$0xff]
        %v2251 = vld [vmem:[%s2137 + $0xc1] sm:$0xff]
        %v2252 = vld [vmem:[%s2137 + $0xc9] sm:$0xff]
        %v2253 = vld [vmem:[%s2137 + $0xd9] sm:$0xff]
        %v2254 = vld [vmem:[%s2137 + $0xe1] sm:$0xff]
        %v2255 = vld [vmem:[%s2137 + $0xf1] sm:$0xff]
        %v2256 = vld [vmem:[%s2137 + $0xf9] sm:$0xff]
        %v2257 = vld [vmem:[%s2137 + $0x109] sm:$0xff]
        %v2258 = vld [vmem:[%s2137 + $0x111] sm:$0xff]
        %v2259 = vld [vmem:[%s2137 + $0x121] sm:$0xff]
        %v2260 = vld [vmem:[%s2137 + $0x129] sm:$0xff]
        %v2261 = vld [vmem:[%s2137 + $0x139] sm:$0xff]
        %v2262 = vld [vmem:[%s2137 + $0x141] sm:$0xff]
        %v2263 = vld [vmem:[%s2137 + $0x151] sm:$0xff]
        %v2264 = vld [vmem:[%s2137 + $0x159] sm:$0xff]
        %v2265 = vld [vmem:[%s2137 + $0x169] sm:$0xff]
        %v2266 = vld [vmem:[%s2137 + $0x171] sm:$0xff]
        %v2267 = vperm.slane %v1584, 7
        %v2268 = vmul.f32 %v2235, %v2267
        %v2269 = vmul.f32 %v2236, %v2267
        %v2270 = vmul.f32 %v2237, %v2267
        %v2271 = vmul.f32 %v2238, %v2267
        %v2272 = vmul.f32 %v2239, %v2267
        %v2273 = vmul.f32 %v2240, %v2267
        %v2274 = vmul.f32 %v2241, %v2267
        %v2275 = vmul.f32 %v2242, %v2267
        %v2276 = vmul.f32 %v2243, %v2267
        %v2277 = vmul.f32 %v2244, %v2267
        %v2278 = vmul.f32 %v2245, %v2267
        %v2279 = vmul.f32 %v2246, %v2267
        %v2280 = vmul.f32 %v2247, %v2267
        %v2281 = vmul.f32 %v2248, %v2267
        %v2282 = vmul.f32 %v2249, %v2267
        %v2283 = vmul.f32 %v2250, %v2267
        %v2284 = vmul.f32 %v2251, %v2267
        %v2285 = vmul.f32 %v2252, %v2267
        %v2286 = vmul.f32 %v2253, %v2267
        %v2287 = vmul.f32 %v2254, %v2267
        %v2288 = vmul.f32 %v2255, %v2267
        %v2289 = vmul.f32 %v2256, %v2267
        %v2290 = vmul.f32 %v2257, %v2267
        %v2291 = vmul.f32 %v2258, %v2267
        %v2292 = vmul.f32 %v2259, %v2267
        %v2293 = vmul.f32 %v2260, %v2267
        %v2294 = vmul.f32 %v2261, %v2267
        %v2295 = vmul.f32 %v2262, %v2267
        %v2296 = vmul.f32 %v2263, %v2267
        %v2297 = vmul.f32 %v2264, %v2267
        %v2298 = vmul.f32 %v2265, %v2267
        %v2299 = vmul.f32 %v2266, %v2267
        %v2300 = vadd.f32 %v2203, %v2268
        %v2301 = vadd.f32 %v2204, %v2269
        %v2302 = vadd.f32 %v2205, %v2270
        %v2303 = vadd.f32 %v2206, %v2271
        %v2304 = vadd.f32 %v2207, %v2272
        %v2305 = vadd.f32 %v2208, %v2273
        %v2306 = vadd.f32 %v2209, %v2274
        %v2307 = vadd.f32 %v2210, %v2275
        %v2308 = vadd.f32 %v2211, %v2276
        %v2309 = vadd.f32 %v2212, %v2277
        %v2310 = vadd.f32 %v2213, %v2278
        %v2311 = vadd.f32 %v2214, %v2279
        %v2312 = vadd.f32 %v2215, %v2280
        %v2313 = vadd.f32 %v2216, %v2281
        %v2314 = vadd.f32 %v2217, %v2282
        %v2315 = vadd.f32 %v2218, %v2283
        %v2316 = vadd.f32 %v2219, %v2284
        %v2317 = vadd.f32 %v2220, %v2285
        %v2318 = vadd.f32 %v2221, %v2286
        %v2319 = vadd.f32 %v2222, %v2287
        %v2320 = vadd.f32 %v2223, %v2288
        %v2321 = vadd.f32 %v2224, %v2289
        %v2322 = vadd.f32 %v2225, %v2290
        %v2323 = vadd.f32 %v2226, %v2291
        %v2324 = vadd.f32 %v2227, %v2292
        %v2325 = vadd.f32 %v2228, %v2293
        %v2326 = vadd.f32 %v2229, %v2294
        %v2327 = vadd.f32 %v2230, %v2295
        %v2328 = vadd.f32 %v2231, %v2296
        %v2329 = vadd.f32 %v2232, %v2297
        %v2330 = vadd.f32 %v2233, %v2298
        %v2331 = vadd.f32 %v2234, %v2299
        %v2332 = vld [vmem:[%s2137 + $0x2] sm:$0xff]
        %v2333 = vld [vmem:[%s2137 + $0xa] sm:$0xff]
        %v2334 = vld [vmem:[%s2137 + $0x1a] sm:$0xff]
        %v2335 = vld [vmem:[%s2137 + $0x22] sm:$0xff]
        %v2336 = vld [vmem:[%s2137 + $0x32] sm:$0xff]
        %v2337 = vld [vmem:[%s2137 + $0x3a] sm:$0xff]
        %v2338 = vld [vmem:[%s2137 + $0x4a] sm:$0xff]
        %v2339 = vld [vmem:[%s2137 + $0x52] sm:$0xff]
        %v2340 = vld [vmem:[%s2137 + $0x62] sm:$0xff]
        %v2341 = vld [vmem:[%s2137 + $0x6a] sm:$0xff]
        %v2342 = vld [vmem:[%s2137 + $0x7a] sm:$0xff]
        %v2343 = vld [vmem:[%s2137 + $0x82] sm:$0xff]
        %v2344 = vld [vmem:[%s2137 + $0x92] sm:$0xff]
        %v2345 = vld [vmem:[%s2137 + $0x9a] sm:$0xff]
        %v2346 = vld [vmem:[%s2137 + $0xaa] sm:$0xff]
        %v2347 = vld [vmem:[%s2137 + $0xb2] sm:$0xff]
        %v2348 = vld [vmem:[%s2137 + $0xc2] sm:$0xff]
        %v2349 = vld [vmem:[%s2137 + $0xca] sm:$0xff]
        %v2350 = vld [vmem:[%s2137 + $0xda] sm:$0xff]
        %v2351 = vld [vmem:[%s2137 + $0xe2] sm:$0xff]
        %v2352 = vld [vmem:[%s2137 + $0xf2] sm:$0xff]
        %v2353 = vld [vmem:[%s2137 + $0xfa] sm:$0xff]
        %v2354 = vld [vmem:[%s2137 + $0x10a] sm:$0xff]
        %v2355 = vld [vmem:[%s2137 + $0x112] sm:$0xff]
        %v2356 = vld [vmem:[%s2137 + $0x122] sm:$0xff]
        %v2357 = vld [vmem:[%s2137 + $0x12a] sm:$0xff]
        %v2358 = vld [vmem:[%s2137 + $0x13a] sm:$0xff]
        %v2359 = vld [vmem:[%s2137 + $0x142] sm:$0xff]
        %v2360 = vld [vmem:[%s2137 + $0x152] sm:$0xff]
        %v2361 = vld [vmem:[%s2137 + $0x15a] sm:$0xff]
        %v2362 = vld [vmem:[%s2137 + $0x16a] sm:$0xff]
        %v2363 = vld [vmem:[%s2137 + $0x172] sm:$0xff]
        %v2364 = vperm.slane %v1585, 0
        %v2365 = vmul.f32 %v2332, %v2364
        %v2366 = vmul.f32 %v2333, %v2364
        %v2367 = vmul.f32 %v2334, %v2364
        %v2368 = vmul.f32 %v2335, %v2364
        %v2369 = vmul.f32 %v2336, %v2364
        %v2370 = vmul.f32 %v2337, %v2364
        %v2371 = vmul.f32 %v2338, %v2364
        %v2372 = vmul.f32 %v2339, %v2364
        %v2373 = vmul.f32 %v2340, %v2364
        %v2374 = vmul.f32 %v2341, %v2364
        %v2375 = vmul.f32 %v2342, %v2364
        %v2376 = vmul.f32 %v2343, %v2364
        %v2377 = vmul.f32 %v2344, %v2364
        %v2378 = vmul.f32 %v2345, %v2364
        %v2379 = vmul.f32 %v2346, %v2364
        %v2380 = vmul.f32 %v2347, %v2364
        %v2381 = vmul.f32 %v2348, %v2364
        %v2382 = vmul.f32 %v2349, %v2364
        %v2383 = vmul.f32 %v2350, %v2364
        %v2384 = vmul.f32 %v2351, %v2364
        %v2385 = vmul.f32 %v2352, %v2364
        %v2386 = vmul.f32 %v2353, %v2364
        %v2387 = vmul.f32 %v2354, %v2364
        %v2388 = vmul.f32 %v2355, %v2364
        %v2389 = vmul.f32 %v2356, %v2364
        %v2390 = vmul.f32 %v2357, %v2364
        %v2391 = vmul.f32 %v2358, %v2364
        %v2392 = vmul.f32 %v2359, %v2364
        %v2393 = vmul.f32 %v2360, %v2364
        %v2394 = vmul.f32 %v2361, %v2364
        %v2395 = vmul.f32 %v2362, %v2364
        %v2396 = vmul.f32 %v2363, %v2364
        %v2397 = vadd.f32 %v2300, %v2365
        %v2398 = vadd.f32 %v2301, %v2366
        %v2399 = vadd.f32 %v2302, %v2367
        %v2400 = vadd.f32 %v2303, %v2368
        %v2401 = vadd.f32 %v2304, %v2369
        %v2402 = vadd.f32 %v2305, %v2370
        %v2403 = vadd.f32 %v2306, %v2371
        %v2404 = vadd.f32 %v2307, %v2372
        %v2405 = vadd.f32 %v2308, %v2373
        %v2406 = vadd.f32 %v2309, %v2374
        %v2407 = vadd.f32 %v2310, %v2375
        %v2408 = vadd.f32 %v2311, %v2376
        %v2409 = vadd.f32 %v2312, %v2377
        %v2410 = vadd.f32 %v2313, %v2378
        %v2411 = vadd.f32 %v2314, %v2379
        %v2412 = vadd.f32 %v2315, %v2380
        %v2413 = vadd.f32 %v2316, %v2381
        %v2414 = vadd.f32 %v2317, %v2382
        %v2415 = vadd.f32 %v2318, %v2383
        %v2416 = vadd.f32 %v2319, %v2384
        %v2417 = vadd.f32 %v2320, %v2385
        %v2418 = vadd.f32 %v2321, %v2386
        %v2419 = vadd.f32 %v2322, %v2387
        %v2420 = vadd.f32 %v2323, %v2388
        %v2421 = vadd.f32 %v2324, %v2389
        %v2422 = vadd.f32 %v2325, %v2390
        %v2423 = vadd.f32 %v2326, %v2391
        %v2424 = vadd.f32 %v2327, %v2392
        %v2425 = vadd.f32 %v2328, %v2393
        %v2426 = vadd.f32 %v2329, %v2394
        %v2427 = vadd.f32 %v2330, %v2395
        %v2428 = vadd.f32 %v2331, %v2396
        %v2429 = vld [vmem:[%s4] sm:$0x1]
        %v2430 = vperm.slane %v2429, 0
        %v2431 = vadd.f32 %v2397, %v2430
        %v2432 = vadd.f32 %v2398, %v2430
        %v2433 = vadd.f32 %v2399, %v2430
        %v2434 = vadd.f32 %v2400, %v2430
        %v2435 = vadd.f32 %v2401, %v2430
        %v2436 = vadd.f32 %v2402, %v2430
        %v2437 = vadd.f32 %v2403, %v2430
        %v2438 = vadd.f32 %v2404, %v2430
        %v2439 = vadd.f32 %v2405, %v2430
        %v2440 = vadd.f32 %v2406, %v2430
        %v2441 = vadd.f32 %v2407, %v2430
        %v2442 = vadd.f32 %v2408, %v2430
        %v2443 = vadd.f32 %v2409, %v2430
        %v2444 = vadd.f32 %v2410, %v2430
        %v2445 = vadd.f32 %v2411, %v2430
        %v2446 = vadd.f32 %v2412, %v2430
        %v2447 = vadd.f32 %v2413, %v2430
        %v2448 = vadd.f32 %v2414, %v2430
        %v2449 = vadd.f32 %v2415, %v2430
        %v2450 = vadd.f32 %v2416, %v2430
        %v2451 = vadd.f32 %v2417, %v2430
        %v2452 = vadd.f32 %v2418, %v2430
        %v2453 = vadd.f32 %v2419, %v2430
        %v2454 = vadd.f32 %v2420, %v2430
        %v2455 = vadd.f32 %v2421, %v2430
        %v2456 = vadd.f32 %v2422, %v2430
        %v2457 = vadd.f32 %v2423, %v2430
        %v2458 = vadd.f32 %v2424, %v2430
        %v2459 = vadd.f32 %v2425, %v2430
        %v2460 = vadd.f32 %v2426, %v2430
        %v2461 = vadd.f32 %v2427, %v2430
        %v2462 = vadd.f32 %v2428, %v2430
        %vm2463 = vcmp.gt.f32.partialorder %v2431, 0.0
        %vm2464 = vcmp.gt.f32.partialorder %v2432, 0.0
        %vm2465 = vcmp.gt.f32.partialorder %v2433, 0.0
        %vm2466 = vcmp.gt.f32.partialorder %v2434, 0.0
        %vm2467 = vcmp.gt.f32.partialorder %v2435, 0.0
        %vm2468 = vcmp.gt.f32.partialorder %v2436, 0.0
        %vm2469 = vcmp.gt.f32.partialorder %v2437, 0.0
        %vm2470 = vcmp.gt.f32.partialorder %v2438, 0.0
        %vm2471 = vcmp.gt.f32.partialorder %v2439, 0.0
        %vm2472 = vcmp.gt.f32.partialorder %v2440, 0.0
        %vm2473 = vcmp.gt.f32.partialorder %v2441, 0.0
        %vm2474 = vcmp.gt.f32.partialorder %v2442, 0.0
        %vm2475 = vcmp.gt.f32.partialorder %v2443, 0.0
        %vm2476 = vcmp.gt.f32.partialorder %v2444, 0.0
        %vm2477 = vcmp.gt.f32.partialorder %v2445, 0.0
        %vm2478 = vcmp.gt.f32.partialorder %v2446, 0.0
        %vm2479 = vcmp.gt.f32.partialorder %v2447, 0.0
        %vm2480 = vcmp.gt.f32.partialorder %v2448, 0.0
        %vm2481 = vcmp.gt.f32.partialorder %v2449, 0.0
        %vm2482 = vcmp.gt.f32.partialorder %v2450, 0.0
        %vm2483 = vcmp.gt.f32.partialorder %v2451, 0.0
        %vm2484 = vcmp.gt.f32.partialorder %v2452, 0.0
        %vm2485 = vcmp.gt.f32.partialorder %v2453, 0.0
        %vm2486 = vcmp.gt.f32.partialorder %v2454, 0.0
        %vm2487 = vcmp.gt.f32.partialorder %v2455, 0.0
        %vm2488 = vcmp.gt.f32.partialorder %v2456, 0.0
        %vm2489 = vcmp.gt.f32.partialorder %v2457, 0.0
        %vm2490 = vcmp.gt.f32.partialorder %v2458, 0.0
        %vm2491 = vcmp.gt.f32.partialorder %v2459, 0.0
        %vm2492 = vcmp.gt.f32.partialorder %v2460, 0.0
        %vm2493 = vcmp.gt.f32.partialorder %v2461, 0.0
        %vm2494 = vcmp.gt.f32.partialorder %v2462, 0.0
        %v2495 = vld [vmem:[%s4 + $0x1] sm:$0x1]
        %v2496 = vperm.slane %v2495, 0
        %v2497 = vmul.f32 %v2431, %v2496
        %v2498 = vmul.f32 %v2432, %v2496
        %v2499 = vmul.f32 %v2433, %v2496
        %v2500 = vmul.f32 %v2434, %v2496
        %v2501 = vmul.f32 %v2435, %v2496
        %v2502 = vmul.f32 %v2436, %v2496
        %v2503 = vmul.f32 %v2437, %v2496
        %v2504 = vmul.f32 %v2438, %v2496
        %v2505 = vmul.f32 %v2439, %v2496
        %v2506 = vmul.f32 %v2440, %v2496
        %v2507 = vmul.f32 %v2441, %v2496
        %v2508 = vmul.f32 %v2442, %v2496
        %v2509 = vmul.f32 %v2443, %v2496
        %v2510 = vmul.f32 %v2444, %v2496
        %v2511 = vmul.f32 %v2445, %v2496
        %v2512 = vmul.f32 %v2446, %v2496
        %v2513 = vmul.f32 %v2447, %v2496
        %v2514 = vmul.f32 %v2448, %v2496
        %v2515 = vmul.f32 %v2449, %v2496
        %v2516 = vmul.f32 %v2450, %v2496
        %v2517 = vmul.f32 %v2451, %v2496
        %v2518 = vmul.f32 %v2452, %v2496
        %v2519 = vmul.f32 %v2453, %v2496
        %v2520 = vmul.f32 %v2454, %v2496
        %v2521 = vmul.f32 %v2455, %v2496
        %v2522 = vmul.f32 %v2456, %v2496
        %v2523 = vmul.f32 %v2457, %v2496
        %v2524 = vmul.f32 %v2458, %v2496
        %v2525 = vmul.f32 %v2459, %v2496
        %v2526 = vmul.f32 %v2460, %v2496
        %v2527 = vmul.f32 %v2461, %v2496
        %v2528 = vmul.f32 %v2462, %v2496
        %v2529 = vsel %vm2463, %v2431, %v2497
        %v2530 = vsel %vm2464, %v2432, %v2498
        %v2531 = vsel %vm2465, %v2433, %v2499
        %v2532 = vsel %vm2466, %v2434, %v2500
        %v2533 = vsel %vm2467, %v2435, %v2501
        %v2534 = vsel %vm2468, %v2436, %v2502
        %v2535 = vsel %vm2469, %v2437, %v2503
        %v2536 = vsel %vm2470, %v2438, %v2504
        %v2537 = vsel %vm2471, %v2439, %v2505
        %v2538 = vsel %vm2472, %v2440, %v2506
        %v2539 = vsel %vm2473, %v2441, %v2507
        %v2540 = vsel %vm2474, %v2442, %v2508
        %v2541 = vsel %vm2475, %v2443, %v2509
        %v2542 = vsel %vm2476, %v2444, %v2510
        %v2543 = vsel %vm2477, %v2445, %v2511
        %v2544 = vsel %vm2478, %v2446, %v2512
        %v2545 = vsel %vm2479, %v2447, %v2513
        %v2546 = vsel %vm2480, %v2448, %v2514
        %v2547 = vsel %vm2481, %v2449, %v2515
        %v2548 = vsel %vm2482, %v2450, %v2516
        %v2549 = vsel %vm2483, %v2451, %v2517
        %v2550 = vsel %vm2484, %v2452, %v2518
        %v2551 = vsel %vm2485, %v2453, %v2519
        %v2552 = vsel %vm2486, %v2454, %v2520
        %v2553 = vsel %vm2487, %v2455, %v2521
        %v2554 = vsel %vm2488, %v2456, %v2522
        %v2555 = vsel %vm2489, %v2457, %v2523
        %v2556 = vsel %vm2490, %v2458, %v2524
        %v2557 = vsel %vm2491, %v2459, %v2525
        %v2558 = vsel %vm2492, %v2460, %v2526
        %v2559 = vsel %vm2493, %v2461, %v2527
        %v2560 = vsel %vm2494, %v2462, %v2528
        %v2561 = vld [vmem:[%s5] sm:$0xff]
        %v2562 = vld [vmem:[%s5 + $0x8] sm:$0xff]
        %v2563 = vld [vmem:[%s5 + $0x10] sm:$0xff]
        %v2564 = vld [vmem:[%s5 + $0x18] sm:$0xff]
        %v2565 = vld [vmem:[%s5 + $0x20] sm:$0xff]
        %v2566 = vld [vmem:[%s5 + $0x28] sm:$0xff]
        %v2567 = vld [vmem:[%s5 + $0x30] sm:$0xff]
        %v2568 = vld [vmem:[%s5 + $0x38] sm:$0xff]
        %v2569 = vld [vmem:[%s5 + $0x40] sm:$0xff]
        %v2570 = vld [vmem:[%s5 + $0x48] sm:$0xff]
        %v2571 = vld [vmem:[%s5 + $0x50] sm:$0xff]
        %v2572 = vld [vmem:[%s5 + $0x58] sm:$0xff]
        %v2573 = vld [vmem:[%s5 + $0x60] sm:$0xff]
        %v2574 = vld [vmem:[%s5 + $0x68] sm:$0xff]
        %v2575 = vld [vmem:[%s5 + $0x70] sm:$0xff]
        %v2576 = vld [vmem:[%s5 + $0x78] sm:$0xff]
        %v2577 = vld [vmem:[%s6] sm:$0x1]
        %v2579 = vperm.slane %v2577, 0
        %2581 = vmatpush.msra.mxu0 %v2576
        %2582 = vmatpush.msra.mxu0 %v2575
        %2583 = vmatpush.msra.mxu0 %v2574
        %2584 = vmatpush.msra.mxu0 %v2573
        %2585 = vmatpush.msra.mxu0 %v2572
        %2586 = vmatpush.msra.mxu0 %v2571
        %2587 = vmatpush.msra.mxu0 %v2570
        %2588 = vmatpush.msra.mxu0 %v2569
        %2589 = vmatpush.msra.mxu0 %v2568
        %2590 = vmatpush.msra.mxu0 %v2567
        %2591 = vmatpush.msra.mxu0 %v2566
        %2592 = vmatpush.msra.mxu0 %v2565
        %2593 = vmatpush.msra.mxu0 %v2564
        %2594 = vmatpush.msra.mxu0 %v2563
        %2595 = vmatpush.msra.mxu0 %v2562
        %2596 = vmatpush.msra.mxu0 %v2561
        %2597 = vmatmul.f32.gmra.mxu0 %v2529
        %v2598 = vpop.f32.mrf.mxu0
        %v2599 = vadd.f32 %v2579, %v2598
        %2600 = vmatmul.f32.gmra.mxu0 %v2530
        %v2601 = vpop.f32.mrf.mxu0
        %v2602 = vadd.f32 %v2579, %v2601
        %2603 = vmatmul.f32.gmra.mxu0 %v2531
        %v2604 = vpop.f32.mrf.mxu0
        %v2605 = vadd.f32 %v2579, %v2604
        %2606 = vmatmul.f32.gmra.mxu0 %v2532
        %v2607 = vpop.f32.mrf.mxu0
        %v2608 = vadd.f32 %v2579, %v2607
        %2609 = vmatmul.f32.gmra.mxu0 %v2533
        %v2610 = vpop.f32.mrf.mxu0
        %v2611 = vadd.f32 %v2579, %v2610
        %2612 = vmatmul.f32.gmra.mxu0 %v2534
        %v2613 = vpop.f32.mrf.mxu0
        %v2614 = vadd.f32 %v2579, %v2613
        %2615 = vmatmul.f32.gmra.mxu0 %v2535
        %v2616 = vpop.f32.mrf.mxu0
        %v2617 = vadd.f32 %v2579, %v2616
        %2618 = vmatmul.f32.gmra.mxu0 %v2536
        %v2619 = vpop.f32.mrf.mxu0
        %v2620 = vadd.f32 %v2579, %v2619
        %2621 = vmatmul.f32.gmra.mxu0 %v2537
        %v2622 = vpop.f32.mrf.mxu0
        %v2623 = vadd.f32 %v2579, %v2622
        %2624 = vmatmul.f32.gmra.mxu0 %v2538
        %v2625 = vpop.f32.mrf.mxu0
        %v2626 = vadd.f32 %v2579, %v2625
        %2627 = vmatmul.f32.gmra.mxu0 %v2539
        %v2628 = vpop.f32.mrf.mxu0
        %v2629 = vadd.f32 %v2579, %v2628
        %2630 = vmatmul.f32.gmra.mxu0 %v2540
        %v2631 = vpop.f32.mrf.mxu0
        %v2632 = vadd.f32 %v2579, %v2631
        %2633 = vmatmul.f32.gmra.mxu0 %v2541
        %v2634 = vpop.f32.mrf.mxu0
        %v2635 = vadd.f32 %v2579, %v2634
        %2636 = vmatmul.f32.gmra.mxu0 %v2542
        %v2637 = vpop.f32.mrf.mxu0
        %v2638 = vadd.f32 %v2579, %v2637
        %2639 = vmatmul.f32.gmra.mxu0 %v2543
        %v2640 = vpop.f32.mrf.mxu0
        %v2641 = vadd.f32 %v2579, %v2640
        %2642 = vmatmul.f32.gmra.mxu0 %v2544
        %v2643 = vpop.f32.mrf.mxu0
        %v2644 = vadd.f32 %v2579, %v2643
        %2645 = vmatmul.f32.gmra.mxu0 %v2545
        %v2646 = vpop.f32.mrf.mxu0
        %v2647 = vadd.f32 %v2579, %v2646
        %2648 = vmatmul.f32.gmra.mxu0 %v2546
        %v2649 = vpop.f32.mrf.mxu0
        %v2650 = vadd.f32 %v2579, %v2649
        %2651 = vmatmul.f32.gmra.mxu0 %v2547
        %v2652 = vpop.f32.mrf.mxu0
        %v2653 = vadd.f32 %v2579, %v2652
        %2654 = vmatmul.f32.gmra.mxu0 %v2548
        %v2655 = vpop.f32.mrf.mxu0
        %v2656 = vadd.f32 %v2579, %v2655
        %2657 = vmatmul.f32.gmra.mxu0 %v2549
        %v2658 = vpop.f32.mrf.mxu0
        %v2659 = vadd.f32 %v2579, %v2658
        %2660 = vmatmul.f32.gmra.mxu0 %v2550
        %v2661 = vpop.f32.mrf.mxu0
        %v2662 = vadd.f32 %v2579, %v2661
        %2663 = vmatmul.f32.gmra.mxu0 %v2551
        %v2664 = vpop.f32.mrf.mxu0
        %v2665 = vadd.f32 %v2579, %v2664
        %2666 = vmatmul.f32.gmra.mxu0 %v2552
        %v2667 = vpop.f32.mrf.mxu0
        %v2668 = vadd.f32 %v2579, %v2667
        %2669 = vmatmul.f32.gmra.mxu0 %v2553
        %v2670 = vpop.f32.mrf.mxu0
        %v2671 = vadd.f32 %v2579, %v2670
        %2672 = vmatmul.f32.gmra.mxu0 %v2554
        %v2673 = vpop.f32.mrf.mxu0
        %v2674 = vadd.f32 %v2579, %v2673
        %2675 = vmatmul.f32.gmra.mxu0 %v2555
        %v2676 = vpop.f32.mrf.mxu0
        %v2677 = vadd.f32 %v2579, %v2676
        %2678 = vmatmul.f32.gmra.mxu0 %v2556
        %v2679 = vpop.f32.mrf.mxu0
        %v2680 = vadd.f32 %v2579, %v2679
        %2681 = vmatmul.f32.gmra.mxu0 %v2557
        %v2682 = vpop.f32.mrf.mxu0
        %v2683 = vadd.f32 %v2579, %v2682
        %2684 = vmatmul.f32.gmra.mxu0 %v2558
        %v2685 = vpop.f32.mrf.mxu0
        %v2686 = vadd.f32 %v2579, %v2685
        %2687 = vmatmul.f32.gmra.mxu0 %v2559
        %v2688 = vpop.f32.mrf.mxu0
        %v2689 = vadd.f32 %v2579, %v2688
        %2690 = vmatmul.f32.gmra.mxu0 %v2560
        %v2691 = vpop.f32.mrf.mxu0
        %v2692 = vadd.f32 %v2579, %v2691
        %2693 = vdwg.mxu0
        %s2694 = sadd.s32 %s291, 1
        %s2695 = smul.u32 %s2694, 24
        %s2696 = scalar_lea.vmem %s290, %s2695
        %v2697 = vld [vmem:[%s2696 + $0x1] sm:$0xff]
        %v2698 = vld [vmem:[%s2696 + $0x9] sm:$0xff]
        %v2699 = vld [vmem:[%s2696 + $0x19] sm:$0xff]
        %v2700 = vld [vmem:[%s2696 + $0x21] sm:$0xff]
        %v2701 = vld [vmem:[%s2696 + $0x31] sm:$0xff]
        %v2702 = vld [vmem:[%s2696 + $0x39] sm:$0xff]
        %v2703 = vld [vmem:[%s2696 + $0x49] sm:$0xff]
        %v2704 = vld [vmem:[%s2696 + $0x51] sm:$0xff]
        %v2705 = vld [vmem:[%s2696 + $0x61] sm:$0xff]
        %v2706 = vld [vmem:[%s2696 + $0x69] sm:$0xff]
        %v2707 = vld [vmem:[%s2696 + $0x79] sm:$0xff]
        %v2708 = vld [vmem:[%s2696 + $0x81] sm:$0xff]
        %v2709 = vld [vmem:[%s2696 + $0x91] sm:$0xff]
        %v2710 = vld [vmem:[%s2696 + $0x99] sm:$0xff]
        %v2711 = vld [vmem:[%s2696 + $0xa9] sm:$0xff]
        %v2712 = vld [vmem:[%s2696 + $0xb1] sm:$0xff]
        %v2713 = vld [vmem:[%s2696 + $0xc1] sm:$0xff]
        %v2714 = vld [vmem:[%s2696 + $0xc9] sm:$0xff]
        %v2715 = vld [vmem:[%s2696 + $0xd9] sm:$0xff]
        %v2716 = vld [vmem:[%s2696 + $0xe1] sm:$0xff]
        %v2717 = vld [vmem:[%s2696 + $0xf1] sm:$0xff]
        %v2718 = vld [vmem:[%s2696 + $0xf9] sm:$0xff]
        %v2719 = vld [vmem:[%s2696 + $0x109] sm:$0xff]
        %v2720 = vld [vmem:[%s2696 + $0x111] sm:$0xff]
        %v2721 = vld [vmem:[%s2696 + $0x121] sm:$0xff]
        %v2722 = vld [vmem:[%s2696 + $0x129] sm:$0xff]
        %v2723 = vld [vmem:[%s2696 + $0x139] sm:$0xff]
        %v2724 = vld [vmem:[%s2696 + $0x141] sm:$0xff]
        %v2725 = vld [vmem:[%s2696 + $0x151] sm:$0xff]
        %v2726 = vld [vmem:[%s2696 + $0x159] sm:$0xff]
        %v2727 = vld [vmem:[%s2696 + $0x169] sm:$0xff]
        %v2728 = vld [vmem:[%s2696 + $0x171] sm:$0xff]
        %v2729 = vadd.f32 %v2599, %v2697
        %v2730 = vadd.f32 %v2602, %v2698
        %v2731 = vadd.f32 %v2605, %v2699
        %v2732 = vadd.f32 %v2608, %v2700
        %v2733 = vadd.f32 %v2611, %v2701
        %v2734 = vadd.f32 %v2614, %v2702
        %v2735 = vadd.f32 %v2617, %v2703
        %v2736 = vadd.f32 %v2620, %v2704
        %v2737 = vadd.f32 %v2623, %v2705
        %v2738 = vadd.f32 %v2626, %v2706
        %v2739 = vadd.f32 %v2629, %v2707
        %v2740 = vadd.f32 %v2632, %v2708
        %v2741 = vadd.f32 %v2635, %v2709
        %v2742 = vadd.f32 %v2638, %v2710
        %v2743 = vadd.f32 %v2641, %v2711
        %v2744 = vadd.f32 %v2644, %v2712
        %v2745 = vadd.f32 %v2647, %v2713
        %v2746 = vadd.f32 %v2650, %v2714
        %v2747 = vadd.f32 %v2653, %v2715
        %v2748 = vadd.f32 %v2656, %v2716
        %v2749 = vadd.f32 %v2659, %v2717
        %v2750 = vadd.f32 %v2662, %v2718
        %v2751 = vadd.f32 %v2665, %v2719
        %v2752 = vadd.f32 %v2668, %v2720
        %v2753 = vadd.f32 %v2671, %v2721
        %v2754 = vadd.f32 %v2674, %v2722
        %v2755 = vadd.f32 %v2677, %v2723
        %v2756 = vadd.f32 %v2680, %v2724
        %v2757 = vadd.f32 %v2683, %v2725
        %v2758 = vadd.f32 %v2686, %v2726
        %v2759 = vadd.f32 %v2689, %v2727
        %v2760 = vadd.f32 %v2692, %v2728
        %2761 = vst [vmem:[%s285] sm:$0xff] %v2729
        %2762 = vst [vmem:[%s285 + $0x8] sm:$0xff] %v2730
        %2763 = vst [vmem:[%s285 + $0x10] sm:$0xff] %v2731
        %2764 = vst [vmem:[%s285 + $0x18] sm:$0xff] %v2732
        %2765 = vst [vmem:[%s285 + $0x20] sm:$0xff] %v2733
        %2766 = vst [vmem:[%s285 + $0x28] sm:$0xff] %v2734
        %2767 = vst [vmem:[%s285 + $0x30] sm:$0xff] %v2735
        %2768 = vst [vmem:[%s285 + $0x38] sm:$0xff] %v2736
        %2769 = vst [vmem:[%s285 + $0x40] sm:$0xff] %v2737
        %2770 = vst [vmem:[%s285 + $0x48] sm:$0xff] %v2738
        %2771 = vst [vmem:[%s285 + $0x50] sm:$0xff] %v2739
        %2772 = vst [vmem:[%s285 + $0x58] sm:$0xff] %v2740
        %2773 = vst [vmem:[%s285 + $0x60] sm:$0xff] %v2741
        %2774 = vst [vmem:[%s285 + $0x68] sm:$0xff] %v2742
        %2775 = vst [vmem:[%s285 + $0x70] sm:$0xff] %v2743
        %2776 = vst [vmem:[%s285 + $0x78] sm:$0xff] %v2744
        %2777 = vst [vmem:[%s285 + $0x80] sm:$0xff] %v2745
        %2778 = vst [vmem:[%s285 + $0x88] sm:$0xff] %v2746
        %2779 = vst [vmem:[%s285 + $0x90] sm:$0xff] %v2747
        %2780 = vst [vmem:[%s285 + $0x98] sm:$0xff] %v2748
        %2781 = vst [vmem:[%s285 + $0xa0] sm:$0xff] %v2749
        %2782 = vst [vmem:[%s285 + $0xa8] sm:$0xff] %v2750
        %2783 = vst [vmem:[%s285 + $0xb0] sm:$0xff] %v2751
        %2784 = vst [vmem:[%s285 + $0xb8] sm:$0xff] %v2752
        %2785 = vst [vmem:[%s285 + $0xc0] sm:$0xff] %v2753
        %2786 = vst [vmem:[%s285 + $0xc8] sm:$0xff] %v2754
        %2787 = vst [vmem:[%s285 + $0xd0] sm:$0xff] %v2755
        %2788 = vst [vmem:[%s285 + $0xd8] sm:$0xff] %v2756
        %2789 = vst [vmem:[%s285 + $0xe0] sm:$0xff] %v2757
        %2790 = vst [vmem:[%s285 + $0xe8] sm:$0xff] %v2758
        %2791 = vst [vmem:[%s285 + $0xf0] sm:$0xff] %v2759
        %2792 = vst [vmem:[%s285 + $0xf8] sm:$0xff] %v2760
        %s2793 = sand.u32 %s195, 1
        %s2794 = scalar_lea.sflag [#allocation4], %s2793
        %s2795 = sand.u32 %s195, 1
        %s2796 = smul.addr %s2795, 256
        %s2797 = scalar_lea.vmem [#allocation3], %s2796
        // Predicated region
        $region53: #{tpu_custom_call.1} parent=47 // pred_check
          %p2798 = pneg %p205
        $region54: #{tpu_custom_call.1} parent=47 // pred_check_branch
          %2800 = sbr.rel (%p2798) target = $region56
        $region55: #{tpu_custom_call.1} parent=47 // pred_region
          %2802 = vsyncadd %s2794, 0
          %s2803 = smul.addr %s26, 32
          %s2804 = smul.addr %s25, 32
          %s2805 = sadd.s32 %s2803, %s2804
          %s2806 = smul.addr %s2805, 8
          %s2807 = scalar_lea.hbm %s7, %s2806
          %s2808 = sshll.u32 %s2797, 4
          %s2809 = int_to_ptr.vmem [resolvable:$true] %s2808
          %s2810 = sshll.u32 %s2807, 4
          %s2811 = int_to_ptr.hbm [resolvable:$true] %s2810
          %2816 = dma.vmem_to_hbm [thread:$0]  %s2809, 4096, %s2811, %s2794, 128, 128, 8
        $region56: #{tpu_custom_call.1} parent=47 // pred_fallthru
          _
      $region48: #{tpu_custom_call.1} parent=5 // pred_fallthru
        _
      %p2817 = scmp.le.s32.totalorder 2, %s16
      // Predicated region
      $region57: #{tpu_custom_call.1} parent=5 // pred_check
        %p2818 = pneg %p2817
      $region58: #{tpu_custom_call.1} parent=5 // pred_check_branch
        %2820 = sbr.rel (%p2818) target = $region60
      $region59: #{tpu_custom_call.1} parent=5 // pred_region
        %s2821 = ssub.s32 %s16, 2
        // Predicated region
        $region61: #{tpu_custom_call.1} parent=59 // pred_check
          %p2822 = pneg %p211
        $region62: #{tpu_custom_call.1} parent=59 // pred_check_branch
          %2824 = sbr.rel (%p2822) target = $region64
        $region63: #{tpu_custom_call.1} parent=59 // pred_region
          %s2825 = sand.u32 %s196, 1
          %s2826 = scalar_lea.sflag [#allocation4], %s2825
          %s2827 = sand.u32 %s196, 1
          %s2828 = smul.addr %s2827, 256
          %s2829 = scalar_lea.vmem [#allocation3], %s2828
          %2831 = dma.done %s2826, 4096
        $region64: #{tpu_custom_call.1} parent=59 // pred_fallthru
          _
      $region60: #{tpu_custom_call.1} parent=5 // pred_fallthru
        _
    $region6: #{tpu_custom_call.1} parent=1 // loop_footer
      %s20 = sadd.s32 1, %s16
    $region7: #{tpu_custom_call.1} parent=1 // loop_footer_branch
      %15 = sbr.rel target = $region3
    $region8: #{tpu_custom_call.1} parent=1 // loop_exit
      _
    %2832 = vsyncpa [#allocation4], 1
    %s2833 = scalar_lea.sflag [#allocation4], 1
    %2834 = vsyncpa %s2833, 1

</llo_original>
